<compile_context>
chip_gen: v6e
topology: v6e:2x2x1
jax: 0.10.0
libtpu: 0.0.40
codegen_flags: <defaults>
</compile_context>

<pallas_src>
import functools
import math

import jax
import jax.numpy as jnp
from jax.experimental import pallas as pl
from jax.experimental.pallas import tpu as pltpu


_LN_EPS = 1e-5                         # torch LayerNorm default


# ----------------------------------------------------------------------------
# Generation-aware sizing helpers
# ----------------------------------------------------------------------------

@functools.lru_cache(maxsize=None)
def _vmem_capacity_bytes():
    try:
        return int(pltpu.get_tpu_info().vmem_capacity_bytes)
    except Exception:
        return 64 * 1024 * 1024        # conservative v7x-sized fallback


def _vmem_limit_bytes():
    # ~48 MiB on v7x (64 MiB physical), ~96 MiB on v5e/v6e (128 MiB physical)
    return min((_vmem_capacity_bytes() * 3) // 4, 112 * 1024 * 1024)


def _row_target():
    return 512 if _vmem_capacity_bytes() >= 96 * 1024 * 1024 else 256


def _cparams(*sems):
    return pltpu.CompilerParams(
        dimension_semantics=tuple(sems),
        vmem_limit_bytes=_vmem_limit_bytes(),
    )


def _resident(shape, index_map):
    """BlockSpec for operands whose block never changes: single-buffered."""
    try:
        return pl.BlockSpec(shape, index_map, pipeline_mode=pl.Buffered(1))
    except Exception:       # pragma: no cover - older BlockSpec signature
        return pl.BlockSpec(shape, index_map)


def _row_tile(m, target=None):
    """Fixed large row tile; any remainder block is masked by Pallas."""
    target = _row_target() if target is None else target
    if m <= target:
        return m
    return target


def _divisor_tile(n, target=None):
    """Largest divisor of n <= target (prefers multiples of 8)."""
    target = _row_target() if target is None else target
    if n <= target:
        return n
    best = 1
    for t in range(8, target + 1, 8):
        if n % t == 0:
            best = t
    if best == 1:
        for t in range(1, target + 1):
            if n % t == 0:
                best = t
    return best


def _group_tile(g, l, min_steps=4):
    """Attention groups per grid step; keeps >= min_steps grid steps."""
    gt = max(1, min(g, max(1, _row_target() // max(l, 1))))
    gt = min(gt, max(1, g // min(min_steps, g)))
    while g % gt:
        gt -= 1
    return gt


def _ff_chunk(hidden, target=512):
    """Hidden-dim chunk for the FF kernel (multiple of 128 dividing hidden)."""
    if hidden <= target:
        return hidden
    hc = (target // 128) * 128
    while hc > 128 and hidden % hc:
        hc -= 128
    if hc <= 0 or hidden % hc:
        return hidden                  # fallback: no chunking
    return hc


# ----------------------------------------------------------------------------
# In-kernel math helpers
# ----------------------------------------------------------------------------

def _layernorm_f32(x, g, b):
    mu = jnp.mean(x, axis=-1, keepdims=True)
    var = jnp.mean(jnp.square(x - mu), axis=-1, keepdims=True)
    return (x - mu) * jax.lax.rsqrt(var + _LN_EPS) * g + b


def _gelu_tanh(x):
    # TODO(synk): torch F.gelu defaults to exact erf; tanh form (~1e-3 abs dev)
    # is used so the transcendental runs on the EUP slot instead of the VALU.
    c = math.sqrt(2.0 / math.pi)
    return 0.5 * x * (1.0 + jnp.tanh(c * (x + 0.044715 * x * x * x)))


# ----------------------------------------------------------------------------
# Kernel 1: patch embedding  (matmul + bias + positional embedding, fused)
# ----------------------------------------------------------------------------

def _patch_embed_kernel(x_ref, w_ref, b_ref, pos_ref, o_ref):
    x = x_ref[...].astype(jnp.bfloat16)
    w = w_ref[...].astype(jnp.bfloat16)
    acc = jnp.dot(x, w, preferred_element_type=jnp.float32)
    o_ref[...] = (acc + b_ref[...] + pos_ref[...].astype(jnp.float32)).astype(o_ref.dtype)


def patch_embed(x2d, w, bias, pos):
    """x2d: (b*Npos, patch_dim) -> (b*Npos, dim), adds pos_emb in-kernel."""
    m, kdim = x2d.shape
    n_pos, dim = pos.shape
    assert m % n_pos == 0
    tm = _divisor_tile(n_pos)              # tm | n_pos so the pos block wraps cleanly
    blocks_per_image = n_pos // tm
    return pl.pallas_call(
        _patch_embed_kernel,
        out_shape=jax.ShapeDtypeStruct((m, dim), jnp.float32),
        grid=(m // tm,),
        in_specs=[
            pl.BlockSpec((tm, kdim), lambda i: (i, 0)),
            _resident((kdim, dim), lambda i: (0, 0)),
            _resident((1, dim), lambda i: (0, 0)),
            pl.BlockSpec((tm, dim), lambda i: (i % blocks_per_image, 0)),
        ],
        out_specs=pl.BlockSpec((tm, dim), lambda i: (i, 0)),
        compiler_params=_cparams("parallel"),
    )(x2d, w, bias.reshape(1, dim), pos)


# ----------------------------------------------------------------------------
# Kernel 2: fused LayerNorm + QKV projection (single wide lane-dense output)
# ----------------------------------------------------------------------------

def _ln_qkv_kernel(x_ref, g_ref, b_ref, w_ref, qkv_ref):
    x = x_ref[...].astype(jnp.float32)
    y = _layernorm_f32(x, g_ref[...], b_ref[...]).astype(jnp.bfloat16)
    qkv_ref[...] = jnp.dot(y, w_ref[...].astype(jnp.bfloat16),
                           preferred_element_type=jnp.float32).astype(qkv_ref.dtype)


def ln_qkv(x2d, gamma, beta, w_qkv):
    m, d = x2d.shape
    n3 = w_qkv.shape[1]
    tm = _row_tile(m)
    return pl.pallas_call(
        _ln_qkv_kernel,
        out_shape=jax.ShapeDtypeStruct((m, n3), jnp.bfloat16),
        grid=(pl.cdiv(m, tm),),
        in_specs=[
            pl.BlockSpec((tm, d), lambda i: (i, 0)),
            _resident((1, d), lambda i: (0, 0)),
            _resident((1, d), lambda i: (0, 0)),
            _resident((d, n3), lambda i: (0, 0)),
        ],
        out_specs=pl.BlockSpec((tm, n3), lambda i: (i, 0)),
        compiler_params=_cparams("parallel"),
    )(x2d, gamma.reshape(1, d), beta.reshape(1, d), w_qkv)


# ----------------------------------------------------------------------------
# Kernel 3: batched softmax attention (heads handled inside the kernel)
# ----------------------------------------------------------------------------

def _attn_kernel(q_ref, k_ref, v_ref, o_ref, *, heads, dim_head, scale):
    q = q_ref[...].astype(jnp.bfloat16)        # (GT, L, inner)
    k = k_ref[...].astype(jnp.bfloat16)
    v = v_ref[...].astype(jnp.bfloat16)
    # TODO(synk): per-head loop retained — multi-batch-dim dot_general / 4-D
    # transposes are not reliably lowerable in-kernel; heads still share one
    # lane-dense full-width store below (no per-head masked stores).
    outs = []
    for h in range(heads):
        sl = slice(h * dim_head, (h + 1) * dim_head)
        sim = jnp.einsum('bid,bjd->bij', q[:, :, sl], k[:, :, sl],
                         preferred_element_type=jnp.float32) * scale
        sim = sim - jnp.max(sim, axis=-1, keepdims=True)
        p = jnp.exp(sim)
        inv = pl.reciprocal(jnp.sum(p, axis=-1, keepdims=True), approx=True)
        attn = (p * inv).astype(jnp.bfloat16)
        outs.append(jnp.einsum('bij,bjd->bid', attn, v[:, :, sl],
                               preferred_element_type=jnp.float32))
    out = outs[0] if heads == 1 else jnp.concatenate(outs, axis=-1)
    o_ref[...] = out.astype(o_ref.dtype)


def attention_core(q, k, v, heads, dim_head):
    """q/k/v: (G, L, heads*dim_head) with G independent sequences of length L."""
    g, l, inner = q.shape
    gt = _group_tile(g, l)
    assert g % gt == 0, (g, gt)
    kernel = functools.partial(_attn_kernel, heads=heads, dim_head=dim_head,
                               scale=dim_head ** -0.5)
    mk = lambda: pl.BlockSpec((gt, l, inner), lambda i: (i, 0, 0))
    return pl.pallas_call(
        kernel,
        out_shape=jax.ShapeDtypeStruct((g, l, inner), jnp.bfloat16),
        grid=(g // gt,),
        in_specs=[mk(), mk(), mk()],
        out_specs=mk(),
        compiler_params=_cparams("parallel"),
    )(q, k, v)


# ----------------------------------------------------------------------------
# Kernel 4: linear + bias + residual (attention out-projection)
# ----------------------------------------------------------------------------

def _linear_res_kernel(a_ref, w_ref, b_ref, r_ref, o_ref):
    acc = jnp.dot(a_ref[...].astype(jnp.bfloat16), w_ref[...].astype(jnp.bfloat16),
                  preferred_element_type=jnp.float32)
    o_ref[...] = (acc + b_ref[...] + r_ref[...].astype(jnp.float32)).astype(o_ref.dtype)


def linear_residual(a2d, w, bias, res2d):
    m, kdim = a2d.shape
    n = w.shape[1]
    tm = _row_tile(m)
    return pl.pallas_call(
        _linear_res_kernel,
        out_shape=jax.ShapeDtypeStruct((m, n), jnp.float32),
        grid=(pl.cdiv(m, tm),),
        in_specs=[
            pl.BlockSpec((tm, kdim), lambda i: (i, 0)),
            _resident((kdim, n), lambda i: (0, 0)),
            _resident((1, n), lambda i: (0, 0)),
            pl.BlockSpec((tm, n), lambda i: (i, 0)),
        ],
        out_specs=pl.BlockSpec((tm, n), lambda i: (i, 0)),
        compiler_params=_cparams("parallel"),
    )(a2d, w, bias.reshape(1, n), res2d)


# ----------------------------------------------------------------------------
# Kernel 5: LayerNorm + FF1 + GEGLU + FF2 + bias + residual, hidden-dim tiled
# ----------------------------------------------------------------------------

def _ln_ff_kernel(x_ref, g_ref, bln_ref, w1a_ref, b1a_ref, w1g_ref, b1g_ref,
                  w2_ref, b2_ref, o_ref, y_sc, acc_sc):
    c = pl.program_id(1)

    @pl.when(c == 0)
    def _():
        x = x_ref[...].astype(jnp.float32)
        y_sc[...] = _layernorm_f32(x, g_ref[...], bln_ref[...]).astype(y_sc.dtype)
        acc_sc[...] = jnp.zeros_like(acc_sc)

    y = y_sc[...]                                            # bf16, resident
    a = jnp.dot(y, w1a_ref[...].astype(jnp.bfloat16),
                preferred_element_type=jnp.float32) + b1a_ref[...]
    gate = jnp.dot(y, w1g_ref[...].astype(jnp.bfloat16),
                   preferred_element_type=jnp.float32) + b1g_ref[...]
    z = (a * _gelu_tanh(gate)).astype(jnp.bfloat16)
    acc_sc[...] += jnp.dot(z, w2_ref[...].astype(jnp.bfloat16),
                           preferred_element_type=jnp.float32)

    @pl.when(c == pl.num_programs(1) - 1)
    def _():
        o_ref[...] = (acc_sc[...] + b2_ref[...]
                      + x_ref[...].astype(jnp.float32)).astype(o_ref.dtype)


def ln_ff_residual(x2d, gamma, beta, w1, b1, w2, b2):
    m, d = x2d.shape
    hidden = w2.shape[0]
    tm = _row_tile(m)
    hc = _ff_chunk(hidden)
    nchunks = hidden // hc
    # Split W1/b1 into the GEGLU value / gate halves outside the kernel so each
    # hidden chunk only needs two contiguous column blocks.
    w1a, w1g = w1[:, :hidden], w1[:, hidden:]
    b1a, b1g = b1[:hidden].reshape(1, hidden), b1[hidden:].reshape(1, hidden)
    return pl.pallas_call(
        _ln_ff_kernel,
        out_shape=jax.ShapeDtypeStruct((m, d), jnp.float32),
        grid=(pl.cdiv(m, tm), nchunks),
        in_specs=[
            pl.BlockSpec((tm, d), lambda i, c: (i, 0)),
            _resident((1, d), lambda i, c: (0, 0)),
            _resident((1, d), lambda i, c: (0, 0)),
            pl.BlockSpec((d, hc), lambda i, c: (0, c)),
            pl.BlockSpec((1, hc), lambda i, c: (0, c)),
            pl.BlockSpec((d, hc), lambda i, c: (0, c)),
            pl.BlockSpec((1, hc), lambda i, c: (0, c)),
            pl.BlockSpec((hc, d), lambda i, c: (c, 0)),
            _resident((1, d), lambda i, c: (0, 0)),
        ],
        out_specs=pl.BlockSpec((tm, d), lambda i, c: (i, 0)),
        scratch_shapes=[pltpu.VMEM((tm, d), jnp.bfloat16),
                        pltpu.VMEM((tm, d), jnp.float32)],
        compiler_params=_cparams("parallel", "arbitrary"),
    )(x2d, gamma.reshape(1, d), beta.reshape(1, d),
      w1a, b1a, w1g, b1g, w2, b2.reshape(1, d))


# ----------------------------------------------------------------------------
# Model (thin JAX glue around the fused Pallas kernels)
# ----------------------------------------------------------------------------

def _time_group(t, b, f, n, c):
    # 'b (f n) c -> (b n) f c'
    return t.reshape(b, f, n, c).transpose(0, 2, 1, 3).reshape(b * n, f, c)


def _time_ungroup(t, b, f, n, c):
    # '(b n) f c -> b (f n) c'
    return t.reshape(b, n, f, c).transpose(0, 2, 1, 3).reshape(b, f * n, c)


def attention_block(x, p, mode, f, n, heads, dim_head):
    """x: (b, f*n, dim) un-normed.  PreNorm + Attention + out-proj + residual."""
    bsz, N, dim = x.shape
    inner = heads * dim_head
    x2 = x.reshape(bsz * N, dim)

    qkv = ln_qkv(x2, p['norm_g'], p['norm_b'], p['w_qkv'])     # (bsz*N, 3*inner) bf16
    q = qkv[:, :inner].reshape(bsz, N, inner)
    k = qkv[:, inner:2 * inner].reshape(bsz, N, inner)
    v = qkv[:, 2 * inner:].reshape(bsz, N, inner)

    if mode == 'time':
        # TODO(synk): time regrouping stays an XLA transpose (strided rows are not
        # a rectangular BlockSpec tile); with L=num_frames tiny the (gt, L, inner)
        # blocks also waste sublanes — repacking groups onto sublanes is left undone.
        q_, k_, v_ = (_time_group(t, bsz, f, n, inner) for t in (q, k, v))
    else:
        q_, k_, v_ = (t.reshape(bsz * f, n, inner) for t in (q, k, v))

    o = attention_core(q_, k_, v_, heads, dim_head)            # bf16

    if mode == 'time':
        o = _time_ungroup(o, bsz, f, n, inner)
    else:
        o = o.reshape(bsz, N, inner)

    # TODO(synk): spatial-path out-projection could fuse into attention_core's
    # epilogue (regroup is a pure reshape); kept separate to avoid a 3-D x 2-D
    # dot_general inside the kernel.
    out = linear_residual(o.reshape(bsz * N, inner), p['w_out'], p['b_out'], x2)
    return out.reshape(bsz, N, dim)


def timesformer_forward(params, video, cfg):
    b, f, c, h, w = video.shape
    p = cfg['patch_size']
    hp, wp = h // p, w // p
    n = hp * wp
    dim = cfg['dim']
    heads, dim_head = cfg['heads'], cfg['dim_head']
    N = f * n
    assert N <= params['pos_emb'].shape[0]

    # 'b f c (h p1) (w p2) -> (b f h w) (p1 p2 c)'
    # TODO(synk): 7-D patch rearrange stays in XLA (not a rectangular-tile access).
    xv = video.reshape(b, f, c, hp, p, wp, p)
    xv = xv.transpose(0, 1, 3, 5, 4, 6, 2)
    xv = xv.reshape(b * N, p * p * c)

    x = patch_embed(xv, params['patch_w'], params['patch_b'],
                    params['pos_emb'][:N])                     # pos add fused in-kernel
    x = x.reshape(b, N, dim)

    for layer in params['layers']:
        x = attention_block(x, layer['time'], 'time', f, n, heads, dim_head)
        x = attention_block(x, layer['spatial'], 'spatial', f, n, heads, dim_head)
        ffp = layer['ff']
        x = ln_ff_residual(x.reshape(b * N, dim), ffp['norm_g'], ffp['norm_b'],
                           ffp['w1'], ffp['b1'], ffp['w2'], ffp['b2']
                           ).reshape(b, N, dim)

    return x.reshape(b, f, n, dim)[:, 0]                       # frame 0, as in reference


# ----------------------------------------------------------------------------
# Deterministic parameter init (matmul weights stored bf16 for the MXU)
# ----------------------------------------------------------------------------

def init_params(key, cfg):
    dim, heads, dh, mult = cfg['dim'], cfg['heads'], cfg['dim_head'], 4
    inner = heads * dh
    patch_dim = cfg['channels'] * cfg['patch_size'] ** 2
    num_patches = (cfg['height'] // cfg['patch_size']) * (cfg['width'] // cfg['patch_size'])
    num_positions = cfg['num_frames'] * num_patches

    keys = jax.random.split(key, 2 + cfg['depth'] * 8)
    it = iter(keys)

    def w(k, shape, scale=0.02, dtype=jnp.bfloat16):
        return (jax.random.normal(k, shape, jnp.float32) * scale).astype(dtype)

    params = {
        'patch_w': w(next(it), (patch_dim, dim)),
        'patch_b': jnp.zeros((dim,), jnp.float32),
        'pos_emb': w(next(it), (num_positions + 10, dim), dtype=jnp.float32),
        'layers': [],
    }
    for _ in range(cfg['depth']):
        layer = {}
        for name in ('time', 'spatial'):
            layer[name] = {
                'norm_g': jnp.ones((dim,), jnp.float32),
                'norm_b': jnp.zeros((dim,), jnp.float32),
                'w_qkv': w(next(it), (dim, 3 * inner)),        # bias-free, as in reference
                'w_out': w(next(it), (inner, dim)),
                'b_out': jnp.zeros((dim,), jnp.float32),
            }
        layer['ff'] = {
            'norm_g': jnp.ones((dim,), jnp.float32),
            'norm_b': jnp.zeros((dim,), jnp.float32),
            'w1': w(next(it), (dim, dim * mult * 2)),
            'b1': jnp.zeros((dim * mult * 2,), jnp.float32),
            'w2': w(next(it), (dim * mult, dim)),
            'b2': jnp.zeros((dim,), jnp.float32),
        }
        params['layers'].append(layer)
    return params


# ----------------------------------------------------------------------------

if __name__ == "__main__":
    cfg = dict(
        dim=64,
        num_frames=2,
        num_locations=10,      # to_out head is unused in the reference forward
        height=32,
        width=32,
        patch_size=16,
        channels=3,
        depth=2,
        heads=2,
        dim_head=32,
    )

    key = jax.random.PRNGKey(0)
    vkey, pkey = jax.random.split(key)
    video = jax.random.normal(
        vkey,
        (2, cfg['num_frames'], cfg['channels'], cfg['height'], cfg['width']),
        jnp.float32,
    )
    params = init_params(pkey, cfg)

    fwd = jax.jit(lambda prm, vid: timesformer_forward(prm, vid, cfg))
    out = fwd(params, video)
    out = jax.block_until_ready(out)

    b = video.shape[0]
    n = (cfg['height'] // cfg['patch_size']) * (cfg['width'] // cfg['patch_size'])
    assert out.shape == (b, n, cfg['dim']), out.shape
    assert bool(jnp.all(jnp.isfinite(out)))
    print("KERNEL_OK")
</pallas_src>

<mosaic_0001>
module attributes {stable_mosaic.version = 11 : i64} {
  func.func @_patch_embed_kernel(%arg0: i32, %arg1: memref<8x768xf32, #tpu.memory_space<vmem>>, %arg2: memref<768x64xbf16, #tpu.memory_space<vmem>>, %arg3: memref<1x64xf32, #tpu.memory_space<vmem>>, %arg4: memref<8x64xf32, #tpu.memory_space<vmem>>, %arg5: memref<8x64xf32, #tpu.memory_space<vmem>>) attributes {dimension_semantics = [#tpu.dimension_semantics<parallel>], iteration_bounds = array<i64: 2>, scalar_prefetch = 0 : i64, scratch_operands = 0 : i64, tpu.core_type = #tpu.core_type<tc>, window_params = [{transform_indices = @transform_0, window_bounds = array<i64: 8, 768>}, {pipeline_mode = #tpu.pipeline_mode<synchronous>, transform_indices = @transform_1, window_bounds = array<i64: 768, 64>}, {pipeline_mode = #tpu.pipeline_mode<synchronous>, transform_indices = @transform_2, window_bounds = array<i64: 1, 64>}, {transform_indices = @transform_3, window_bounds = array<i64: 8, 64>}, {transform_indices = @transform_4, window_bounds = array<i64: 8, 64>}]} {
    %c0 = arith.constant 0 : index
    %c0_0 = arith.constant 0 : index
    %0 = vector.load %arg1[%c0, %c0_0] : memref<8x768xf32, #tpu.memory_space<vmem>>, vector<8x768xf32>
    %1 = arith.truncf %0 : vector<8x768xf32> to vector<8x768xbf16>
    %c0_1 = arith.constant 0 : index
    %c0_2 = arith.constant 0 : index
    %2 = vector.load %arg2[%c0_1, %c0_2] : memref<768x64xbf16, #tpu.memory_space<vmem>>, vector<768x64xbf16>
    %cst = arith.constant dense<0.000000e+00> : vector<8x64xf32>
    %3 = tpu.matmul %1, %2, %cst {dimension_numbers = #tpu.dot_dimension_numbers<[1], [0], [0], [1], [0, 0, 1, 1], [], []>} : vector<8x768xbf16>, vector<768x64xbf16>, vector<8x64xf32> -> vector<8x64xf32>
    %c0_3 = arith.constant 0 : index
    %c0_4 = arith.constant 0 : index
    %4 = vector.load %arg3[%c0_3, %c0_4] : memref<1x64xf32, #tpu.memory_space<vmem>>, vector<1x64xf32>
    %5 = vector.broadcast %4 : vector<1x64xf32> to vector<8x64xf32>
    %6 = arith.addf %3, %5 : vector<8x64xf32>
    %c0_5 = arith.constant 0 : index
    %c0_6 = arith.constant 0 : index
    %7 = vector.load %arg4[%c0_5, %c0_6] : memref<8x64xf32, #tpu.memory_space<vmem>>, vector<8x64xf32>
    %8 = arith.addf %6, %7 : vector<8x64xf32>
    %c0_7 = arith.constant 0 : index
    %c0_8 = arith.constant 0 : index
    %9 = vector.load %arg5[%c0_7, %c0_8] : memref<8x64xf32, #tpu.memory_space<vmem>>, vector<8x64xf32>
    tpu.vector_store %arg5[%c0_7, %c0_8], %8 {strides = array<i32>} : memref<8x64xf32, #tpu.memory_space<vmem>>, vector<8x64xf32>,
    return
  }
  func.func @transform_0(%arg0: i32) -> (i32, i32) {
    %c0_i32 = arith.constant 0 : i32
    %c0_i32_0 = arith.constant 0 : i32
    return %arg0, %c0_i32 : i32, i32
  }
  func.func @transform_1(%arg0: i32) -> (i32, i32) {
    %c0_i32 = arith.constant 0 : i32
    %c0_i32_0 = arith.constant 0 : i32
    %c0_i32_1 = arith.constant 0 : i32
    return %c0_i32, %c0_i32_0 : i32, i32
  }
  func.func @transform_2(%arg0: i32) -> (i32, i32) {
    %c0_i32 = arith.constant 0 : i32
    %c0_i32_0 = arith.constant 0 : i32
    %c0_i32_1 = arith.constant 0 : i32
    return %c0_i32, %c0_i32_0 : i32, i32
  }
  func.func @transform_3(%arg0: i32) -> (i32, i32) {
    %c1_i32 = arith.constant 1 : i32
    %c0_i32 = arith.constant 0 : i32
    %0 = arith.cmpi eq, %c1_i32, %c0_i32 : i32
    %c1_i32_0 = arith.constant 1 : i32
    %1 = arith.select %0, %c1_i32_0, %c1_i32 : i32
    %2 = arith.remsi %arg0, %1 : i32
    %c0_i32_1 = arith.constant 0 : i32
    %3 = arith.cmpi ne, %2, %c0_i32_1 : i32
    %c0_i32_2 = arith.constant 0 : i32
    %4 = arith.cmpi slt, %2, %c0_i32_2 : i32
    %c0_i32_3 = arith.constant 0 : i32
    %5 = arith.cmpi slt, %1, %c0_i32_3 : i32
    %6 = arith.xori %4, %5 : i1
    %7 = arith.andi %6, %3 : i1
    %8 = arith.addi %2, %1 : i32
    %9 = arith.select %7, %8, %2 : i32
    %c0_i32_4 = arith.constant 0 : i32
    %c0_i32_5 = arith.constant 0 : i32
    return %9, %c0_i32_4 : i32, i32
  }
  func.func @transform_4(%arg0: i32) -> (i32, i32) {
    %c0_i32 = arith.constant 0 : i32
    %c0_i32_0 = arith.constant 0 : i32
    return %arg0, %c0_i32 : i32, i32
  }
}

module attributes {stable_mosaic.version = 11 : i64} {
  func.func @_ln_qkv_kernel(%arg0: i32, %arg1: memref<16x64xf32, #tpu.memory_space<vmem>>, %arg2: memref<1x64xf32, #tpu.memory_space<vmem>>, %arg3: memref<1x64xf32, #tpu.memory_space<vmem>>, %arg4: memref<64x192xbf16, #tpu.memory_space<vmem>>, %arg5: memref<16x192xbf16, #tpu.memory_space<vmem>>) attributes {dimension_semantics = [#tpu.dimension_semantics<parallel>], iteration_bounds = array<i64: 1>, scalar_prefetch = 0 : i64, scratch_operands = 0 : i64, tpu.core_type = #tpu.core_type<tc>, window_params = [{transform_indices = @transform_0, window_bounds = array<i64: 16, 64>}, {pipeline_mode = #tpu.pipeline_mode<synchronous>, transform_indices = @transform_1, window_bounds = array<i64: 1, 64>}, {pipeline_mode = #tpu.pipeline_mode<synchronous>, transform_indices = @transform_2, window_bounds = array<i64: 1, 64>}, {pipeline_mode = #tpu.pipeline_mode<synchronous>, transform_indices = @transform_3, window_bounds = array<i64: 64, 192>}, {transform_indices = @transform_4, window_bounds = array<i64: 16, 192>}]} {
    %c0 = arith.constant 0 : index
    %c0_0 = arith.constant 0 : index
    %0 = vector.load %arg1[%c0, %c0_0] : memref<16x64xf32, #tpu.memory_space<vmem>>, vector<16x64xf32>
    %c0_1 = arith.constant 0 : index
    %c0_2 = arith.constant 0 : index
    %1 = vector.load %arg2[%c0_1, %c0_2] : memref<1x64xf32, #tpu.memory_space<vmem>>, vector<1x64xf32>
    %c0_3 = arith.constant 0 : index
    %c0_4 = arith.constant 0 : index
    %2 = vector.load %arg3[%c0_3, %c0_4] : memref<1x64xf32, #tpu.memory_space<vmem>>, vector<1x64xf32>
    %cst = arith.constant dense<0.000000e+00> : vector<16xf32>
    %3 = vector.multi_reduction <add>, %0, %cst [1] : vector<16x64xf32> to vector<16xf32>
    %4 = vector.shape_cast %3 : vector<16xf32> to vector<16x1xf32>
    %cst_5 = arith.constant 6.400000e+01 : f32
    %5 = vector.broadcast %cst_5 : f32 to vector<16x1xf32>
    %6 = arith.divf %4, %5 : vector<16x1xf32>
    %7 = vector.broadcast %6 : vector<16x1xf32> to vector<16x64xf32>
    %8 = arith.subf %0, %7 : vector<16x64xf32>
    %9 = arith.mulf %8, %8 : vector<16x64xf32>
    %cst_6 = arith.constant dense<0.000000e+00> : vector<16xf32>
    %10 = vector.multi_reduction <add>, %9, %cst_6 [1] : vector<16x64xf32> to vector<16xf32>
    %11 = vector.shape_cast %10 : vector<16xf32> to vector<16x1xf32>
    %cst_7 = arith.constant 6.400000e+01 : f32
    %12 = vector.broadcast %cst_7 : f32 to vector<16x1xf32>
    %13 = arith.divf %11, %12 : vector<16x1xf32>
    %14 = vector.broadcast %6 : vector<16x1xf32> to vector<16x64xf32>
    %15 = arith.subf %0, %14 : vector<16x64xf32>
    %cst_8 = arith.constant 9.99999974E-6 : f32
    %16 = vector.broadcast %cst_8 : f32 to vector<16x1xf32>
    %17 = arith.addf %13, %16 : vector<16x1xf32>
    %18 = math.rsqrt %17 : vector<16x1xf32>
    %19 = vector.broadcast %18 : vector<16x1xf32> to vector<16x64xf32>
    %20 = arith.mulf %15, %19 : vector<16x64xf32>
    %21 = vector.broadcast %1 : vector<1x64xf32> to vector<16x64xf32>
    %22 = arith.mulf %20, %21 : vector<16x64xf32>
    %23 = vector.broadcast %2 : vector<1x64xf32> to vector<16x64xf32>
    %24 = arith.addf %22, %23 : vector<16x64xf32>
    %25 = arith.truncf %24 : vector<16x64xf32> to vector<16x64xbf16>
    %c0_9 = arith.constant 0 : index
    %c0_10 = arith.constant 0 : index
    %26 = vector.load %arg4[%c0_9, %c0_10] : memref<64x192xbf16, #tpu.memory_space<vmem>>, vector<64x192xbf16>
    %cst_11 = arith.constant dense<0.000000e+00> : vector<16x192xf32>
    %27 = tpu.matmul %25, %26, %cst_11 {dimension_numbers = #tpu.dot_dimension_numbers<[1], [0], [0], [1], [0, 0, 1, 1], [], []>} : vector<16x64xbf16>, vector<64x192xbf16>, vector<16x192xf32> -> vector<16x192xf32>
    %28 = arith.truncf %27 : vector<16x192xf32> to vector<16x192xbf16>
    %c0_12 = arith.constant 0 : index
    %c0_13 = arith.constant 0 : index
    %29 = vector.load %arg5[%c0_12, %c0_13] : memref<16x192xbf16, #tpu.memory_space<vmem>>, vector<16x192xbf16>
    tpu.vector_store %arg5[%c0_12, %c0_13], %28 {strides = array<i32>} : memref<16x192xbf16, #tpu.memory_space<vmem>>, vector<16x192xbf16>,
    return
  }
  func.func @transform_0(%arg0: i32) -> (i32, i32) {
    %c0_i32 = arith.constant 0 : i32
    %c0_i32_0 = arith.constant 0 : i32
    return %arg0, %c0_i32 : i32, i32
  }
  func.func @transform_1(%arg0: i32) -> (i32, i32) {
    %c0_i32 = arith.constant 0 : i32
    %c0_i32_0 = arith.constant 0 : i32
    %c0_i32_1 = arith.constant 0 : i32
    return %c0_i32, %c0_i32_0 : i32, i32
  }
  func.func @transform_2(%arg0: i32) -> (i32, i32) {
    %c0_i32 = arith.constant 0 : i32
    %c0_i32_0 = arith.constant 0 : i32
    %c0_i32_1 = arith.constant 0 : i32
    return %c0_i32, %c0_i32_0 : i32, i32
  }
  func.func @transform_3(%arg0: i32) -> (i32, i32) {
    %c0_i32 = arith.constant 0 : i32
    %c0_i32_0 = arith.constant 0 : i32
    %c0_i32_1 = arith.constant 0 : i32
    return %c0_i32, %c0_i32_0 : i32, i32
  }
  func.func @transform_4(%arg0: i32) -> (i32, i32) {
    %c0_i32 = arith.constant 0 : i32
    %c0_i32_0 = arith.constant 0 : i32
    return %arg0, %c0_i32 : i32, i32
  }
}

module attributes {stable_mosaic.version = 11 : i64} {
  func.func @_linear_res_kernel(%arg0: i32, %arg1: memref<16x64xbf16, #tpu.memory_space<vmem>>, %arg2: memref<64x64xbf16, #tpu.memory_space<vmem>>, %arg3: memref<1x64xf32, #tpu.memory_space<vmem>>, %arg4: memref<16x64xf32, #tpu.memory_space<vmem>>, %arg5: memref<16x64xf32, #tpu.memory_space<vmem>>) attributes {dimension_semantics = [#tpu.dimension_semantics<parallel>], iteration_bounds = array<i64: 1>, scalar_prefetch = 0 : i64, scratch_operands = 0 : i64, tpu.core_type = #tpu.core_type<tc>, window_params = [{transform_indices = @transform_0, window_bounds = array<i64: 16, 64>}, {pipeline_mode = #tpu.pipeline_mode<synchronous>, transform_indices = @transform_1, window_bounds = array<i64: 64, 64>}, {pipeline_mode = #tpu.pipeline_mode<synchronous>, transform_indices = @transform_2, window_bounds = array<i64: 1, 64>}, {transform_indices = @transform_3, window_bounds = array<i64: 16, 64>}, {transform_indices = @transform_4, window_bounds = array<i64: 16, 64>}]} {
    %c0 = arith.constant 0 : index
    %c0_0 = arith.constant 0 : index
    %0 = vector.load %arg1[%c0, %c0_0] : memref<16x64xbf16, #tpu.memory_space<vmem>>, vector<16x64xbf16>
    %c0_1 = arith.constant 0 : index
    %c0_2 = arith.constant 0 : index
    %1 = vector.load %arg2[%c0_1, %c0_2] : memref<64x64xbf16, #tpu.memory_space<vmem>>, vector<64x64xbf16>
    %cst = arith.constant dense<0.000000e+00> : vector<16x64xf32>
    %2 = tpu.matmul %0, %1, %cst {dimension_numbers = #tpu.dot_dimension_numbers<[1], [0], [0], [1], [0, 0, 1, 1], [], []>} : vector<16x64xbf16>, vector<64x64xbf16>, vector<16x64xf32> -> vector<16x64xf32>
    %c0_3 = arith.constant 0 : index
    %c0_4 = arith.constant 0 : index
    %3 = vector.load %arg3[%c0_3, %c0_4] : memref<1x64xf32, #tpu.memory_space<vmem>>, vector<1x64xf32>
    %4 = vector.broadcast %3 : vector<1x64xf32> to vector<16x64xf32>
    %5 = arith.addf %2, %4 : vector<16x64xf32>
    %c0_5 = arith.constant 0 : index
    %c0_6 = arith.constant 0 : index
    %6 = vector.load %arg4[%c0_5, %c0_6] : memref<16x64xf32, #tpu.memory_space<vmem>>, vector<16x64xf32>
    %7 = arith.addf %5, %6 : vector<16x64xf32>
    %c0_7 = arith.constant 0 : index
    %c0_8 = arith.constant 0 : index
    %8 = vector.load %arg5[%c0_7, %c0_8] : memref<16x64xf32, #tpu.memory_space<vmem>>, vector<16x64xf32>
    tpu.vector_store %arg5[%c0_7, %c0_8], %7 {strides = array<i32>} : memref<16x64xf32, #tpu.memory_space<vmem>>, vector<16x64xf32>,
    return
  }
  func.func @transform_0(%arg0: i32) -> (i32, i32) {
    %c0_i32 = arith.constant 0 : i32
    %c0_i32_0 = arith.constant 0 : i32
    return %arg0, %c0_i32 : i32, i32
  }
  func.func @transform_1(%arg0: i32) -> (i32, i32) {
    %c0_i32 = arith.constant 0 : i32
    %c0_i32_0 = arith.constant 0 : i32
    %c0_i32_1 = arith.constant 0 : i32
    return %c0_i32, %c0_i32_0 : i32, i32
  }
  func.func @transform_2(%arg0: i32) -> (i32, i32) {
    %c0_i32 = arith.constant 0 : i32
    %c0_i32_0 = arith.constant 0 : i32
    %c0_i32_1 = arith.constant 0 : i32
    return %c0_i32, %c0_i32_0 : i32, i32
  }
  func.func @transform_3(%arg0: i32) -> (i32, i32) {
    %c0_i32 = arith.constant 0 : i32
    %c0_i32_0 = arith.constant 0 : i32
    return %arg0, %c0_i32 : i32, i32
  }
  func.func @transform_4(%arg0: i32) -> (i32, i32) {
    %c0_i32 = arith.constant 0 : i32
    %c0_i32_0 = arith.constant 0 : i32
    return %arg0, %c0_i32 : i32, i32
  }
}

module attributes {stable_mosaic.version = 11 : i64} {
  func.func @_attn_kernel(%arg0: i32, %arg1: memref<2x2x64xbf16, #tpu.memory_space<vmem>>, %arg2: memref<2x2x64xbf16, #tpu.memory_space<vmem>>, %arg3: memref<2x2x64xbf16, #tpu.memory_space<vmem>>, %arg4: memref<2x2x64xbf16, #tpu.memory_space<vmem>>) attributes {dimension_semantics = [#tpu.dimension_semantics<parallel>], iteration_bounds = array<i64: 4>, scalar_prefetch = 0 : i64, scratch_operands = 0 : i64, tpu.core_type = #tpu.core_type<tc>, window_params = [{transform_indices = @transform_0, window_bounds = array<i64: 2, 2, 64>}, {transform_indices = @transform_1, window_bounds = array<i64: 2, 2, 64>}, {transform_indices = @transform_2, window_bounds = array<i64: 2, 2, 64>}, {transform_indices = @transform_3, window_bounds = array<i64: 2, 2, 64>}]} {
    %c0 = arith.constant 0 : index
    %c0_0 = arith.constant 0 : index
    %c0_1 = arith.constant 0 : index
    %0 = vector.load %arg1[%c0, %c0_0, %c0_1] : memref<2x2x64xbf16, #tpu.memory_space<vmem>>, vector<2x2x64xbf16>
    %c0_2 = arith.constant 0 : index
    %c0_3 = arith.constant 0 : index
    %c0_4 = arith.constant 0 : index
    %1 = vector.load %arg2[%c0_2, %c0_3, %c0_4] : memref<2x2x64xbf16, #tpu.memory_space<vmem>>, vector<2x2x64xbf16>
    %c0_5 = arith.constant 0 : index
    %c0_6 = arith.constant 0 : index
    %c0_7 = arith.constant 0 : index
    %2 = vector.load %arg3[%c0_5, %c0_6, %c0_7] : memref<2x2x64xbf16, #tpu.memory_space<vmem>>, vector<2x2x64xbf16>
    %3 = vector.extract_strided_slice %0 {offsets = [0, 0, 0], sizes = [2, 2, 32], strides = [1, 1, 1]} : vector<2x2x64xbf16> to vector<2x2x32xbf16>
    %4 = vector.extract_strided_slice %1 {offsets = [0, 0, 0], sizes = [2, 2, 32], strides = [1, 1, 1]} : vector<2x2x64xbf16> to vector<2x2x32xbf16>
    "tpu.trace_start"() <{level = 10 : i32, message = "bid,bjd->bij"}> : () -> ()
    %cst = arith.constant dense<0.000000e+00> : vector<2x2x2xf32>
    %5 = tpu.matmul %3, %4, %cst {dimension_numbers = #tpu.dot_dimension_numbers<[2], [2], [1], [1], [0, 0, 0, 1, 1, 1], [0], [0]>} : vector<2x2x32xbf16>, vector<2x2x32xbf16>, vector<2x2x2xf32> -> vector<2x2x2xf32>
    "tpu.trace_stop"() : () -> ()
    %cst_8 = arith.constant 0.176776692 : f32
    %6 = vector.broadcast %cst_8 : f32 to vector<2x2x2xf32>
    %7 = arith.mulf %5, %6 : vector<2x2x2xf32>
    %cst_9 = arith.constant dense<0xFF800000> : vector<2x2xf32>
    %8 = vector.multi_reduction <maximumf>, %7, %cst_9 [2] : vector<2x2x2xf32> to vector<2x2xf32>
    %9 = vector.shape_cast %8 : vector<2x2xf32> to vector<2x2x1xf32>
    %10 = vector.broadcast %9 : vector<2x2x1xf32> to vector<2x2x2xf32>
    %11 = arith.subf %7, %10 : vector<2x2x2xf32>
    %12 = math.exp %11 : vector<2x2x2xf32>
    %cst_10 = arith.constant dense<0.000000e+00> : vector<2x2xf32>
    %13 = vector.multi_reduction <add>, %12, %cst_10 [2] : vector<2x2x2xf32> to vector<2x2xf32>
    %14 = vector.shape_cast %13 : vector<2x2xf32> to vector<2x2x1xf32>
    %15 = tpu.reciprocal %14 {approx = true} : vector<2x2x1xf32> -> vector<2x2x1xf32>
    %16 = vector.broadcast %15 : vector<2x2x1xf32> to vector<2x2x2xf32>
    %17 = arith.mulf %12, %16 : vector<2x2x2xf32>
    %18 = arith.truncf %17 : vector<2x2x2xf32> to vector<2x2x2xbf16>
    %19 = vector.extract_strided_slice %2 {offsets = [0, 0, 0], sizes = [2, 2, 32], strides = [1, 1, 1]} : vector<2x2x64xbf16> to vector<2x2x32xbf16>
    "tpu.trace_start"() <{level = 10 : i32, message = "bij,bjd->bid"}> : () -> ()
    %cst_11 = arith.constant dense<0.000000e+00> : vector<2x2x32xf32>
    %20 = tpu.matmul %18, %19, %cst_11 {dimension_numbers = #tpu.dot_dimension_numbers<[2], [1], [1], [2], [0, 0, 0, 1, 1, 2], [0], [0]>} : vector<2x2x2xbf16>, vector<2x2x32xbf16>, vector<2x2x32xf32> -> vector<2x2x32xf32>
    "tpu.trace_stop"() : () -> ()
    %21 = vector.extract_strided_slice %0 {offsets = [0, 0, 32], sizes = [2, 2, 32], strides = [1, 1, 1]} : vector<2x2x64xbf16> to vector<2x2x32xbf16>
    %22 = vector.extract_strided_slice %1 {offsets = [0, 0, 32], sizes = [2, 2, 32], strides = [1, 1, 1]} : vector<2x2x64xbf16> to vector<2x2x32xbf16>
    "tpu.trace_start"() <{level = 10 : i32, message = "bid,bjd->bij"}> : () -> ()
    %cst_12 = arith.constant dense<0.000000e+00> : vector<2x2x2xf32>
    %23 = tpu.matmul %21, %22, %cst_12 {dimension_numbers = #tpu.dot_dimension_numbers<[2], [2], [1], [1], [0, 0, 0, 1, 1, 1], [0], [0]>} : vector<2x2x32xbf16>, vector<2x2x32xbf16>, vector<2x2x2xf32> -> vector<2x2x2xf32>
    "tpu.trace_stop"() : () -> ()
    %cst_13 = arith.constant 0.176776692 : f32
    %24 = vector.broadcast %cst_13 : f32 to vector<2x2x2xf32>
    %25 = arith.mulf %23, %24 : vector<2x2x2xf32>
    %cst_14 = arith.constant dense<0xFF800000> : vector<2x2xf32>
    %26 = vector.multi_reduction <maximumf>, %25, %cst_14 [2] : vector<2x2x2xf32> to vector<2x2xf32>
    %27 = vector.shape_cast %26 : vector<2x2xf32> to vector<2x2x1xf32>
    %28 = vector.broadcast %27 : vector<2x2x1xf32> to vector<2x2x2xf32>
    %29 = arith.subf %25, %28 : vector<2x2x2xf32>
    %30 = math.exp %29 : vector<2x2x2xf32>
    %cst_15 = arith.constant dense<0.000000e+00> : vector<2x2xf32>
    %31 = vector.multi_reduction <add>, %30, %cst_15 [2] : vector<2x2x2xf32> to vector<2x2xf32>
    %32 = vector.shape_cast %31 : vector<2x2xf32> to vector<2x2x1xf32>
    %33 = tpu.reciprocal %32 {approx = true} : vector<2x2x1xf32> -> vector<2x2x1xf32>
    %34 = vector.broadcast %33 : vector<2x2x1xf32> to vector<2x2x2xf32>
    %35 = arith.mulf %30, %34 : vector<2x2x2xf32>
    %36 = arith.truncf %35 : vector<2x2x2xf32> to vector<2x2x2xbf16>
    %37 = vector.extract_strided_slice %2 {offsets = [0, 0, 32], sizes = [2, 2, 32], strides = [1, 1, 1]} : vector<2x2x64xbf16> to vector<2x2x32xbf16>
    "tpu.trace_start"() <{level = 10 : i32, message = "bij,bjd->bid"}> : () -> ()
    %cst_16 = arith.constant dense<0.000000e+00> : vector<2x2x32xf32>
    %38 = tpu.matmul %36, %37, %cst_16 {dimension_numbers = #tpu.dot_dimension_numbers<[2], [1], [1], [2], [0, 0, 0, 1, 1, 2], [0], [0]>} : vector<2x2x2xbf16>, vector<2x2x32xbf16>, vector<2x2x32xf32> -> vector<2x2x32xf32>
    "tpu.trace_stop"() : () -> ()
    %39 = tpu.concatenate %20, %38 in 2 : vector<2x2x32xf32>, vector<2x2x32xf32> -> vector<2x2x64xf32>
    %40 = arith.truncf %39 : vector<2x2x64xf32> to vector<2x2x64xbf16>
    %c0_17 = arith.constant 0 : index
    %c0_18 = arith.constant 0 : index
    %c0_19 = arith.constant 0 : index
    %41 = vector.load %arg4[%c0_17, %c0_18, %c0_19] : memref<2x2x64xbf16, #tpu.memory_space<vmem>>, vector<2x2x64xbf16>
    tpu.vector_store %arg4[%c0_17, %c0_18, %c0_19], %40 {strides = array<i32>} : memref<2x2x64xbf16, #tpu.memory_space<vmem>>, vector<2x2x64xbf16>,
    return
  }
  func.func @transform_0(%arg0: i32) -> (i32, i32, i32) {
    %c0_i32 = arith.constant 0 : i32
    %c0_i32_0 = arith.constant 0 : i32
    %c0_i32_1 = arith.constant 0 : i32
    return %arg0, %c0_i32, %c0_i32_0 : i32, i32, i32
  }
  func.func @transform_1(%arg0: i32) -> (i32, i32, i32) {
    %c0_i32 = arith.constant 0 : i32
    %c0_i32_0 = arith.constant 0 : i32
    %c0_i32_1 = arith.constant 0 : i32
    return %arg0, %c0_i32, %c0_i32_0 : i32, i32, i32
  }
  func.func @transform_2(%arg0: i32) -> (i32, i32, i32) {
    %c0_i32 = arith.constant 0 : i32
    %c0_i32_0 = arith.constant 0 : i32
    %c0_i32_1 = arith.constant 0 : i32
    return %arg0, %c0_i32, %c0_i32_0 : i32, i32, i32
  }
  func.func @transform_3(%arg0: i32) -> (i32, i32, i32) {
    %c0_i32 = arith.constant 0 : i32
    %c0_i32_0 = arith.constant 0 : i32
    %c0_i32_1 = arith.constant 0 : i32
    return %arg0, %c0_i32, %c0_i32_0 : i32, i32, i32
  }
}

module attributes {stable_mosaic.version = 11 : i64} {
  func.func @_attn_kernel(%arg0: i32, %arg1: memref<1x4x64xbf16, #tpu.memory_space<vmem>>, %arg2: memref<1x4x64xbf16, #tpu.memory_space<vmem>>, %arg3: memref<1x4x64xbf16, #tpu.memory_space<vmem>>, %arg4: memref<1x4x64xbf16, #tpu.memory_space<vmem>>) attributes {dimension_semantics = [#tpu.dimension_semantics<parallel>], iteration_bounds = array<i64: 4>, scalar_prefetch = 0 : i64, scratch_operands = 0 : i64, tpu.core_type = #tpu.core_type<tc>, window_params = [{transform_indices = @transform_0, window_bounds = array<i64: 1, 4, 64>}, {transform_indices = @transform_1, window_bounds = array<i64: 1, 4, 64>}, {transform_indices = @transform_2, window_bounds = array<i64: 1, 4, 64>}, {transform_indices = @transform_3, window_bounds = array<i64: 1, 4, 64>}]} {
    %c0 = arith.constant 0 : index
    %c0_0 = arith.constant 0 : index
    %c0_1 = arith.constant 0 : index
    %0 = vector.load %arg1[%c0, %c0_0, %c0_1] : memref<1x4x64xbf16, #tpu.memory_space<vmem>>, vector<1x4x64xbf16>
    %c0_2 = arith.constant 0 : index
    %c0_3 = arith.constant 0 : index
    %c0_4 = arith.constant 0 : index
    %1 = vector.load %arg2[%c0_2, %c0_3, %c0_4] : memref<1x4x64xbf16, #tpu.memory_space<vmem>>, vector<1x4x64xbf16>
    %c0_5 = arith.constant 0 : index
    %c0_6 = arith.constant 0 : index
    %c0_7 = arith.constant 0 : index
    %2 = vector.load %arg3[%c0_5, %c0_6, %c0_7] : memref<1x4x64xbf16, #tpu.memory_space<vmem>>, vector<1x4x64xbf16>
    %3 = vector.extract_strided_slice %0 {offsets = [0, 0, 0], sizes = [1, 4, 32], strides = [1, 1, 1]} : vector<1x4x64xbf16> to vector<1x4x32xbf16>
    %4 = vector.extract_strided_slice %1 {offsets = [0, 0, 0], sizes = [1, 4, 32], strides = [1, 1, 1]} : vector<1x4x64xbf16> to vector<1x4x32xbf16>
    "tpu.trace_start"() <{level = 10 : i32, message = "bid,bjd->bij"}> : () -> ()
    %cst = arith.constant dense<0.000000e+00> : vector<1x4x4xf32>
    %5 = tpu.matmul %3, %4, %cst {dimension_numbers = #tpu.dot_dimension_numbers<[2], [2], [1], [1], [0, 0, 0, 1, 1, 1], [0], [0]>} : vector<1x4x32xbf16>, vector<1x4x32xbf16>, vector<1x4x4xf32> -> vector<1x4x4xf32>
    "tpu.trace_stop"() : () -> ()
    %cst_8 = arith.constant 0.176776692 : f32
    %6 = vector.broadcast %cst_8 : f32 to vector<1x4x4xf32>
    %7 = arith.mulf %5, %6 : vector<1x4x4xf32>
    %cst_9 = arith.constant dense<0xFF800000> : vector<1x4xf32>
    %8 = vector.multi_reduction <maximumf>, %7, %cst_9 [2] : vector<1x4x4xf32> to vector<1x4xf32>
    %9 = vector.shape_cast %8 : vector<1x4xf32> to vector<1x4x1xf32>
    %10 = vector.broadcast %9 : vector<1x4x1xf32> to vector<1x4x4xf32>
    %11 = arith.subf %7, %10 : vector<1x4x4xf32>
    %12 = math.exp %11 : vector<1x4x4xf32>
    %cst_10 = arith.constant dense<0.000000e+00> : vector<1x4xf32>
    %13 = vector.multi_reduction <add>, %12, %cst_10 [2] : vector<1x4x4xf32> to vector<1x4xf32>
    %14 = vector.shape_cast %13 : vector<1x4xf32> to vector<1x4x1xf32>
    %15 = tpu.reciprocal %14 {approx = true} : vector<1x4x1xf32> -> vector<1x4x1xf32>
    %16 = vector.broadcast %15 : vector<1x4x1xf32> to vector<1x4x4xf32>
    %17 = arith.mulf %12, %16 : vector<1x4x4xf32>
    %18 = arith.truncf %17 : vector<1x4x4xf32> to vector<1x4x4xbf16>
    %19 = vector.extract_strided_slice %2 {offsets = [0, 0, 0], sizes = [1, 4, 32], strides = [1, 1, 1]} : vector<1x4x64xbf16> to vector<1x4x32xbf16>
    "tpu.trace_start"() <{level = 10 : i32, message = "bij,bjd->bid"}> : () -> ()
    %cst_11 = arith.constant dense<0.000000e+00> : vector<1x4x32xf32>
    %20 = tpu.matmul %18, %19, %cst_11 {dimension_numbers = #tpu.dot_dimension_numbers<[2], [1], [1], [2], [0, 0, 0, 1, 1, 2], [0], [0]>} : vector<1x4x4xbf16>, vector<1x4x32xbf16>, vector<1x4x32xf32> -> vector<1x4x32xf32>
    "tpu.trace_stop"() : () -> ()
    %21 = vector.extract_strided_slice %0 {offsets = [0, 0, 32], sizes = [1, 4, 32], strides = [1, 1, 1]} : vector<1x4x64xbf16> to vector<1x4x32xbf16>
    %22 = vector.extract_strided_slice %1 {offsets = [0, 0, 32], sizes = [1, 4, 32], strides = [1, 1, 1]} : vector<1x4x64xbf16> to vector<1x4x32xbf16>
    "tpu.trace_start"() <{level = 10 : i32, message = "bid,bjd->bij"}> : () -> ()
    %cst_12 = arith.constant dense<0.000000e+00> : vector<1x4x4xf32>
    %23 = tpu.matmul %21, %22, %cst_12 {dimension_numbers = #tpu.dot_dimension_numbers<[2], [2], [1], [1], [0, 0, 0, 1, 1, 1], [0], [0]>} : vector<1x4x32xbf16>, vector<1x4x32xbf16>, vector<1x4x4xf32> -> vector<1x4x4xf32>
    "tpu.trace_stop"() : () -> ()
    %cst_13 = arith.constant 0.176776692 : f32
    %24 = vector.broadcast %cst_13 : f32 to vector<1x4x4xf32>
    %25 = arith.mulf %23, %24 : vector<1x4x4xf32>
    %cst_14 = arith.constant dense<0xFF800000> : vector<1x4xf32>
    %26 = vector.multi_reduction <maximumf>, %25, %cst_14 [2] : vector<1x4x4xf32> to vector<1x4xf32>
    %27 = vector.shape_cast %26 : vector<1x4xf32> to vector<1x4x1xf32>
    %28 = vector.broadcast %27 : vector<1x4x1xf32> to vector<1x4x4xf32>
    %29 = arith.subf %25, %28 : vector<1x4x4xf32>
    %30 = math.exp %29 : vector<1x4x4xf32>
    %cst_15 = arith.constant dense<0.000000e+00> : vector<1x4xf32>
    %31 = vector.multi_reduction <add>, %30, %cst_15 [2] : vector<1x4x4xf32> to vector<1x4xf32>
    %32 = vector.shape_cast %31 : vector<1x4xf32> to vector<1x4x1xf32>
    %33 = tpu.reciprocal %32 {approx = true} : vector<1x4x1xf32> -> vector<1x4x1xf32>
    %34 = vector.broadcast %33 : vector<1x4x1xf32> to vector<1x4x4xf32>
    %35 = arith.mulf %30, %34 : vector<1x4x4xf32>
    %36 = arith.truncf %35 : vector<1x4x4xf32> to vector<1x4x4xbf16>
    %37 = vector.extract_strided_slice %2 {offsets = [0, 0, 32], sizes = [1, 4, 32], strides = [1, 1, 1]} : vector<1x4x64xbf16> to vector<1x4x32xbf16>
    "tpu.trace_start"() <{level = 10 : i32, message = "bij,bjd->bid"}> : () -> ()
    %cst_16 = arith.constant dense<0.000000e+00> : vector<1x4x32xf32>
    %38 = tpu.matmul %36, %37, %cst_16 {dimension_numbers = #tpu.dot_dimension_numbers<[2], [1], [1], [2], [0, 0, 0, 1, 1, 2], [0], [0]>} : vector<1x4x4xbf16>, vector<1x4x32xbf16>, vector<1x4x32xf32> -> vector<1x4x32xf32>
    "tpu.trace_stop"() : () -> ()
    %39 = tpu.concatenate %20, %38 in 2 : vector<1x4x32xf32>, vector<1x4x32xf32> -> vector<1x4x64xf32>
    %40 = arith.truncf %39 : vector<1x4x64xf32> to vector<1x4x64xbf16>
    %c0_17 = arith.constant 0 : index
    %c0_18 = arith.constant 0 : index
    %c0_19 = arith.constant 0 : index
    %41 = vector.load %arg4[%c0_17, %c0_18, %c0_19] : memref<1x4x64xbf16, #tpu.memory_space<vmem>>, vector<1x4x64xbf16>
    tpu.vector_store %arg4[%c0_17, %c0_18, %c0_19], %40 {strides = array<i32>} : memref<1x4x64xbf16, #tpu.memory_space<vmem>>, vector<1x4x64xbf16>,
    return
  }
  func.func @transform_0(%arg0: i32) -> (i32, i32, i32) {
    %c0_i32 = arith.constant 0 : i32
    %c0_i32_0 = arith.constant 0 : i32
    %c0_i32_1 = arith.constant 0 : i32
    return %arg0, %c0_i32, %c0_i32_0 : i32, i32, i32
  }
  func.func @transform_1(%arg0: i32) -> (i32, i32, i32) {
    %c0_i32 = arith.constant 0 : i32
    %c0_i32_0 = arith.constant 0 : i32
    %c0_i32_1 = arith.constant 0 : i32
    return %arg0, %c0_i32, %c0_i32_0 : i32, i32, i32
  }
  func.func @transform_2(%arg0: i32) -> (i32, i32, i32) {
    %c0_i32 = arith.constant 0 : i32
    %c0_i32_0 = arith.constant 0 : i32
    %c0_i32_1 = arith.constant 0 : i32
    return %arg0, %c0_i32, %c0_i32_0 : i32, i32, i32
  }
  func.func @transform_3(%arg0: i32) -> (i32, i32, i32) {
    %c0_i32 = arith.constant 0 : i32
    %c0_i32_0 = arith.constant 0 : i32
    %c0_i32_1 = arith.constant 0 : i32
    return %arg0, %c0_i32, %c0_i32_0 : i32, i32, i32
  }
}

module attributes {stable_mosaic.version = 11 : i64} {
  func.func @_ln_ff_kernel(%arg0: i32, %arg1: i32, %arg2: memref<16x64xf32, #tpu.memory_space<vmem>>, %arg3: memref<1x64xf32, #tpu.memory_space<vmem>>, %arg4: memref<1x64xf32, #tpu.memory_space<vmem>>, %arg5: memref<64x256xbf16, #tpu.memory_space<vmem>>, %arg6: memref<1x256xf32, #tpu.memory_space<vmem>>, %arg7: memref<64x256xbf16, #tpu.memory_space<vmem>>, %arg8: memref<1x256xf32, #tpu.memory_space<vmem>>, %arg9: memref<256x64xbf16, #tpu.memory_space<vmem>>, %arg10: memref<1x64xf32, #tpu.memory_space<vmem>>, %arg11: memref<16x64xf32, #tpu.memory_space<vmem>>, %arg12: memref<16x64xbf16, #tpu.memory_space<vmem>>, %arg13: memref<16x64xf32, #tpu.memory_space<vmem>>) attributes {dimension_semantics = [#tpu.dimension_semantics<parallel>, #tpu.dimension_semantics<arbitrary>], iteration_bounds = array<i64: 1, 1>, scalar_prefetch = 0 : i64, scratch_operands = 2 : i64, tpu.core_type = #tpu.core_type<tc>, window_params = [{transform_indices = @transform_0, window_bounds = array<i64: 16, 64>}, {pipeline_mode = #tpu.pipeline_mode<synchronous>, transform_indices = @transform_1, window_bounds = array<i64: 1, 64>}, {pipeline_mode = #tpu.pipeline_mode<synchronous>, transform_indices = @transform_2, window_bounds = array<i64: 1, 64>}, {transform_indices = @transform_3, window_bounds = array<i64: 64, 256>}, {transform_indices = @transform_4, window_bounds = array<i64: 1, 256>}, {transform_indices = @transform_5, window_bounds = array<i64: 64, 256>}, {transform_indices = @transform_6, window_bounds = array<i64: 1, 256>}, {transform_indices = @transform_7, window_bounds = array<i64: 256, 64>}, {pipeline_mode = #tpu.pipeline_mode<synchronous>, transform_indices = @transform_8, window_bounds = array<i64: 1, 64>}, {transform_indices = @transform_9, window_bounds = array<i64: 16, 64>}]} {
    %c0_i32 = arith.constant 0 : i32
    %0 = arith.cmpi eq, %arg1, %c0_i32 : i32
    %1 = arith.extui %0 : i1 to i32
    %c0_i32_0 = arith.constant 0 : i32
    %2 = arith.cmpi ne, %1, %c0_i32_0 : i32
    scf.if %2 {
      %c0_24 = arith.constant 0 : index
      %c0_25 = arith.constant 0 : index
      %37 = vector.load %arg2[%c0_24, %c0_25] : memref<16x64xf32, #tpu.memory_space<vmem>>, vector<16x64xf32>
      %c0_26 = arith.constant 0 : index
      %c0_27 = arith.constant 0 : index
      %38 = vector.load %arg3[%c0_26, %c0_27] : memref<1x64xf32, #tpu.memory_space<vmem>>, vector<1x64xf32>
      %c0_28 = arith.constant 0 : index
      %c0_29 = arith.constant 0 : index
      %39 = vector.load %arg4[%c0_28, %c0_29] : memref<1x64xf32, #tpu.memory_space<vmem>>, vector<1x64xf32>
      %cst_30 = arith.constant dense<0.000000e+00> : vector<16xf32>
      %40 = vector.multi_reduction <add>, %37, %cst_30 [1] : vector<16x64xf32> to vector<16xf32>
      %41 = vector.shape_cast %40 : vector<16xf32> to vector<16x1xf32>
      %cst_31 = arith.constant 6.400000e+01 : f32
      %42 = vector.broadcast %cst_31 : f32 to vector<16x1xf32>
      %43 = arith.divf %41, %42 : vector<16x1xf32>
      %44 = vector.broadcast %43 : vector<16x1xf32> to vector<16x64xf32>
      %45 = arith.subf %37, %44 : vector<16x64xf32>
      %46 = arith.mulf %45, %45 : vector<16x64xf32>
      %cst_32 = arith.constant dense<0.000000e+00> : vector<16xf32>
      %47 = vector.multi_reduction <add>, %46, %cst_32 [1] : vector<16x64xf32> to vector<16xf32>
      %48 = vector.shape_cast %47 : vector<16xf32> to vector<16x1xf32>
      %cst_33 = arith.constant 6.400000e+01 : f32
      %49 = vector.broadcast %cst_33 : f32 to vector<16x1xf32>
      %50 = arith.divf %48, %49 : vector<16x1xf32>
      %51 = vector.broadcast %43 : vector<16x1xf32> to vector<16x64xf32>
      %52 = arith.subf %37, %51 : vector<16x64xf32>
      %cst_34 = arith.constant 9.99999974E-6 : f32
      %53 = vector.broadcast %cst_34 : f32 to vector<16x1xf32>
      %54 = arith.addf %50, %53 : vector<16x1xf32>
      %55 = math.rsqrt %54 : vector<16x1xf32>
      %56 = vector.broadcast %55 : vector<16x1xf32> to vector<16x64xf32>
      %57 = arith.mulf %52, %56 : vector<16x64xf32>
      %58 = vector.broadcast %38 : vector<1x64xf32> to vector<16x64xf32>
      %59 = arith.mulf %57, %58 : vector<16x64xf32>
      %60 = vector.broadcast %39 : vector<1x64xf32> to vector<16x64xf32>
      %61 = arith.addf %59, %60 : vector<16x64xf32>
      %62 = arith.truncf %61 : vector<16x64xf32> to vector<16x64xbf16>
      %c0_35 = arith.constant 0 : index
      %c0_36 = arith.constant 0 : index
      %63 = vector.load %arg12[%c0_35, %c0_36] : memref<16x64xbf16, #tpu.memory_space<vmem>>, vector<16x64xbf16>
      tpu.vector_store %arg12[%c0_35, %c0_36], %62 {strides = array<i32>} : memref<16x64xbf16, #tpu.memory_space<vmem>>, vector<16x64xbf16>,
      %cst_37 = arith.constant 0.000000e+00 : f32
      %64 = vector.broadcast %cst_37 : f32 to vector<16x64xf32>
      %c0_38 = arith.constant 0 : index
      %c0_39 = arith.constant 0 : index
      %65 = vector.load %arg13[%c0_38, %c0_39] : memref<16x64xf32, #tpu.memory_space<vmem>>, vector<16x64xf32>
      tpu.vector_store %arg13[%c0_38, %c0_39], %64 {strides = array<i32>} : memref<16x64xf32, #tpu.memory_space<vmem>>, vector<16x64xf32>,
    } else {
    }
    %c0 = arith.constant 0 : index
    %c0_1 = arith.constant 0 : index
    %3 = vector.load %arg12[%c0, %c0_1] : memref<16x64xbf16, #tpu.memory_space<vmem>>, vector<16x64xbf16>
    %c0_2 = arith.constant 0 : index
    %c0_3 = arith.constant 0 : index
    %4 = vector.load %arg5[%c0_2, %c0_3] : memref<64x256xbf16, #tpu.memory_space<vmem>>, vector<64x256xbf16>
    %cst = arith.constant dense<0.000000e+00> : vector<16x256xf32>
    %5 = tpu.matmul %3, %4, %cst {dimension_numbers = #tpu.dot_dimension_numbers<[1], [0], [0], [1], [0, 0, 1, 1], [], []>} : vector<16x64xbf16>, vector<64x256xbf16>, vector<16x256xf32> -> vector<16x256xf32>
    %c0_4 = arith.constant 0 : index
    %c0_5 = arith.constant 0 : index
    %6 = vector.load %arg6[%c0_4, %c0_5] : memref<1x256xf32, #tpu.memory_space<vmem>>, vector<1x256xf32>
    %7 = vector.broadcast %6 : vector<1x256xf32> to vector<16x256xf32>
    %8 = arith.addf %5, %7 : vector<16x256xf32>
    %c0_6 = arith.constant 0 : index
    %c0_7 = arith.constant 0 : index
    %9 = vector.load %arg7[%c0_6, %c0_7] : memref<64x256xbf16, #tpu.memory_space<vmem>>, vector<64x256xbf16>
    %cst_8 = arith.constant dense<0.000000e+00> : vector<16x256xf32>
    %10 = tpu.matmul %3, %9, %cst_8 {dimension_numbers = #tpu.dot_dimension_numbers<[1], [0], [0], [1], [0, 0, 1, 1], [], []>} : vector<16x64xbf16>, vector<64x256xbf16>, vector<16x256xf32> -> vector<16x256xf32>
    %c0_9 = arith.constant 0 : index
    %c0_10 = arith.constant 0 : index
    %11 = vector.load %arg8[%c0_9, %c0_10] : memref<1x256xf32, #tpu.memory_space<vmem>>, vector<1x256xf32>
    %12 = vector.broadcast %11 : vector<1x256xf32> to vector<16x256xf32>
    %13 = arith.addf %10, %12 : vector<16x256xf32>
    %cst_11 = arith.constant 5.000000e-01 : f32
    %14 = vector.broadcast %cst_11 : f32 to vector<16x256xf32>
    %15 = arith.mulf %14, %13 : vector<16x256xf32>
    %cst_12 = arith.constant 4.471500e-02 : f32
    %16 = vector.broadcast %cst_12 : f32 to vector<16x256xf32>
    %17 = arith.mulf %16, %13 : vector<16x256xf32>
    %18 = arith.mulf %17, %13 : vector<16x256xf32>
    %19 = arith.mulf %18, %13 : vector<16x256xf32>
    %20 = arith.addf %13, %19 : vector<16x256xf32>
    %cst_13 = arith.constant 0.797884583 : f32
    %21 = vector.broadcast %cst_13 : f32 to vector<16x256xf32>
    %22 = arith.mulf %21, %20 : vector<16x256xf32>
    %23 = math.tanh %22 : vector<16x256xf32>
    %cst_14 = arith.constant 1.000000e+00 : f32
    %24 = vector.broadcast %cst_14 : f32 to vector<16x256xf32>
    %25 = arith.addf %24, %23 : vector<16x256xf32>
    %26 = arith.mulf %15, %25 : vector<16x256xf32>
    %27 = arith.mulf %8, %26 : vector<16x256xf32>
    %28 = arith.truncf %27 : vector<16x256xf32> to vector<16x256xbf16>
    %c0_15 = arith.constant 0 : index
    %c0_16 = arith.constant 0 : index
    %29 = vector.load %arg13[%c0_15, %c0_16] : memref<16x64xf32, #tpu.memory_space<vmem>>, vector<16x64xf32>
    %c0_17 = arith.constant 0 : index
    %c0_18 = arith.constant 0 : index
    %30 = vector.load %arg9[%c0_17, %c0_18] : memref<256x64xbf16, #tpu.memory_space<vmem>>, vector<256x64xbf16>
    %cst_19 = arith.constant dense<0.000000e+00> : vector<16x64xf32>
    %31 = tpu.matmul %28, %30, %cst_19 {dimension_numbers = #tpu.dot_dimension_numbers<[1], [0], [0], [1], [0, 0, 1, 1], [], []>} : vector<16x256xbf16>, vector<256x64xbf16>, vector<16x64xf32> -> vector<16x64xf32>
    %32 = arith.addf %29, %31 : vector<16x64xf32>
    %c0_20 = arith.constant 0 : index
    %c0_21 = arith.constant 0 : index
    %33 = vector.load %arg13[%c0_20, %c0_21] : memref<16x64xf32, #tpu.memory_space<vmem>>, vector<16x64xf32>
    tpu.vector_store %arg13[%c0_20, %c0_21], %32 {strides = array<i32>} : memref<16x64xf32, #tpu.memory_space<vmem>>, vector<16x64xf32>,
    %c0_i32_22 = arith.constant 0 : i32
    %34 = arith.cmpi eq, %arg1, %c0_i32_22 : i32
    %35 = arith.extui %34 : i1 to i32
    %c0_i32_23 = arith.constant 0 : i32
    %36 = arith.cmpi ne, %35, %c0_i32_23 : i32
    scf.if %36 {
      %c0_24 = arith.constant 0 : index
      %c0_25 = arith.constant 0 : index
      %37 = vector.load %arg13[%c0_24, %c0_25] : memref<16x64xf32, #tpu.memory_space<vmem>>, vector<16x64xf32>
      %c0_26 = arith.constant 0 : index
      %c0_27 = arith.constant 0 : index
      %38 = vector.load %arg10[%c0_26, %c0_27] : memref<1x64xf32, #tpu.memory_space<vmem>>, vector<1x64xf32>
      %39 = vector.broadcast %38 : vector<1x64xf32> to vector<16x64xf32>
      %40 = arith.addf %37, %39 : vector<16x64xf32>
      %c0_28 = arith.constant 0 : index
      %c0_29 = arith.constant 0 : index
      %41 = vector.load %arg2[%c0_28, %c0_29] : memref<16x64xf32, #tpu.memory_space<vmem>>, vector<16x64xf32>
      %42 = arith.addf %40, %41 : vector<16x64xf32>
      %c0_30 = arith.constant 0 : index
      %c0_31 = arith.constant 0 : index
      %43 = vector.load %arg11[%c0_30, %c0_31] : memref<16x64xf32, #tpu.memory_space<vmem>>, vector<16x64xf32>
      tpu.vector_store %arg11[%c0_30, %c0_31], %42 {strides = array<i32>} : memref<16x64xf32, #tpu.memory_space<vmem>>, vector<16x64xf32>,
    } else {
    }
    return
  }
  func.func @transform_0(%arg0: i32, %arg1: i32) -> (i32, i32) {
    %c0_i32 = arith.constant 0 : i32
    %c0_i32_0 = arith.constant 0 : i32
    return %arg0, %c0_i32 : i32, i32
  }
  func.func @transform_1(%arg0: i32, %arg1: i32) -> (i32, i32) {
    %c0_i32 = arith.constant 0 : i32
    %c0_i32_0 = arith.constant 0 : i32
    %c0_i32_1 = arith.constant 0 : i32
    return %c0_i32, %c0_i32_0 : i32, i32
  }
  func.func @transform_2(%arg0: i32, %arg1: i32) -> (i32, i32) {
    %c0_i32 = arith.constant 0 : i32
    %c0_i32_0 = arith.constant 0 : i32
    %c0_i32_1 = arith.constant 0 : i32
    return %c0_i32, %c0_i32_0 : i32, i32
  }
  func.func @transform_3(%arg0: i32, %arg1: i32) -> (i32, i32) {
    %c0_i32 = arith.constant 0 : i32
    %c0_i32_0 = arith.constant 0 : i32
    return %c0_i32, %arg1 : i32, i32
  }
  func.func @transform_4(%arg0: i32, %arg1: i32) -> (i32, i32) {
    %c0_i32 = arith.constant 0 : i32
    %c0_i32_0 = arith.constant 0 : i32
    return %c0_i32, %arg1 : i32, i32
  }
  func.func @transform_5(%arg0: i32, %arg1: i32) -> (i32, i32) {
    %c0_i32 = arith.constant 0 : i32
    %c0_i32_0 = arith.constant 0 : i32
    return %c0_i32, %arg1 : i32, i32
  }
  func.func @transform_6(%arg0: i32, %arg1: i32) -> (i32, i32) {
    %c0_i32 = arith.constant 0 : i32
    %c0_i32_0 = arith.constant 0 : i32
    return %c0_i32, %arg1 : i32, i32
  }
  func.func @transform_7(%arg0: i32, %arg1: i32) -> (i32, i32) {
    %c0_i32 = arith.constant 0 : i32
    %c0_i32_0 = arith.constant 0 : i32
    return %arg1, %c0_i32 : i32, i32
  }
  func.func @transform_8(%arg0: i32, %arg1: i32) -> (i32, i32) {
    %c0_i32 = arith.constant 0 : i32
    %c0_i32_0 = arith.constant 0 : i32
    %c0_i32_1 = arith.constant 0 : i32
    return %c0_i32, %c0_i32_0 : i32, i32
  }
  func.func @transform_9(%arg0: i32, %arg1: i32) -> (i32, i32) {
    %c0_i32 = arith.constant 0 : i32
    %c0_i32_0 = arith.constant 0 : i32
    return %arg0, %c0_i32 : i32, i32
  }
}

</mosaic_0001>

<llo_original>
// kernel: _lambda_.16
$region0: #{_lambda_.16}
  #allocation0 [shape = 'u32[]', space=smem, size = 0x4, offset = 0x4, fixed_abs, tag = 'smem constant byte address 0x4 - core index']
  #allocation1 [shape = 'u32[144,128]{1,0:T(1,128)}', space=vmem, size = 0x12000, scoped, tag = 'internal scratch']
  %s0 = inlined_call_operand.vmem [shape: f32[16,64], index: 0, kind: input, shape index: {}]
  %s1 = inlined_call_operand.vmem [shape: f32[1,64], index: 1, kind: input, shape index: {}]
  %s2 = inlined_call_operand.vmem [shape: f32[1,64], index: 2, kind: input, shape index: {}]
  %s3 = inlined_call_operand.vmem [shape: bf16[64,192], index: 3, kind: input, shape index: {}]
  %s4 = inlined_call_operand.vmem [shape: bf16[16,192], index: 4, kind: output, shape index: {}]
  %s5 = sld [smem:[#allocation0]]
  $region26: #{_lambda_.16} parent=0
    _
  %s7 = ssub.s32 1, %s5
  %s8 = scalar_select 0, %s7, %s5
  // Predicated region
  $region2: #{_lambda_.16} parent=0 // pred_check
    _
  $region3: #{_lambda_.16} parent=0 // pred_check_branch
    %10 = sbr.rel (0) target = $region5
  $region4: #{_lambda_.16} parent=0 // pred_region
    _
  $region5: #{_lambda_.16} parent=0 // pred_fallthru
    _
  // Predicated region
  $region6: #{_lambda_.16} parent=0 // pred_check
    _
  $region7: #{_lambda_.16} parent=0 // pred_check_branch
    %12 = sbr.rel (0) target = $region9
  $region8: #{_lambda_.16} parent=0 // pred_region
    _
  $region9: #{_lambda_.16} parent=0 // pred_fallthru
    _
  // Predicated region
  $region10: #{_lambda_.16} parent=0 // pred_check
    _
  $region11: #{_lambda_.16} parent=0 // pred_check_branch
    %14 = sbr.rel (0) target = $region13
  $region12: #{_lambda_.16} parent=0 // pred_region
    _
  $region13: #{_lambda_.16} parent=0 // pred_fallthru
    _
  // Predicated region
  $region14: #{_lambda_.16} parent=0 // pred_check
    _
  $region15: #{_lambda_.16} parent=0 // pred_check_branch
    %16 = sbr.rel (0) target = $region17
  $region16: #{_lambda_.16} parent=0 // pred_region
    _
  $region17: #{_lambda_.16} parent=0 // pred_fallthru
    _
  %v18 = vld [vmem:[%s0] sm:$0xff]
  %v19 = vld [vmem:[%s0 + $0x8] sm:$0xff]
  %v20 = vld [vmem:[%s1] sm:$0x1]
  %v21 = vld [vmem:[%s2] sm:$0x1]
  %vm22 = vcmask 523264
  %v23 = vsel %vm22, %v18, 0.0
  %24 = vadd.xlane.f32.xlu0 %v23
  %v25 = vpop.xlane.xlu0 %24
  %v26 = vsel %vm22, %v19, 0.0
  %27 = vadd.xlane.f32.xlu0 %v26
  %v28 = vpop.xlane.xlu0 %27
  %v29 = vrcp.pop 64.0
  %v30 = vmul.f32 %v25, %v29
  %v31 = vmul.f32 %v28, %v29
  %v32 = vsub.f32 %v18, %v30
  %v33 = vsub.f32 %v19, %v31
  %v34 = vmul.f32 %v32, %v32
  %v35 = vmul.f32 %v33, %v33
  %v36 = vsel %vm22, %v34, 0.0
  %37 = vadd.xlane.f32.xlu0 %v36
  %v38 = vpop.xlane.xlu0 %37
  %v39 = vsel %vm22, %v35, 0.0
  %40 = vadd.xlane.f32.xlu0 %v39
  %v41 = vpop.xlane.xlu0 %40
  %v42 = vmul.f32 %v38, %v29
  %v43 = vmul.f32 %v41, %v29
  %v44 = vadd.f32 %v42, 1e-05
  %v45 = vadd.f32 %v43, 1e-05
  %v46 = vrsqrt.pop %v44
  %v47 = vrsqrt.pop %v45
  %v48 = vmul.f32 %v32, %v46
  %v49 = vmul.f32 %v33, %v47
  %v51 = vlaneseq
  %v52 = vshrl.u32 %v51, 7
  %v53 = vsub.s32 0, %v52
  %v54 = vrot.slane %v20, %v53
  %v56 = vmul.f32 %v48, %v54
  %v57 = vmul.f32 %v49, %v54
  %v59 = vlaneseq
  %v60 = vshrl.u32 %v59, 7
  %v61 = vsub.s32 0, %v60
  %v62 = vrot.slane %v21, %v61
  %v64 = vadd.f32 %v56, %v62
  %v65 = vadd.f32 %v57, %v62
  %v66 = vpack.c.bf16 %v65, %v64
  %v67 = vld [vmem:[%s3] sm:$0xff]
  %v68 = vld [vmem:[%s3 + $0x8] sm:$0xff]
  %v69 = vld [vmem:[%s3 + $0x10] sm:$0xff]
  %v70 = vld [vmem:[%s3 + $0x18] sm:$0xff]
  %v71 = vld [vmem:[%s3 + $0x20] sm:$0xff]
  %v72 = vld [vmem:[%s3 + $0x28] sm:$0xff]
  %v73 = vld [vmem:[%s3 + $0x30] sm:$0xff]
  %v74 = vld [vmem:[%s3 + $0x38] sm:$0xff]
  %v83 = vunpack.c.l.b16 %v67
  %v84 = vunpack.c.h.b16 %v67
  %v85 = vunpack.c.l.b16 %v68
  %v86 = vunpack.c.h.b16 %v68
  %v87 = vunpack.c.l.b16 %v69
  %v88 = vunpack.c.h.b16 %v69
  %v89 = vunpack.c.l.b16 %v70
  %v90 = vunpack.c.h.b16 %v70
  %v91 = vunpack.c.l.b16 %v71
  %v92 = vunpack.c.h.b16 %v71
  %v93 = vunpack.c.l.b16 %v72
  %v94 = vunpack.c.h.b16 %v72
  %v95 = vunpack.c.l.b16 %v73
  %v96 = vunpack.c.h.b16 %v73
  %v97 = vunpack.c.l.b16 %v74
  %v98 = vunpack.c.h.b16 %v74
  %v99 = vpack.c.b16 %v85, %v83
  %v100 = vpack.c.b16 %v86, %v84
  %v101 = vpack.c.b16 %v89, %v87
  %v102 = vpack.c.b16 %v90, %v88
  %v103 = vpack.c.b16 %v93, %v91
  %v104 = vpack.c.b16 %v94, %v92
  %v105 = vpack.c.b16 %v97, %v95
  %v106 = vpack.c.b16 %v98, %v96
  %v116 = vsel %vm22, %v66, 0
  %118 = vmatprep.subr.bf16.mxu0 0
  %119 = vmatpush1.bf16.msra.mxu0 0
  %120 = vmatprep.subr.bf16.mxu0 0
  %121 = vmatpush1.bf16.msra.mxu0 0
  %122 = vmatprep.subr.bf16.mxu0 0
  %123 = vmatpush1.bf16.msra.mxu0 0
  %124 = vmatprep.subr.bf16.mxu0 0
  %125 = vmatpush1.bf16.msra.mxu0 0
  %126 = vmatprep.subr.bf16.mxu0 %v106
  %127 = vmatpush1.bf16.msra.mxu0 %v105
  %128 = vmatprep.subr.bf16.mxu0 %v104
  %129 = vmatpush1.bf16.msra.mxu0 %v103
  %130 = vmatprep.subr.bf16.mxu0 %v102
  %131 = vmatpush1.bf16.msra.mxu0 %v101
  %132 = vmatprep.subr.bf16.mxu0 %v100
  %133 = vmatpush1.bf16.msra.mxu0 %v99
  %134 = vmatprep.subr.bf16.mxu0 0
  %135 = vmatpush2.bf16.msra.mxu0 0
  %136 = vmatprep.subr.bf16.mxu0 0
  %137 = vmatpush2.bf16.msra.mxu0 0
  %138 = vmatprep.subr.bf16.mxu0 0
  %139 = vmatpush2.bf16.msra.mxu0 0
  %140 = vmatprep.subr.bf16.mxu0 0
  %141 = vmatpush2.bf16.msra.mxu0 0
  %142 = vmatprep.subr.bf16.mxu0 0
  %143 = vmatpush2.bf16.msra.mxu0 0
  %144 = vmatprep.subr.bf16.mxu0 0
  %145 = vmatpush2.bf16.msra.mxu0 0
  %146 = vmatprep.subr.bf16.mxu0 0
  %147 = vmatpush2.bf16.msra.mxu0 0
  %148 = vmatprep.subr.bf16.mxu0 0
  %149 = vmatpush2.bf16.msra.mxu0 0
  %150 = vmatprep.mubr.bf16.mxu0 0
  %151 = vmatmul.mubr.bf16.gmra.mxu0 %v116
  %v152 = vpop.f32.mrf.mxu0
  %v153 = vadd.f32 0.0, %v152
  %v154 = vpop.f32.mrf.mxu0
  %v155 = vadd.f32 0.0, %v154
  %v156 = vpop.f32.mrf.mxu0
  %v157 = vadd.f32 0.0, %v156
  %v158 = vpop.f32.mrf.mxu0
  %v159 = vadd.f32 0.0, %v158
  %160 = vdwg.mxu0
  %v161 = vpack.c.bf16 %v157, %v153
  %v162 = vpack.c.bf16 %v159, %v155
  %v165 = vunpack.c.l.b16 %v161
  %v166 = vunpack.c.l.b16 %v162
  %v167 = vunpack.c.h.b16 %v161
  %v168 = vunpack.c.h.b16 %v162
  %v169 = vpack.c.b16 %v166, %v165
  %v170 = vpack.c.b16 %v168, %v167
  %vm173 = vcmask 1043456
  %vm174 = vcmask 523268
  %vm175 = vmor %vm174, %vm173
  %176 = vst.msk [vmem:[%s4] sm:$0xff] %vm175, %v169
  %177 = vst.msk [vmem:[%s4 + $0x8] sm:$0xff] %vm175, %v170
  // Predicated region
  $region18: #{_lambda_.16} parent=0 // pred_check
    _
  $region19: #{_lambda_.16} parent=0 // pred_check_branch
    %179 = sbr.rel (0) target = $region21
  $region20: #{_lambda_.16} parent=0 // pred_region
    _
  $region21: #{_lambda_.16} parent=0 // pred_fallthru
    _
  // Predicated region
  $region22: #{_lambda_.16} parent=0 // pred_check
    _
  $region23: #{_lambda_.16} parent=0 // pred_check_branch
    %181 = sbr.rel (0) target = $region25
  $region24: #{_lambda_.16} parent=0 // pred_region
    _
  $region25: #{_lambda_.16} parent=0 // pred_fallthru
    _

// kernel: _lambda_.15
$region0: #{_lambda_.15}
  #allocation0 [shape = 'u32[]', space=smem, size = 0x4, offset = 0x4, fixed_abs, tag = 'smem constant byte address 0x4 - core index']
  #allocation1 [shape = 'u32[144,128]{1,0:T(1,128)}', space=vmem, size = 0x12000, scoped, tag = 'internal scratch']
  %s0 = inlined_call_operand.vmem [shape: f32[16,768], index: 0, kind: input, shape index: {}]
  %s1 = inlined_call_operand.vmem [shape: bf16[768,64], index: 1, kind: input, shape index: {}]
  %s2 = inlined_call_operand.vmem [shape: f32[1,64], index: 2, kind: input, shape index: {}]
  %s3 = inlined_call_operand.vmem [shape: f32[8,64], index: 3, kind: input, shape index: {}]
  %s4 = inlined_call_operand.vmem [shape: f32[16,64], index: 4, kind: output, shape index: {}]
  %s5 = sld [smem:[#allocation0]]
  $region49: #{_lambda_.15} parent=0
    _
  %s7 = ssub.s32 1, %s5
  %s8 = scalar_select 0, %s7, %s5
  loop: start=0, step=1, limit=4
  $region2: #{_lambda_.15} parent=0 // loop_pre_header
    _
  $region3: #{_lambda_.15} parent=0 // loop_header
    %s10 = sphi 0, %s14
    %p11 = scmp.ge.s32.totalorder %s10, 4
    %s20 = sphi 0, %s22
    %s23 = sphi 0, %s20
    %s24 = sphi 0, %s23
    %s40 = sphi 0, %s24
    %s44 = sphi 0, %s44
    %s46 = sphi 0, %s44
    %s47 = sphi 0, %s46
    %s61 = sphi 0, %s47
    %s65 = sphi 0, %s65
    %s67 = sphi 0, %s65
    %s68 = sphi 0, %s67
    %s82 = sphi 0, %s68
    %s86 = sphi 0, %s86
    %s88 = sphi 0, %s86
    %s89 = sphi 0, %s88
    %s103 = sphi 0, %s89
    %s109 = sphi 0, %s111
    %s112 = sphi 0, %s109
    %s113 = sphi 0, %s112
    %s129 = sphi 0, %s113
  $region4: #{_lambda_.15} parent=0 // loop_header_branch
    %13 = sbr.rel (%p11) target = $region8
  $region5: #{_lambda_.15} parent=0 // loop_body
    %s15 = ssub.s32 %s10, 1
    %s16 = ssub.s32 %s10, 2
    %s17 = sadd.s32 %s10, 1
    %s18 = ssub.s32 %s10, %s17
    %p19 = scmp.eq.s32.totalorder %s18, 0
    %s21 = sadd.s32 %s20, 1
    %s22 = scalar_select %p19, %s20, %s21
    %p25 = pneg %p19
    %p26 = scmp.eq.s32.totalorder %s10, 1
    %p27 = por %p25, %p26
    %p28 = scmp.ne.s32.totalorder %s20, %s23
    %p29 = scmp.eq.s32.totalorder %s10, 0
    %p30 = por %p28, %p29
    %p31 = scmp.ne.s32.totalorder %s20, %s23
    %p32 = scmp.eq.s32.totalorder %s15, 1
    %p33 = por %p31, %p32
    %p34 = scmp.ne.s32.totalorder %s23, %s24
    %p35 = scmp.eq.s32.totalorder %s15, 0
    %p36 = por %p34, %p35
    %p37 = scmp.ne.s32.totalorder %s23, %s24
    %p38 = scmp.eq.s32.totalorder %s16, 1
    %p39 = por %p37, %p38
    %p41 = scmp.ne.s32.totalorder %s24, %s40
    %p42 = scmp.eq.s32.totalorder %s16, 0
    %p43 = por %p41, %p42
    %s45 = sadd.s32 %s44, 1
    %p48 = scmp.eq.s32.totalorder %s10, 1
    %p49 = scmp.ne.s32.totalorder %s44, %s46
    %p50 = scmp.eq.s32.totalorder %s10, 0
    %p51 = por %p49, %p50
    %p52 = scmp.ne.s32.totalorder %s44, %s46
    %p53 = scmp.eq.s32.totalorder %s15, 1
    %p54 = por %p52, %p53
    %p55 = scmp.ne.s32.totalorder %s46, %s47
    %p56 = scmp.eq.s32.totalorder %s15, 0
    %p57 = por %p55, %p56
    %p58 = scmp.ne.s32.totalorder %s46, %s47
    %p59 = scmp.eq.s32.totalorder %s16, 1
    %p60 = por %p58, %p59
    %p62 = scmp.ne.s32.totalorder %s47, %s61
    %p63 = scmp.eq.s32.totalorder %s16, 0
    %p64 = por %p62, %p63
    %s66 = sadd.s32 %s65, 1
    %p69 = scmp.eq.s32.totalorder %s10, 1
    %p70 = scmp.ne.s32.totalorder %s65, %s67
    %p71 = scmp.eq.s32.totalorder %s10, 0
    %p72 = por %p70, %p71
    %p73 = scmp.ne.s32.totalorder %s65, %s67
    %p74 = scmp.eq.s32.totalorder %s15, 1
    %p75 = por %p73, %p74
    %p76 = scmp.ne.s32.totalorder %s67, %s68
    %p77 = scmp.eq.s32.totalorder %s15, 0
    %p78 = por %p76, %p77
    %p79 = scmp.ne.s32.totalorder %s67, %s68
    %p80 = scmp.eq.s32.totalorder %s16, 1
    %p81 = por %p79, %p80
    %p83 = scmp.ne.s32.totalorder %s68, %s82
    %p84 = scmp.eq.s32.totalorder %s16, 0
    %p85 = por %p83, %p84
    %s87 = sadd.s32 %s86, 1
    %p90 = scmp.eq.s32.totalorder %s10, 1
    %p91 = scmp.ne.s32.totalorder %s86, %s88
    %p92 = scmp.eq.s32.totalorder %s10, 0
    %p93 = por %p91, %p92
    %p94 = scmp.ne.s32.totalorder %s86, %s88
    %p95 = scmp.eq.s32.totalorder %s15, 1
    %p96 = por %p94, %p95
    %p97 = scmp.ne.s32.totalorder %s88, %s89
    %p98 = scmp.eq.s32.totalorder %s15, 0
    %p99 = por %p97, %p98
    %p100 = scmp.ne.s32.totalorder %s88, %s89
    %p101 = scmp.eq.s32.totalorder %s16, 1
    %p102 = por %p100, %p101
    %p104 = scmp.ne.s32.totalorder %s89, %s103
    %p105 = scmp.eq.s32.totalorder %s16, 0
    %p106 = por %p104, %p105
    %s107 = ssub.s32 %s10, %s17
    %p108 = scmp.eq.s32.totalorder %s107, 0
    %s110 = sadd.s32 %s109, 1
    %s111 = scalar_select %p108, %s109, %s110
    %p114 = pneg %p108
    %p115 = scmp.eq.s32.totalorder %s10, 1
    %p116 = por %p114, %p115
    %p117 = scmp.ne.s32.totalorder %s109, %s112
    %p118 = scmp.eq.s32.totalorder %s10, 0
    %p119 = por %p117, %p118
    %p120 = scmp.ne.s32.totalorder %s109, %s112
    %p121 = scmp.eq.s32.totalorder %s15, 1
    %p122 = por %p120, %p121
    %p123 = scmp.ne.s32.totalorder %s112, %s113
    %p124 = scmp.eq.s32.totalorder %s15, 0
    %p125 = por %p123, %p124
    %p126 = scmp.ne.s32.totalorder %s112, %s113
    %p127 = scmp.eq.s32.totalorder %s16, 1
    %p128 = por %p126, %p127
    %p130 = scmp.ne.s32.totalorder %s113, %s129
    %p131 = scmp.eq.s32.totalorder %s16, 0
    %p132 = por %p130, %p131
    %p133 = scmp.le.s32.totalorder 1, %s10
    %p134 = scmp.lt.s32.totalorder %s10, 3
    %p135 = pnand %p133, %p134
    %p136 = pneg %p135
    // Predicated region
    $region9: #{_lambda_.15} parent=5 // pred_check
      _
    $region10: #{_lambda_.15} parent=5 // pred_check_branch
      %138 = sbr.rel (%p135) target = $region12
    $region11: #{_lambda_.15} parent=5 // pred_region
      %s139 = ssub.s32 %s10, 1
      // Predicated region
      $region13: #{_lambda_.15} parent=11 // pred_check
        %p140 = pneg %p57
      $region14: #{_lambda_.15} parent=11 // pred_check_branch
        %142 = sbr.rel (%p140) target = $region16
      $region15: #{_lambda_.15} parent=11 // pred_region
        _
      $region16: #{_lambda_.15} parent=11 // pred_fallthru
        _
      // Predicated region
      $region17: #{_lambda_.15} parent=11 // pred_check
        %p143 = pneg %p78
      $region18: #{_lambda_.15} parent=11 // pred_check_branch
        %145 = sbr.rel (%p143) target = $region20
      $region19: #{_lambda_.15} parent=11 // pred_region
        _
      $region20: #{_lambda_.15} parent=11 // pred_fallthru
        _
      // Predicated region
      $region21: #{_lambda_.15} parent=11 // pred_check
        %p146 = pneg %p99
      $region22: #{_lambda_.15} parent=11 // pred_check_branch
        %148 = sbr.rel (%p146) target = $region24
      $region23: #{_lambda_.15} parent=11 // pred_region
        _
      $region24: #{_lambda_.15} parent=11 // pred_fallthru
        _
    $region12: #{_lambda_.15} parent=5 // pred_fallthru
      _
    %p149 = scmp.lt.s32.totalorder %s10, 2
    // Predicated region
    $region25: #{_lambda_.15} parent=5 // pred_check
      %p150 = pneg %p149
    $region26: #{_lambda_.15} parent=5 // pred_check_branch
      %152 = sbr.rel (%p150) target = $region28
    $region27: #{_lambda_.15} parent=5 // pred_region
      // Predicated region
      $region29: #{_lambda_.15} parent=27 // pred_check
        %p153 = pneg %p30
      $region30: #{_lambda_.15} parent=27 // pred_check_branch
        %155 = sbr.rel (%p153) target = $region32
      $region31: #{_lambda_.15} parent=27 // pred_region
        %p156 = scmp.lt.s32.totalorder %s10, 1
        %s157 = scalar_select %p156, %s10, 1
        %s158 = smul.addr %s157, 6
        %s159 = smul.addr %s158, 8
        %s160 = scalar_lea.vmem %s0, %s159
      $region32: #{_lambda_.15} parent=27 // pred_fallthru
        _
    $region28: #{_lambda_.15} parent=5 // pred_fallthru
      _
    %p161 = scmp.le.s32.totalorder 1, %s10
    %p162 = scmp.lt.s32.totalorder %s10, 3
    %p163 = pnand %p161, %p162
    %p164 = pneg %p163
    // Predicated region
    $region33: #{_lambda_.15} parent=5 // pred_check
      _
    $region34: #{_lambda_.15} parent=5 // pred_check_branch
      %166 = sbr.rel (%p163) target = $region36
    $region35: #{_lambda_.15} parent=5 // pred_region
      %s167 = ssub.s32 %s10, 1
      %p168 = scmp.lt.s32.totalorder %s15, 1
      %s169 = scalar_select %p168, %s15, 1
      %s170 = smul.addr %s169, 6
      %s171 = smul.addr %s170, 8
      %s172 = scalar_lea.vmem %s0, %s171
      %p173 = pneg %p36
      %p174 = pneg %p33
      %p175 = pneg %p57
      %p176 = pneg %p54
      %p177 = pneg %p78
      %p178 = pneg %p75
      %p179 = pneg %p99
      %p180 = pneg %p96
      %p181 = pneg %p125
      %p182 = pneg %p122
      %p183 = scmp.lt.s32.totalorder %s15, 1
      %s184 = scalar_select %p183, %s15, 1
      %s185 = smul.addr %s184, 8
      %s186 = scalar_lea.vmem %s4, %s185
      %p187 = scmp.lt.s32.totalorder %s15, 1
      %s188 = scalar_select %p187, %s15, 1
      %s189 = smul.addr %s188, 6
      %s190 = smul.addr %s189, 8
      %s191 = scalar_lea.vmem %s0, %s190
      %p192 = scmp.lt.s32.totalorder %s15, 1
      %s193 = scalar_select %p192, %s15, 1
      %s194 = smul.addr %s193, 8
      %s195 = scalar_lea.vmem %s4, %s194
      %v197 = vld [vmem:[%s191] sm:$0xff]
      %v198 = vld [vmem:[%s191 + $0x8] sm:$0xff]
      %v199 = vld [vmem:[%s191 + $0x10] sm:$0xff]
      %v200 = vld [vmem:[%s191 + $0x18] sm:$0xff]
      %v201 = vld [vmem:[%s191 + $0x20] sm:$0xff]
      %v202 = vld [vmem:[%s191 + $0x28] sm:$0xff]
      %v203 = vpack.c.bf16 %v197, %v197
      %v204 = vpack.c.bf16 %v198, %v198
      %v205 = vpack.c.bf16 %v199, %v199
      %v206 = vpack.c.bf16 %v200, %v200
      %v207 = vpack.c.bf16 %v201, %v201
      %v208 = vpack.c.bf16 %v202, %v202
      %v209 = vld [vmem:[%s1] sm:$0xf]
      %v210 = vld [vmem:[%s1 + $0x4] sm:$0xf]
      %v211 = vld [vmem:[%s1 + $0x8] sm:$0xf]
      %v212 = vld [vmem:[%s1 + $0xc] sm:$0xf]
      %v213 = vld [vmem:[%s1 + $0x10] sm:$0xf]
      %v214 = vld [vmem:[%s1 + $0x14] sm:$0xf]
      %v215 = vld [vmem:[%s1 + $0x18] sm:$0xf]
      %v216 = vld [vmem:[%s1 + $0x1c] sm:$0xf]
      %v217 = vld [vmem:[%s1 + $0x20] sm:$0xf]
      %v218 = vld [vmem:[%s1 + $0x24] sm:$0xf]
      %v219 = vld [vmem:[%s1 + $0x28] sm:$0xf]
      %v220 = vld [vmem:[%s1 + $0x2c] sm:$0xf]
      %v221 = vld [vmem:[%s1 + $0x30] sm:$0xf]
      %v222 = vld [vmem:[%s1 + $0x34] sm:$0xf]
      %v223 = vld [vmem:[%s1 + $0x38] sm:$0xf]
      %v224 = vld [vmem:[%s1 + $0x3c] sm:$0xf]
      %v225 = vld [vmem:[%s1 + $0x40] sm:$0xf]
      %v226 = vld [vmem:[%s1 + $0x44] sm:$0xf]
      %v227 = vld [vmem:[%s1 + $0x48] sm:$0xf]
      %v228 = vld [vmem:[%s1 + $0x4c] sm:$0xf]
      %v229 = vld [vmem:[%s1 + $0x50] sm:$0xf]
      %v230 = vld [vmem:[%s1 + $0x54] sm:$0xf]
      %v231 = vld [vmem:[%s1 + $0x58] sm:$0xf]
      %v232 = vld [vmem:[%s1 + $0x5c] sm:$0xf]
      %v233 = vld [vmem:[%s1 + $0x60] sm:$0xf]
      %v234 = vld [vmem:[%s1 + $0x64] sm:$0xf]
      %v235 = vld [vmem:[%s1 + $0x68] sm:$0xf]
      %v236 = vld [vmem:[%s1 + $0x6c] sm:$0xf]
      %v237 = vld [vmem:[%s1 + $0x70] sm:$0xf]
      %v238 = vld [vmem:[%s1 + $0x74] sm:$0xf]
      %v239 = vld [vmem:[%s1 + $0x78] sm:$0xf]
      %v240 = vld [vmem:[%s1 + $0x7c] sm:$0xf]
      %v241 = vld [vmem:[%s1 + $0x80] sm:$0xf]
      %v242 = vld [vmem:[%s1 + $0x84] sm:$0xf]
      %v243 = vld [vmem:[%s1 + $0x88] sm:$0xf]
      %v244 = vld [vmem:[%s1 + $0x8c] sm:$0xf]
      %v245 = vld [vmem:[%s1 + $0x90] sm:$0xf]
      %v246 = vld [vmem:[%s1 + $0x94] sm:$0xf]
      %v247 = vld [vmem:[%s1 + $0x98] sm:$0xf]
      %v248 = vld [vmem:[%s1 + $0x9c] sm:$0xf]
      %v249 = vld [vmem:[%s1 + $0xa0] sm:$0xf]
      %v250 = vld [vmem:[%s1 + $0xa4] sm:$0xf]
      %v251 = vld [vmem:[%s1 + $0xa8] sm:$0xf]
      %v252 = vld [vmem:[%s1 + $0xac] sm:$0xf]
      %v253 = vld [vmem:[%s1 + $0xb0] sm:$0xf]
      %v254 = vld [vmem:[%s1 + $0xb4] sm:$0xf]
      %v255 = vld [vmem:[%s1 + $0xb8] sm:$0xf]
      %v256 = vld [vmem:[%s1 + $0xbc] sm:$0xf]
      %v257 = vld [vmem:[%s1 + $0xc0] sm:$0xf]
      %v258 = vld [vmem:[%s1 + $0xc4] sm:$0xf]
      %v259 = vld [vmem:[%s1 + $0xc8] sm:$0xf]
      %v260 = vld [vmem:[%s1 + $0xcc] sm:$0xf]
      %v261 = vld [vmem:[%s1 + $0xd0] sm:$0xf]
      %v262 = vld [vmem:[%s1 + $0xd4] sm:$0xf]
      %v263 = vld [vmem:[%s1 + $0xd8] sm:$0xf]
      %v264 = vld [vmem:[%s1 + $0xdc] sm:$0xf]
      %v265 = vld [vmem:[%s1 + $0xe0] sm:$0xf]
      %v266 = vld [vmem:[%s1 + $0xe4] sm:$0xf]
      %v267 = vld [vmem:[%s1 + $0xe8] sm:$0xf]
      %v268 = vld [vmem:[%s1 + $0xec] sm:$0xf]
      %v269 = vld [vmem:[%s1 + $0xf0] sm:$0xf]
      %v270 = vld [vmem:[%s1 + $0xf4] sm:$0xf]
      %v271 = vld [vmem:[%s1 + $0xf8] sm:$0xf]
      %v272 = vld [vmem:[%s1 + $0xfc] sm:$0xf]
      %v273 = vld [vmem:[%s1 + $0x100] sm:$0xf]
      %v274 = vld [vmem:[%s1 + $0x104] sm:$0xf]
      %v275 = vld [vmem:[%s1 + $0x108] sm:$0xf]
      %v276 = vld [vmem:[%s1 + $0x10c] sm:$0xf]
      %v277 = vld [vmem:[%s1 + $0x110] sm:$0xf]
      %v278 = vld [vmem:[%s1 + $0x114] sm:$0xf]
      %v279 = vld [vmem:[%s1 + $0x118] sm:$0xf]
      %v280 = vld [vmem:[%s1 + $0x11c] sm:$0xf]
      %v281 = vld [vmem:[%s1 + $0x120] sm:$0xf]
      %v282 = vld [vmem:[%s1 + $0x124] sm:$0xf]
      %v283 = vld [vmem:[%s1 + $0x128] sm:$0xf]
      %v284 = vld [vmem:[%s1 + $0x12c] sm:$0xf]
      %v285 = vld [vmem:[%s1 + $0x130] sm:$0xf]
      %v286 = vld [vmem:[%s1 + $0x134] sm:$0xf]
      %v287 = vld [vmem:[%s1 + $0x138] sm:$0xf]
      %v288 = vld [vmem:[%s1 + $0x13c] sm:$0xf]
      %v289 = vld [vmem:[%s1 + $0x140] sm:$0xf]
      %v290 = vld [vmem:[%s1 + $0x144] sm:$0xf]
      %v291 = vld [vmem:[%s1 + $0x148] sm:$0xf]
      %v292 = vld [vmem:[%s1 + $0x14c] sm:$0xf]
      %v293 = vld [vmem:[%s1 + $0x150] sm:$0xf]
      %v294 = vld [vmem:[%s1 + $0x154] sm:$0xf]
      %v295 = vld [vmem:[%s1 + $0x158] sm:$0xf]
      %v296 = vld [vmem:[%s1 + $0x15c] sm:$0xf]
      %v297 = vld [vmem:[%s1 + $0x160] sm:$0xf]
      %v298 = vld [vmem:[%s1 + $0x164] sm:$0xf]
      %v299 = vld [vmem:[%s1 + $0x168] sm:$0xf]
      %v300 = vld [vmem:[%s1 + $0x16c] sm:$0xf]
      %v301 = vld [vmem:[%s1 + $0x170] sm:$0xf]
      %v302 = vld [vmem:[%s1 + $0x174] sm:$0xf]
      %v303 = vld [vmem:[%s1 + $0x178] sm:$0xf]
      %v304 = vld [vmem:[%s1 + $0x17c] sm:$0xf]
      %v305 = vld [vmem:[%s2] sm:$0x1]
      %v307 = vlaneseq
      %v308 = vshrl.u32 %v307, 7
      %v309 = vsub.s32 0, %v308
      %v310 = vrot.slane %v305, %v309
      %v408 = vunpack.c.l.b16 %v209
      %v409 = vunpack.c.l.b16 %v210
      %v410 = vunpack.c.l.b16 %v211
      %v411 = vunpack.c.l.b16 %v212
      %v412 = vunpack.c.l.b16 %v213
      %v413 = vunpack.c.l.b16 %v214
      %v414 = vunpack.c.l.b16 %v215
      %v415 = vunpack.c.l.b16 %v216
      %v416 = vunpack.c.l.b16 %v217
      %v417 = vunpack.c.l.b16 %v218
      %v418 = vunpack.c.l.b16 %v219
      %v419 = vunpack.c.l.b16 %v220
      %v420 = vunpack.c.l.b16 %v221
      %v421 = vunpack.c.l.b16 %v222
      %v422 = vunpack.c.l.b16 %v223
      %v423 = vunpack.c.l.b16 %v224
      %v424 = vunpack.c.l.b16 %v225
      %v425 = vunpack.c.l.b16 %v226
      %v426 = vunpack.c.l.b16 %v227
      %v427 = vunpack.c.l.b16 %v228
      %v428 = vunpack.c.l.b16 %v229
      %v429 = vunpack.c.l.b16 %v230
      %v430 = vunpack.c.l.b16 %v231
      %v431 = vunpack.c.l.b16 %v232
      %v432 = vunpack.c.l.b16 %v233
      %v433 = vunpack.c.l.b16 %v234
      %v434 = vunpack.c.l.b16 %v235
      %v435 = vunpack.c.l.b16 %v236
      %v436 = vunpack.c.l.b16 %v237
      %v437 = vunpack.c.l.b16 %v238
      %v438 = vunpack.c.l.b16 %v239
      %v439 = vunpack.c.l.b16 %v240
      %v440 = vunpack.c.l.b16 %v241
      %v441 = vunpack.c.l.b16 %v242
      %v442 = vunpack.c.l.b16 %v243
      %v443 = vunpack.c.l.b16 %v244
      %v444 = vunpack.c.l.b16 %v245
      %v445 = vunpack.c.l.b16 %v246
      %v446 = vunpack.c.l.b16 %v247
      %v447 = vunpack.c.l.b16 %v248
      %v448 = vunpack.c.l.b16 %v249
      %v449 = vunpack.c.l.b16 %v250
      %v450 = vunpack.c.l.b16 %v251
      %v451 = vunpack.c.l.b16 %v252
      %v452 = vunpack.c.l.b16 %v253
      %v453 = vunpack.c.l.b16 %v254
      %v454 = vunpack.c.l.b16 %v255
      %v455 = vunpack.c.l.b16 %v256
      %v456 = vunpack.c.l.b16 %v257
      %v457 = vunpack.c.l.b16 %v258
      %v458 = vunpack.c.l.b16 %v259
      %v459 = vunpack.c.l.b16 %v260
      %v460 = vunpack.c.l.b16 %v261
      %v461 = vunpack.c.l.b16 %v262
      %v462 = vunpack.c.l.b16 %v263
      %v463 = vunpack.c.l.b16 %v264
      %v464 = vunpack.c.l.b16 %v265
      %v465 = vunpack.c.l.b16 %v266
      %v466 = vunpack.c.l.b16 %v267
      %v467 = vunpack.c.l.b16 %v268
      %v468 = vunpack.c.l.b16 %v269
      %v469 = vunpack.c.l.b16 %v270
      %v470 = vunpack.c.l.b16 %v271
      %v471 = vunpack.c.l.b16 %v272
      %v472 = vunpack.c.l.b16 %v273
      %v473 = vunpack.c.l.b16 %v274
      %v474 = vunpack.c.l.b16 %v275
      %v475 = vunpack.c.l.b16 %v276
      %v476 = vunpack.c.l.b16 %v277
      %v477 = vunpack.c.l.b16 %v278
      %v478 = vunpack.c.l.b16 %v279
      %v479 = vunpack.c.l.b16 %v280
      %v480 = vunpack.c.l.b16 %v281
      %v481 = vunpack.c.l.b16 %v282
      %v482 = vunpack.c.l.b16 %v283
      %v483 = vunpack.c.l.b16 %v284
      %v484 = vunpack.c.l.b16 %v285
      %v485 = vunpack.c.l.b16 %v286
      %v486 = vunpack.c.l.b16 %v287
      %v487 = vunpack.c.l.b16 %v288
      %v488 = vunpack.c.l.b16 %v289
      %v489 = vunpack.c.l.b16 %v290
      %v490 = vunpack.c.l.b16 %v291
      %v491 = vunpack.c.l.b16 %v292
      %v492 = vunpack.c.l.b16 %v293
      %v493 = vunpack.c.l.b16 %v294
      %v494 = vunpack.c.l.b16 %v295
      %v495 = vunpack.c.l.b16 %v296
      %v496 = vunpack.c.l.b16 %v297
      %v497 = vunpack.c.l.b16 %v298
      %v498 = vunpack.c.l.b16 %v299
      %v499 = vunpack.c.l.b16 %v300
      %v500 = vunpack.c.l.b16 %v301
      %v501 = vunpack.c.l.b16 %v302
      %v502 = vunpack.c.l.b16 %v303
      %v503 = vunpack.c.l.b16 %v304
      %v504 = vpack.c.b16 %v409, %v408
      %v505 = vpack.c.b16 %v411, %v410
      %v506 = vpack.c.b16 %v413, %v412
      %v507 = vpack.c.b16 %v415, %v414
      %v508 = vpack.c.b16 %v417, %v416
      %v509 = vpack.c.b16 %v419, %v418
      %v510 = vpack.c.b16 %v421, %v420
      %v511 = vpack.c.b16 %v423, %v422
      %v512 = vpack.c.b16 %v425, %v424
      %v513 = vpack.c.b16 %v427, %v426
      %v514 = vpack.c.b16 %v429, %v428
      %v515 = vpack.c.b16 %v431, %v430
      %v516 = vpack.c.b16 %v433, %v432
      %v517 = vpack.c.b16 %v435, %v434
      %v518 = vpack.c.b16 %v437, %v436
      %v519 = vpack.c.b16 %v439, %v438
      %v520 = vpack.c.b16 %v441, %v440
      %v521 = vpack.c.b16 %v443, %v442
      %v522 = vpack.c.b16 %v445, %v444
      %v523 = vpack.c.b16 %v447, %v446
      %v524 = vpack.c.b16 %v449, %v448
      %v525 = vpack.c.b16 %v451, %v450
      %v526 = vpack.c.b16 %v453, %v452
      %v527 = vpack.c.b16 %v455, %v454
      %v528 = vpack.c.b16 %v457, %v456
      %v529 = vpack.c.b16 %v459, %v458
      %v530 = vpack.c.b16 %v461, %v460
      %v531 = vpack.c.b16 %v463, %v462
      %v532 = vpack.c.b16 %v465, %v464
      %v533 = vpack.c.b16 %v467, %v466
      %v534 = vpack.c.b16 %v469, %v468
      %v535 = vpack.c.b16 %v471, %v470
      %v536 = vpack.c.b16 %v473, %v472
      %v537 = vpack.c.b16 %v475, %v474
      %v538 = vpack.c.b16 %v477, %v476
      %v539 = vpack.c.b16 %v479, %v478
      %v540 = vpack.c.b16 %v481, %v480
      %v541 = vpack.c.b16 %v483, %v482
      %v542 = vpack.c.b16 %v485, %v484
      %v543 = vpack.c.b16 %v487, %v486
      %v544 = vpack.c.b16 %v489, %v488
      %v545 = vpack.c.b16 %v491, %v490
      %v546 = vpack.c.b16 %v493, %v492
      %v547 = vpack.c.b16 %v495, %v494
      %v548 = vpack.c.b16 %v497, %v496
      %v549 = vpack.c.b16 %v499, %v498
      %v550 = vpack.c.b16 %v501, %v500
      %v551 = vpack.c.b16 %v503, %v502
      %600 = vmatprep.subr.bf16.mxu0 0
      %601 = vmatpush1.bf16.msra.mxu0 %v511
      %602 = vmatprep.subr.bf16.mxu0 0
      %603 = vmatpush1.bf16.msra.mxu0 %v510
      %604 = vmatprep.subr.bf16.mxu0 0
      %605 = vmatpush1.bf16.msra.mxu0 %v509
      %606 = vmatprep.subr.bf16.mxu0 0
      %607 = vmatpush1.bf16.msra.mxu0 %v508
      %608 = vmatprep.subr.bf16.mxu0 0
      %609 = vmatpush1.bf16.msra.mxu0 %v507
      %610 = vmatprep.subr.bf16.mxu0 0
      %611 = vmatpush1.bf16.msra.mxu0 %v506
      %612 = vmatprep.subr.bf16.mxu0 0
      %613 = vmatpush1.bf16.msra.mxu0 %v505
      %614 = vmatprep.subr.bf16.mxu0 0
      %615 = vmatpush1.bf16.msra.mxu0 %v504
      %616 = vmatprep.subr.bf16.mxu0 0
      %617 = vmatpush2.bf16.msra.mxu0 %v519
      %618 = vmatprep.subr.bf16.mxu0 0
      %619 = vmatpush2.bf16.msra.mxu0 %v518
      %620 = vmatprep.subr.bf16.mxu0 0
      %621 = vmatpush2.bf16.msra.mxu0 %v517
      %622 = vmatprep.subr.bf16.mxu0 0
      %623 = vmatpush2.bf16.msra.mxu0 %v516
      %624 = vmatprep.subr.bf16.mxu0 0
      %625 = vmatpush2.bf16.msra.mxu0 %v515
      %626 = vmatprep.subr.bf16.mxu0 0
      %627 = vmatpush2.bf16.msra.mxu0 %v514
      %628 = vmatprep.subr.bf16.mxu0 0
      %629 = vmatpush2.bf16.msra.mxu0 %v513
      %630 = vmatprep.subr.bf16.mxu0 0
      %631 = vmatpush2.bf16.msra.mxu0 %v512
      %632 = vmatprep.mubr.bf16.mxu0 %v204
      %633 = vmatmul.mubr.bf16.gmra.mxu0 %v203
      %v634 = vpop.f32.mrf.mxu0
      %v635 = vadd.f32 %v310, %v634
      %v636 = vpop.f32.mrf.mxu0
      %v637 = vpop.f32.mrf.mxu0
      %v638 = vpop.f32.mrf.mxu0
      %639 = vdwg.mxu0
      %640 = vmatprep.subr.bf16.mxu0 0
      %641 = vmatpush1.bf16.msra.mxu0 %v527
      %642 = vmatprep.subr.bf16.mxu0 0
      %643 = vmatpush1.bf16.msra.mxu0 %v526
      %644 = vmatprep.subr.bf16.mxu0 0
      %645 = vmatpush1.bf16.msra.mxu0 %v525
      %646 = vmatprep.subr.bf16.mxu0 0
      %647 = vmatpush1.bf16.msra.mxu0 %v524
      %648 = vmatprep.subr.bf16.mxu0 0
      %649 = vmatpush1.bf16.msra.mxu0 %v523
      %650 = vmatprep.subr.bf16.mxu0 0
      %651 = vmatpush1.bf16.msra.mxu0 %v522
      %652 = vmatprep.subr.bf16.mxu0 0
      %653 = vmatpush1.bf16.msra.mxu0 %v521
      %654 = vmatprep.subr.bf16.mxu0 0
      %655 = vmatpush1.bf16.msra.mxu0 %v520
      %656 = vmatprep.subr.bf16.mxu0 0
      %657 = vmatpush2.bf16.msra.mxu0 %v535
      %658 = vmatprep.subr.bf16.mxu0 0
      %659 = vmatpush2.bf16.msra.mxu0 %v534
      %660 = vmatprep.subr.bf16.mxu0 0
      %661 = vmatpush2.bf16.msra.mxu0 %v533
      %662 = vmatprep.subr.bf16.mxu0 0
      %663 = vmatpush2.bf16.msra.mxu0 %v532
      %664 = vmatprep.subr.bf16.mxu0 0
      %665 = vmatpush2.bf16.msra.mxu0 %v531
      %666 = vmatprep.subr.bf16.mxu0 0
      %667 = vmatpush2.bf16.msra.mxu0 %v530
      %668 = vmatprep.subr.bf16.mxu0 0
      %669 = vmatpush2.bf16.msra.mxu0 %v529
      %670 = vmatprep.subr.bf16.mxu0 0
      %671 = vmatpush2.bf16.msra.mxu0 %v528
      %672 = vmatprep.mubr.bf16.mxu0 %v206
      %673 = vmatmul.mubr.bf16.gmra.mxu0 %v205
      %v674 = vpop.f32.mrf.mxu0
      %v675 = vadd.f32 %v635, %v674
      %v676 = vpop.f32.mrf.mxu0
      %v677 = vpop.f32.mrf.mxu0
      %v678 = vpop.f32.mrf.mxu0
      %679 = vdwg.mxu0
      %680 = vmatprep.subr.bf16.mxu0 0
      %681 = vmatpush1.bf16.msra.mxu0 %v543
      %682 = vmatprep.subr.bf16.mxu0 0
      %683 = vmatpush1.bf16.msra.mxu0 %v542
      %684 = vmatprep.subr.bf16.mxu0 0
      %685 = vmatpush1.bf16.msra.mxu0 %v541
      %686 = vmatprep.subr.bf16.mxu0 0
      %687 = vmatpush1.bf16.msra.mxu0 %v540
      %688 = vmatprep.subr.bf16.mxu0 0
      %689 = vmatpush1.bf16.msra.mxu0 %v539
      %690 = vmatprep.subr.bf16.mxu0 0
      %691 = vmatpush1.bf16.msra.mxu0 %v538
      %692 = vmatprep.subr.bf16.mxu0 0
      %693 = vmatpush1.bf16.msra.mxu0 %v537
      %694 = vmatprep.subr.bf16.mxu0 0
      %695 = vmatpush1.bf16.msra.mxu0 %v536
      %696 = vmatprep.subr.bf16.mxu0 0
      %697 = vmatpush2.bf16.msra.mxu0 %v551
      %698 = vmatprep.subr.bf16.mxu0 0
      %699 = vmatpush2.bf16.msra.mxu0 %v550
      %700 = vmatprep.subr.bf16.mxu0 0
      %701 = vmatpush2.bf16.msra.mxu0 %v549
      %702 = vmatprep.subr.bf16.mxu0 0
      %703 = vmatpush2.bf16.msra.mxu0 %v548
      %704 = vmatprep.subr.bf16.mxu0 0
      %705 = vmatpush2.bf16.msra.mxu0 %v547
      %706 = vmatprep.subr.bf16.mxu0 0
      %707 = vmatpush2.bf16.msra.mxu0 %v546
      %708 = vmatprep.subr.bf16.mxu0 0
      %709 = vmatpush2.bf16.msra.mxu0 %v545
      %710 = vmatprep.subr.bf16.mxu0 0
      %711 = vmatpush2.bf16.msra.mxu0 %v544
      %712 = vmatprep.mubr.bf16.mxu0 %v208
      %713 = vmatmul.mubr.bf16.gmra.mxu0 %v207
      %v714 = vpop.f32.mrf.mxu0
      %v715 = vadd.f32 %v675, %v714
      %v716 = vpop.f32.mrf.mxu0
      %v717 = vpop.f32.mrf.mxu0
      %v718 = vpop.f32.mrf.mxu0
      %719 = vdwg.mxu0
      %v720 = vld [vmem:[%s3] sm:$0xff]
      %v721 = vadd.f32 %v715, %v720
      %vm722 = vcmask 523264
      %723 = vst.msk [vmem:[%s195] sm:$0xff] %vm722, %v721
      %p724 = scmp.lt.s32.totalorder %s15, 1
      %s725 = scalar_select %p724, %s15, 1
      %s726 = smul.addr %s725, 8
      %s727 = scalar_lea.vmem %s4, %s726
      // Predicated region
      $region37: #{_lambda_.15} parent=35 // pred_check
        %p728 = pneg %p122
      $region38: #{_lambda_.15} parent=35 // pred_check_branch
        %730 = sbr.rel (%p728) target = $region40
      $region39: #{_lambda_.15} parent=35 // pred_region
        _
      $region40: #{_lambda_.15} parent=35 // pred_fallthru
        _
    $region36: #{_lambda_.15} parent=5 // pred_fallthru
      _
    %p731 = scmp.le.s32.totalorder 2, %s10
    // Predicated region
    $region41: #{_lambda_.15} parent=5 // pred_check
      %p732 = pneg %p731
    $region42: #{_lambda_.15} parent=5 // pred_check_branch
      %734 = sbr.rel (%p732) target = $region44
    $region43: #{_lambda_.15} parent=5 // pred_region
      %s735 = ssub.s32 %s10, 2
      // Predicated region
      $region45: #{_lambda_.15} parent=43 // pred_check
        %p736 = pneg %p128
      $region46: #{_lambda_.15} parent=43 // pred_check_branch
        %738 = sbr.rel (%p736) target = $region48
      $region47: #{_lambda_.15} parent=43 // pred_region
        %p739 = scmp.lt.s32.totalorder %s16, 1
        %s740 = scalar_select %p739, %s16, 1
        %s741 = smul.addr %s740, 8
        %s742 = scalar_lea.vmem %s4, %s741
      $region48: #{_lambda_.15} parent=43 // pred_fallthru
        _
    $region44: #{_lambda_.15} parent=5 // pred_fallthru
      _
  $region6: #{_lambda_.15} parent=0 // loop_footer
    %s14 = sadd.s32 1, %s10
  $region7: #{_lambda_.15} parent=0 // loop_footer_branch
    %9 = sbr.rel target = $region3
  $region8: #{_lambda_.15} parent=0 // loop_exit
    _

// kernel: _lambda_.18
$region0: #{_lambda_.18}
  #allocation0 [shape = 'u32[]', space=smem, size = 0x4, offset = 0x4, fixed_abs, tag = 'smem constant byte address 0x4 - core index']
  #allocation1 [shape = 'u32[144,128]{1,0:T(1,128)}', space=vmem, size = 0x12000, scoped, tag = 'internal scratch']
  %s0 = inlined_call_operand.vmem [shape: bf16[16,64], index: 0, kind: input, shape index: {}]
  %s1 = inlined_call_operand.vmem [shape: bf16[64,64], index: 1, kind: input, shape index: {}]
  %s2 = inlined_call_operand.vmem [shape: f32[1,64], index: 2, kind: input, shape index: {}]
  %s3 = inlined_call_operand.vmem [shape: f32[16,64], index: 3, kind: input, shape index: {}]
  %s4 = inlined_call_operand.vmem [shape: f32[16,64], index: 4, kind: output, shape index: {}]
  %s5 = sld [smem:[#allocation0]]
  $region26: #{_lambda_.18} parent=0
    _
  %s7 = ssub.s32 1, %s5
  %s8 = scalar_select 0, %s7, %s5
  // Predicated region
  $region2: #{_lambda_.18} parent=0 // pred_check
    _
  $region3: #{_lambda_.18} parent=0 // pred_check_branch
    %10 = sbr.rel (0) target = $region5
  $region4: #{_lambda_.18} parent=0 // pred_region
    _
  $region5: #{_lambda_.18} parent=0 // pred_fallthru
    _
  // Predicated region
  $region6: #{_lambda_.18} parent=0 // pred_check
    _
  $region7: #{_lambda_.18} parent=0 // pred_check_branch
    %12 = sbr.rel (0) target = $region9
  $region8: #{_lambda_.18} parent=0 // pred_region
    _
  $region9: #{_lambda_.18} parent=0 // pred_fallthru
    _
  // Predicated region
  $region10: #{_lambda_.18} parent=0 // pred_check
    _
  $region11: #{_lambda_.18} parent=0 // pred_check_branch
    %14 = sbr.rel (0) target = $region13
  $region12: #{_lambda_.18} parent=0 // pred_region
    _
  $region13: #{_lambda_.18} parent=0 // pred_fallthru
    _
  // Predicated region
  $region14: #{_lambda_.18} parent=0 // pred_check
    _
  $region15: #{_lambda_.18} parent=0 // pred_check_branch
    %16 = sbr.rel (0) target = $region17
  $region16: #{_lambda_.18} parent=0 // pred_region
    _
  $region17: #{_lambda_.18} parent=0 // pred_fallthru
    _
  %v18 = vld [vmem:[%s0] sm:$0xf]
  %v19 = vld [vmem:[%s0 + $0x4] sm:$0xf]
  %v20 = vld [vmem:[%s1] sm:$0xf]
  %v21 = vld [vmem:[%s1 + $0x4] sm:$0xf]
  %v22 = vld [vmem:[%s1 + $0x8] sm:$0xf]
  %v23 = vld [vmem:[%s1 + $0xc] sm:$0xf]
  %v24 = vld [vmem:[%s1 + $0x10] sm:$0xf]
  %v25 = vld [vmem:[%s1 + $0x14] sm:$0xf]
  %v26 = vld [vmem:[%s1 + $0x18] sm:$0xf]
  %v27 = vld [vmem:[%s1 + $0x1c] sm:$0xf]
  %v28 = vld [vmem:[%s2] sm:$0x1]
  %v30 = vlaneseq
  %v31 = vshrl.u32 %v30, 7
  %v32 = vsub.s32 0, %v31
  %v33 = vrot.slane %v28, %v32
  %v37 = vunpack.c.l.b16 %v18
  %v38 = vunpack.c.l.b16 %v19
  %v39 = vpack.c.b16 %v38, %v37
  %v48 = vunpack.c.l.b16 %v20
  %v49 = vunpack.c.l.b16 %v21
  %v50 = vunpack.c.l.b16 %v22
  %v51 = vunpack.c.l.b16 %v23
  %v52 = vunpack.c.l.b16 %v24
  %v53 = vunpack.c.l.b16 %v25
  %v54 = vunpack.c.l.b16 %v26
  %v55 = vunpack.c.l.b16 %v27
  %v56 = vpack.c.b16 %v49, %v48
  %v57 = vpack.c.b16 %v51, %v50
  %v58 = vpack.c.b16 %v53, %v52
  %v59 = vpack.c.b16 %v55, %v54
  %vm64 = vcmask 523264
  %v66 = vsel %vm64, %v39, 0
  %68 = vmatprep.subr.bf16.mxu0 0
  %69 = vmatpush1.bf16.msra.mxu0 0
  %70 = vmatprep.subr.bf16.mxu0 0
  %71 = vmatpush1.bf16.msra.mxu0 0
  %72 = vmatprep.subr.bf16.mxu0 0
  %73 = vmatpush1.bf16.msra.mxu0 0
  %74 = vmatprep.subr.bf16.mxu0 0
  %75 = vmatpush1.bf16.msra.mxu0 0
  %76 = vmatprep.subr.bf16.mxu0 0
  %77 = vmatpush1.bf16.msra.mxu0 %v59
  %78 = vmatprep.subr.bf16.mxu0 0
  %79 = vmatpush1.bf16.msra.mxu0 %v58
  %80 = vmatprep.subr.bf16.mxu0 0
  %81 = vmatpush1.bf16.msra.mxu0 %v57
  %82 = vmatprep.subr.bf16.mxu0 0
  %83 = vmatpush1.bf16.msra.mxu0 %v56
  %84 = vmatprep.subr.bf16.mxu0 0
  %85 = vmatpush2.bf16.msra.mxu0 0
  %86 = vmatprep.subr.bf16.mxu0 0
  %87 = vmatpush2.bf16.msra.mxu0 0
  %88 = vmatprep.subr.bf16.mxu0 0
  %89 = vmatpush2.bf16.msra.mxu0 0
  %90 = vmatprep.subr.bf16.mxu0 0
  %91 = vmatpush2.bf16.msra.mxu0 0
  %92 = vmatprep.subr.bf16.mxu0 0
  %93 = vmatpush2.bf16.msra.mxu0 0
  %94 = vmatprep.subr.bf16.mxu0 0
  %95 = vmatpush2.bf16.msra.mxu0 0
  %96 = vmatprep.subr.bf16.mxu0 0
  %97 = vmatpush2.bf16.msra.mxu0 0
  %98 = vmatprep.subr.bf16.mxu0 0
  %99 = vmatpush2.bf16.msra.mxu0 0
  %100 = vmatprep.mubr.bf16.mxu0 0
  %101 = vmatmul.mubr.bf16.gmra.mxu0 %v66
  %v102 = vpop.f32.mrf.mxu0
  %v103 = vadd.f32 %v33, %v102
  %v104 = vpop.f32.mrf.mxu0
  %v105 = vpop.f32.mrf.mxu0
  %v106 = vadd.f32 %v33, %v105
  %v107 = vpop.f32.mrf.mxu0
  %108 = vdwg.mxu0
  %v109 = vld [vmem:[%s3] sm:$0xff]
  %v110 = vld [vmem:[%s3 + $0x8] sm:$0xff]
  %v111 = vadd.f32 %v103, %v109
  %v112 = vadd.f32 %v106, %v110
  %113 = vst.msk [vmem:[%s4] sm:$0xff] %vm64, %v111
  %114 = vst.msk [vmem:[%s4 + $0x8] sm:$0xff] %vm64, %v112
  // Predicated region
  $region18: #{_lambda_.18} parent=0 // pred_check
    _
  $region19: #{_lambda_.18} parent=0 // pred_check_branch
    %116 = sbr.rel (0) target = $region21
  $region20: #{_lambda_.18} parent=0 // pred_region
    _
  $region21: #{_lambda_.18} parent=0 // pred_fallthru
    _
  // Predicated region
  $region22: #{_lambda_.18} parent=0 // pred_check
    _
  $region23: #{_lambda_.18} parent=0 // pred_check_branch
    %118 = sbr.rel (0) target = $region25
  $region24: #{_lambda_.18} parent=0 // pred_region
    _
  $region25: #{_lambda_.18} parent=0 // pred_fallthru
    _

// kernel: _lambda_.20
$region0: #{_lambda_.20}
  #allocation0 [shape = 'u32[]', space=smem, size = 0x4, offset = 0x4, fixed_abs, tag = 'smem constant byte address 0x4 - core index']
  #allocation1 [shape = 'u32[144,128]{1,0:T(1,128)}', space=vmem, size = 0x12000, scoped, tag = 'internal scratch']
  %s0 = inlined_call_operand.vmem [shape: bf16[4,4,64], index: 0, kind: input, shape index: {}]
  %s1 = inlined_call_operand.vmem [shape: bf16[4,4,64], index: 1, kind: input, shape index: {}]
  %s2 = inlined_call_operand.vmem [shape: bf16[4,4,64], index: 2, kind: input, shape index: {}]
  %s3 = inlined_call_operand.vmem [shape: bf16[4,4,64], index: 3, kind: output, shape index: {}]
  %s4 = sld [smem:[#allocation0]]
  $region45: #{_lambda_.20} parent=0
    _
  %s6 = ssub.s32 1, %s4
  %s7 = scalar_select 0, %s6, %s4
  loop: start=0, step=1, limit=6
  $region2: #{_lambda_.20} parent=0 // loop_pre_header
    _
  $region3: #{_lambda_.20} parent=0 // loop_header
    %s9 = sphi 0, %s13
    %p10 = scmp.ge.s32.totalorder %s9, 6
    %s19 = sphi 0, %s21
    %s22 = sphi 0, %s19
    %s23 = sphi 0, %s22
    %s39 = sphi 0, %s23
    %s45 = sphi 0, %s47
    %s48 = sphi 0, %s45
    %s49 = sphi 0, %s48
    %s65 = sphi 0, %s49
    %s71 = sphi 0, %s73
    %s74 = sphi 0, %s71
    %s75 = sphi 0, %s74
    %s91 = sphi 0, %s75
    %s97 = sphi 0, %s99
    %s100 = sphi 0, %s97
    %s101 = sphi 0, %s100
    %s117 = sphi 0, %s101
  $region4: #{_lambda_.20} parent=0 // loop_header_branch
    %12 = sbr.rel (%p10) target = $region8
  $region5: #{_lambda_.20} parent=0 // loop_body
    %s14 = ssub.s32 %s9, 1
    %s15 = ssub.s32 %s9, 2
    %s16 = sadd.s32 %s9, 1
    %s17 = ssub.s32 %s9, %s16
    %p18 = scmp.eq.s32.totalorder %s17, 0
    %s20 = sadd.s32 %s19, 1
    %s21 = scalar_select %p18, %s19, %s20
    %p24 = pneg %p18
    %p25 = scmp.eq.s32.totalorder %s9, 3
    %p26 = por %p24, %p25
    %p27 = scmp.ne.s32.totalorder %s19, %s22
    %p28 = scmp.eq.s32.totalorder %s9, 0
    %p29 = por %p27, %p28
    %p30 = scmp.ne.s32.totalorder %s19, %s22
    %p31 = scmp.eq.s32.totalorder %s14, 3
    %p32 = por %p30, %p31
    %p33 = scmp.ne.s32.totalorder %s22, %s23
    %p34 = scmp.eq.s32.totalorder %s14, 0
    %p35 = por %p33, %p34
    %p36 = scmp.ne.s32.totalorder %s22, %s23
    %p37 = scmp.eq.s32.totalorder %s15, 3
    %p38 = por %p36, %p37
    %p40 = scmp.ne.s32.totalorder %s23, %s39
    %p41 = scmp.eq.s32.totalorder %s15, 0
    %p42 = por %p40, %p41
    %s43 = ssub.s32 %s9, %s16
    %p44 = scmp.eq.s32.totalorder %s43, 0
    %s46 = sadd.s32 %s45, 1
    %s47 = scalar_select %p44, %s45, %s46
    %p50 = pneg %p44
    %p51 = scmp.eq.s32.totalorder %s9, 3
    %p52 = por %p50, %p51
    %p53 = scmp.ne.s32.totalorder %s45, %s48
    %p54 = scmp.eq.s32.totalorder %s9, 0
    %p55 = por %p53, %p54
    %p56 = scmp.ne.s32.totalorder %s45, %s48
    %p57 = scmp.eq.s32.totalorder %s14, 3
    %p58 = por %p56, %p57
    %p59 = scmp.ne.s32.totalorder %s48, %s49
    %p60 = scmp.eq.s32.totalorder %s14, 0
    %p61 = por %p59, %p60
    %p62 = scmp.ne.s32.totalorder %s48, %s49
    %p63 = scmp.eq.s32.totalorder %s15, 3
    %p64 = por %p62, %p63
    %p66 = scmp.ne.s32.totalorder %s49, %s65
    %p67 = scmp.eq.s32.totalorder %s15, 0
    %p68 = por %p66, %p67
    %s69 = ssub.s32 %s9, %s16
    %p70 = scmp.eq.s32.totalorder %s69, 0
    %s72 = sadd.s32 %s71, 1
    %s73 = scalar_select %p70, %s71, %s72
    %p76 = pneg %p70
    %p77 = scmp.eq.s32.totalorder %s9, 3
    %p78 = por %p76, %p77
    %p79 = scmp.ne.s32.totalorder %s71, %s74
    %p80 = scmp.eq.s32.totalorder %s9, 0
    %p81 = por %p79, %p80
    %p82 = scmp.ne.s32.totalorder %s71, %s74
    %p83 = scmp.eq.s32.totalorder %s14, 3
    %p84 = por %p82, %p83
    %p85 = scmp.ne.s32.totalorder %s74, %s75
    %p86 = scmp.eq.s32.totalorder %s14, 0
    %p87 = por %p85, %p86
    %p88 = scmp.ne.s32.totalorder %s74, %s75
    %p89 = scmp.eq.s32.totalorder %s15, 3
    %p90 = por %p88, %p89
    %p92 = scmp.ne.s32.totalorder %s75, %s91
    %p93 = scmp.eq.s32.totalorder %s15, 0
    %p94 = por %p92, %p93
    %s95 = ssub.s32 %s9, %s16
    %p96 = scmp.eq.s32.totalorder %s95, 0
    %s98 = sadd.s32 %s97, 1
    %s99 = scalar_select %p96, %s97, %s98
    %p102 = pneg %p96
    %p103 = scmp.eq.s32.totalorder %s9, 3
    %p104 = por %p102, %p103
    %p105 = scmp.ne.s32.totalorder %s97, %s100
    %p106 = scmp.eq.s32.totalorder %s9, 0
    %p107 = por %p105, %p106
    %p108 = scmp.ne.s32.totalorder %s97, %s100
    %p109 = scmp.eq.s32.totalorder %s14, 3
    %p110 = por %p108, %p109
    %p111 = scmp.ne.s32.totalorder %s100, %s101
    %p112 = scmp.eq.s32.totalorder %s14, 0
    %p113 = por %p111, %p112
    %p114 = scmp.ne.s32.totalorder %s100, %s101
    %p115 = scmp.eq.s32.totalorder %s15, 3
    %p116 = por %p114, %p115
    %p118 = scmp.ne.s32.totalorder %s101, %s117
    %p119 = scmp.eq.s32.totalorder %s15, 0
    %p120 = por %p118, %p119
    %p121 = scmp.le.s32.totalorder 1, %s9
    %p122 = scmp.lt.s32.totalorder %s9, 5
    %p123 = pnand %p121, %p122
    %p124 = pneg %p123
    // Predicated region
    $region9: #{_lambda_.20} parent=5 // pred_check
      _
    $region10: #{_lambda_.20} parent=5 // pred_check_branch
      %126 = sbr.rel (%p123) target = $region12
    $region11: #{_lambda_.20} parent=5 // pred_region
      %s127 = ssub.s32 %s9, 1
    $region12: #{_lambda_.20} parent=5 // pred_fallthru
      _
    %p128 = scmp.lt.s32.totalorder %s9, 4
    // Predicated region
    $region13: #{_lambda_.20} parent=5 // pred_check
      %p129 = pneg %p128
    $region14: #{_lambda_.20} parent=5 // pred_check_branch
      %131 = sbr.rel (%p129) target = $region16
    $region15: #{_lambda_.20} parent=5 // pred_region
      // Predicated region
      $region17: #{_lambda_.20} parent=15 // pred_check
        %p132 = pneg %p29
      $region18: #{_lambda_.20} parent=15 // pred_check_branch
        %134 = sbr.rel (%p132) target = $region20
      $region19: #{_lambda_.20} parent=15 // pred_region
        %p135 = scmp.lt.s32.totalorder %s9, 3
        %s136 = scalar_select %p135, %s9, 3
        %s137 = smul.addr %s136, 2
        %s138 = scalar_lea.vmem %s0, %s137
      $region20: #{_lambda_.20} parent=15 // pred_fallthru
        _
      // Predicated region
      $region21: #{_lambda_.20} parent=15 // pred_check
        %p139 = pneg %p55
      $region22: #{_lambda_.20} parent=15 // pred_check_branch
        %141 = sbr.rel (%p139) target = $region24
      $region23: #{_lambda_.20} parent=15 // pred_region
        %p142 = scmp.lt.s32.totalorder %s9, 3
        %s143 = scalar_select %p142, %s9, 3
        %s144 = smul.addr %s143, 2
        %s145 = scalar_lea.vmem %s1, %s144
      $region24: #{_lambda_.20} parent=15 // pred_fallthru
        _
      // Predicated region
      $region25: #{_lambda_.20} parent=15 // pred_check
        %p146 = pneg %p81
      $region26: #{_lambda_.20} parent=15 // pred_check_branch
        %148 = sbr.rel (%p146) target = $region28
      $region27: #{_lambda_.20} parent=15 // pred_region
        %p149 = scmp.lt.s32.totalorder %s9, 3
        %s150 = scalar_select %p149, %s9, 3
        %s151 = smul.addr %s150, 2
        %s152 = scalar_lea.vmem %s2, %s151
      $region28: #{_lambda_.20} parent=15 // pred_fallthru
        _
    $region16: #{_lambda_.20} parent=5 // pred_fallthru
      _
    %p153 = scmp.le.s32.totalorder 1, %s9
    %p154 = scmp.lt.s32.totalorder %s9, 5
    %p155 = pnand %p153, %p154
    %p156 = pneg %p155
    // Predicated region
    $region29: #{_lambda_.20} parent=5 // pred_check
      _
    $region30: #{_lambda_.20} parent=5 // pred_check_branch
      %158 = sbr.rel (%p155) target = $region32
    $region31: #{_lambda_.20} parent=5 // pred_region
      %s159 = ssub.s32 %s9, 1
      %p160 = scmp.lt.s32.totalorder %s14, 3
      %s161 = scalar_select %p160, %s14, 3
      %s162 = smul.addr %s161, 2
      %s163 = scalar_lea.vmem %s0, %s162
      %p164 = pneg %p35
      %p165 = pneg %p32
      %p166 = scmp.lt.s32.totalorder %s14, 3
      %s167 = scalar_select %p166, %s14, 3
      %s168 = smul.addr %s167, 2
      %s169 = scalar_lea.vmem %s1, %s168
      %p170 = pneg %p61
      %p171 = pneg %p58
      %p172 = scmp.lt.s32.totalorder %s14, 3
      %s173 = scalar_select %p172, %s14, 3
      %s174 = smul.addr %s173, 2
      %s175 = scalar_lea.vmem %s2, %s174
      %p176 = pneg %p87
      %p177 = pneg %p84
      %p178 = pneg %p113
      %p179 = pneg %p110
      %p180 = scmp.lt.s32.totalorder %s14, 3
      %s181 = scalar_select %p180, %s14, 3
      %s182 = smul.addr %s181, 2
      %s183 = scalar_lea.vmem %s3, %s182
      %p184 = scmp.lt.s32.totalorder %s14, 3
      %s185 = scalar_select %p184, %s14, 3
      %s186 = smul.addr %s185, 2
      %s187 = scalar_lea.vmem %s0, %s186
      %p188 = scmp.lt.s32.totalorder %s14, 3
      %s189 = scalar_select %p188, %s14, 3
      %s190 = smul.addr %s189, 2
      %s191 = scalar_lea.vmem %s1, %s190
      %p192 = scmp.lt.s32.totalorder %s14, 3
      %s193 = scalar_select %p192, %s14, 3
      %s194 = smul.addr %s193, 2
      %s195 = scalar_lea.vmem %s2, %s194
      %p196 = scmp.lt.s32.totalorder %s14, 3
      %s197 = scalar_select %p196, %s14, 3
      %s198 = smul.addr %s197, 2
      %s199 = scalar_lea.vmem %s3, %s198
      %v201 = vld [vmem:[%s187] sm:$0x3]
      %v202 = vld [vmem:[%s191] sm:$0x3]
      %v203 = vld [vmem:[%s195] sm:$0x3]
      %vm204 = vcmask 261120
      %v206 = vsel %vm204, %v201, 0
      %v209 = vsel %vm204, %v202, 0
      %211 = vmatprep.subr.bf16.mxu0 0
      %212 = vmatpush1.bf16.xpose.msra.mxu0 0
      %213 = vmatprep.subr.bf16.mxu0 0
      %214 = vmatpush1.bf16.xpose.msra.mxu0 0
      %215 = vmatprep.subr.bf16.mxu0 0
      %216 = vmatpush1.bf16.xpose.msra.mxu0 0
      %217 = vmatprep.subr.bf16.mxu0 0
      %218 = vmatpush1.bf16.xpose.msra.mxu0 0
      %219 = vmatprep.subr.bf16.mxu0 0
      %220 = vmatpush1.bf16.xpose.msra.mxu0 0
      %221 = vmatprep.subr.bf16.mxu0 0
      %222 = vmatpush1.bf16.xpose.msra.mxu0 0
      %223 = vmatprep.subr.bf16.mxu0 0
      %224 = vmatpush1.bf16.xpose.msra.mxu0 0
      %225 = vmatprep.subr.bf16.mxu0 0
      %226 = vmatpush1.bf16.xpose.msra.mxu0 %v209
      %227 = vmatprep.subr.bf16.mxu0 0
      %228 = vmatpush2.bf16.xpose.msra.mxu0 0
      %229 = vmatprep.subr.bf16.mxu0 0
      %230 = vmatpush2.bf16.xpose.msra.mxu0 0
      %231 = vmatprep.subr.bf16.mxu0 0
      %232 = vmatpush2.bf16.xpose.msra.mxu0 0
      %233 = vmatprep.subr.bf16.mxu0 0
      %234 = vmatpush2.bf16.xpose.msra.mxu0 0
      %235 = vmatprep.subr.bf16.mxu0 0
      %236 = vmatpush2.bf16.xpose.msra.mxu0 0
      %237 = vmatprep.subr.bf16.mxu0 0
      %238 = vmatpush2.bf16.xpose.msra.mxu0 0
      %239 = vmatprep.subr.bf16.mxu0 0
      %240 = vmatpush2.bf16.xpose.msra.mxu0 0
      %241 = vmatprep.subr.bf16.mxu0 0
      %242 = vmatpush2.bf16.xpose.msra.mxu0 0
      %243 = vmatprep.mubr.bf16.mxu0 0
      %244 = vmatmul.mubr.bf16.gmra.mxu0 %v206
      %v245 = vpop.f32.mrf.mxu0
      %v246 = vadd.f32 0.0, %v245
      %v247 = vpop.f32.mrf.mxu0
      %v248 = vpop.f32.mrf.mxu0
      %v249 = vpop.f32.mrf.mxu0
      %250 = vdwg.mxu0
      %v251 = vmul.f32 %v246, 0.17677669
      %vm252 = vcmask 27648
      %v253 = vsel %vm252, %v251, -inf
      %254 = vmax.xlane.f32.xlu0 %v253
      %v255 = vpop.xlane.xlu0 %254
      %v256 = vsub.f32 %v251, %v255
      %v257 = vmul.f32 %v256, 1.442695
      %v258 = vpow.pop %v257
      %v259 = vsel %vm252, %v258, 0.0
      %260 = vadd.xlane.f32.xlu0 %v259
      %v261 = vpop.xlane.xlu0 %260
      %v262 = vrcp.pop %v261
      %v263 = vmul.f32 %v258, %v262
      %v264 = vpack.c.bf16 %v263, %v263
      %vm265 = vcmask 31744
      %v267 = vsel %vm265, %v264, 0
      %vm269 = vcmask 1041408
      %v271 = vsel %vm269, %v203, 0
      %273 = vmatprep.subr.bf16.mxu0 0
      %274 = vmatpush1.bf16.msra.mxu0 0
      %275 = vmatprep.subr.bf16.mxu0 0
      %276 = vmatpush1.bf16.msra.mxu0 0
      %277 = vmatprep.subr.bf16.mxu0 0
      %278 = vmatpush1.bf16.msra.mxu0 0
      %279 = vmatprep.subr.bf16.mxu0 0
      %280 = vmatpush1.bf16.msra.mxu0 0
      %281 = vmatprep.subr.bf16.mxu0 0
      %282 = vmatpush1.bf16.msra.mxu0 0
      %283 = vmatprep.subr.bf16.mxu0 0
      %284 = vmatpush1.bf16.msra.mxu0 0
      %285 = vmatprep.subr.bf16.mxu0 0
      %286 = vmatpush1.bf16.msra.mxu0 0
      %287 = vmatprep.subr.bf16.mxu0 0
      %288 = vmatpush1.bf16.msra.mxu0 %v271
      %289 = vmatprep.subr.bf16.mxu0 0
      %290 = vmatpush2.bf16.msra.mxu0 0
      %291 = vmatprep.subr.bf16.mxu0 0
      %292 = vmatpush2.bf16.msra.mxu0 0
      %293 = vmatprep.subr.bf16.mxu0 0
      %294 = vmatpush2.bf16.msra.mxu0 0
      %295 = vmatprep.subr.bf16.mxu0 0
      %296 = vmatpush2.bf16.msra.mxu0 0
      %297 = vmatprep.subr.bf16.mxu0 0
      %298 = vmatpush2.bf16.msra.mxu0 0
      %299 = vmatprep.subr.bf16.mxu0 0
      %300 = vmatpush2.bf16.msra.mxu0 0
      %301 = vmatprep.subr.bf16.mxu0 0
      %302 = vmatpush2.bf16.msra.mxu0 0
      %303 = vmatprep.subr.bf16.mxu0 0
      %304 = vmatpush2.bf16.msra.mxu0 0
      %305 = vmatprep.mubr.bf16.mxu0 0
      %306 = vmatmul.mubr.bf16.gmra.mxu0 %v267
      %v307 = vpop.f32.mrf.mxu0
      %v308 = vadd.f32 0.0, %v307
      %v309 = vpop.f32.mrf.mxu0
      %v310 = vpop.f32.mrf.mxu0
      %v311 = vpop.f32.mrf.mxu0
      %312 = vdwg.mxu0
      %v315 = vunpack.c.l.s4 1983009808
      %v316 = vunpack.c.0.s8 %v315
      %v317 = vlaneseq
      %v318 = vshrl.u32 %v317, 7
      %v319 = vsub.s32 %v316, %v318
      %v320 = vrot.slane %v201, %v319
      %321 = vrot.lane.b32.xlu0 %v320, 96
      %v322 = vpop.permute.xlu0 %321
      %v325 = vunpack.c.l.s4 1983009808
      %v326 = vunpack.c.0.s8 %v325
      %v327 = vlaneseq
      %v328 = vshrl.u32 %v327, 7
      %v329 = vsub.s32 %v326, %v328
      %v330 = vrot.slane %v202, %v329
      %331 = vrot.lane.b32.xlu0 %v330, 96
      %v332 = vpop.permute.xlu0 %331
      %v334 = vsel %vm204, %v322, 0
      %v337 = vsel %vm204, %v332, 0
      %339 = vmatprep.subr.bf16.mxu0 0
      %340 = vmatpush1.bf16.xpose.msra.mxu0 0
      %341 = vmatprep.subr.bf16.mxu0 0
      %342 = vmatpush1.bf16.xpose.msra.mxu0 0
      %343 = vmatprep.subr.bf16.mxu0 0
      %344 = vmatpush1.bf16.xpose.msra.mxu0 0
      %345 = vmatprep.subr.bf16.mxu0 0
      %346 = vmatpush1.bf16.xpose.msra.mxu0 0
      %347 = vmatprep.subr.bf16.mxu0 0
      %348 = vmatpush1.bf16.xpose.msra.mxu0 0
      %349 = vmatprep.subr.bf16.mxu0 0
      %350 = vmatpush1.bf16.xpose.msra.mxu0 0
      %351 = vmatprep.subr.bf16.mxu0 0
      %352 = vmatpush1.bf16.xpose.msra.mxu0 0
      %353 = vmatprep.subr.bf16.mxu0 0
      %354 = vmatpush1.bf16.xpose.msra.mxu0 %v337
      %355 = vmatprep.subr.bf16.mxu0 0
      %356 = vmatpush2.bf16.xpose.msra.mxu0 0
      %357 = vmatprep.subr.bf16.mxu0 0
      %358 = vmatpush2.bf16.xpose.msra.mxu0 0
      %359 = vmatprep.subr.bf16.mxu0 0
      %360 = vmatpush2.bf16.xpose.msra.mxu0 0
      %361 = vmatprep.subr.bf16.mxu0 0
      %362 = vmatpush2.bf16.xpose.msra.mxu0 0
      %363 = vmatprep.subr.bf16.mxu0 0
      %364 = vmatpush2.bf16.xpose.msra.mxu0 0
      %365 = vmatprep.subr.bf16.mxu0 0
      %366 = vmatpush2.bf16.xpose.msra.mxu0 0
      %367 = vmatprep.subr.bf16.mxu0 0
      %368 = vmatpush2.bf16.xpose.msra.mxu0 0
      %369 = vmatprep.subr.bf16.mxu0 0
      %370 = vmatpush2.bf16.xpose.msra.mxu0 0
      %371 = vmatprep.mubr.bf16.mxu0 0
      %372 = vmatmul.mubr.bf16.gmra.mxu0 %v334
      %v373 = vpop.f32.mrf.mxu0
      %v374 = vadd.f32 0.0, %v373
      %v375 = vpop.f32.mrf.mxu0
      %v376 = vpop.f32.mrf.mxu0
      %v377 = vpop.f32.mrf.mxu0
      %378 = vdwg.mxu0
      %v379 = vmul.f32 %v374, 0.17677669
      %v380 = vsel %vm252, %v379, -inf
      %381 = vmax.xlane.f32.xlu0 %v380
      %v382 = vpop.xlane.xlu0 %381
      %v383 = vsub.f32 %v379, %v382
      %v384 = vmul.f32 %v383, 1.442695
      %v385 = vpow.pop %v384
      %v386 = vsel %vm252, %v385, 0.0
      %387 = vadd.xlane.f32.xlu0 %v386
      %v388 = vpop.xlane.xlu0 %387
      %v389 = vrcp.pop %v388
      %v390 = vmul.f32 %v385, %v389
      %v391 = vpack.c.bf16 %v390, %v390
      %v394 = vunpack.c.l.s4 1983009808
      %v395 = vunpack.c.0.s8 %v394
      %v396 = vlaneseq
      %v397 = vshrl.u32 %v396, 7
      %v398 = vsub.s32 %v395, %v397
      %v399 = vrot.slane %v203, %v398
      %400 = vrot.lane.b32.xlu0 %v399, 96
      %v401 = vpop.permute.xlu0 %400
      %v403 = vsel %vm265, %v391, 0
      %v406 = vsel %vm269, %v401, 0
      %408 = vmatprep.subr.bf16.mxu0 0
      %409 = vmatpush1.bf16.msra.mxu0 0
      %410 = vmatprep.subr.bf16.mxu0 0
      %411 = vmatpush1.bf16.msra.mxu0 0
      %412 = vmatprep.subr.bf16.mxu0 0
      %413 = vmatpush1.bf16.msra.mxu0 0
      %414 = vmatprep.subr.bf16.mxu0 0
      %415 = vmatpush1.bf16.msra.mxu0 0
      %416 = vmatprep.subr.bf16.mxu0 0
      %417 = vmatpush1.bf16.msra.mxu0 0
      %418 = vmatprep.subr.bf16.mxu0 0
      %419 = vmatpush1.bf16.msra.mxu0 0
      %420 = vmatprep.subr.bf16.mxu0 0
      %421 = vmatpush1.bf16.msra.mxu0 0
      %422 = vmatprep.subr.bf16.mxu0 0
      %423 = vmatpush1.bf16.msra.mxu0 %v406
      %424 = vmatprep.subr.bf16.mxu0 0
      %425 = vmatpush2.bf16.msra.mxu0 0
      %426 = vmatprep.subr.bf16.mxu0 0
      %427 = vmatpush2.bf16.msra.mxu0 0
      %428 = vmatprep.subr.bf16.mxu0 0
      %429 = vmatpush2.bf16.msra.mxu0 0
      %430 = vmatprep.subr.bf16.mxu0 0
      %431 = vmatpush2.bf16.msra.mxu0 0
      %432 = vmatprep.subr.bf16.mxu0 0
      %433 = vmatpush2.bf16.msra.mxu0 0
      %434 = vmatprep.subr.bf16.mxu0 0
      %435 = vmatpush2.bf16.msra.mxu0 0
      %436 = vmatprep.subr.bf16.mxu0 0
      %437 = vmatpush2.bf16.msra.mxu0 0
      %438 = vmatprep.subr.bf16.mxu0 0
      %439 = vmatpush2.bf16.msra.mxu0 0
      %440 = vmatprep.mubr.bf16.mxu0 0
      %441 = vmatmul.mubr.bf16.gmra.mxu0 %v403
      %v442 = vpop.f32.mrf.mxu0
      %v443 = vadd.f32 0.0, %v442
      %v444 = vpop.f32.mrf.mxu0
      %v445 = vpop.f32.mrf.mxu0
      %v446 = vpop.f32.mrf.mxu0
      %447 = vdwg.mxu0
      %449 = vrot.lane.b32.xlu0 %v443, 32
      %v450 = vpop.permute.xlu0 %449
      %v452 = vsel %vm204, %v308, %v450
      %v453 = vpack.c.bf16 %v452, %v452
      %vm454 = vcmask 517120
      %455 = vst.msk [vmem:[%s199] sm:$0x3] %vm454, %v453
      %p456 = scmp.lt.s32.totalorder %s14, 3
      %s457 = scalar_select %p456, %s14, 3
      %s458 = smul.addr %s457, 2
      %s459 = scalar_lea.vmem %s3, %s458
      // Predicated region
      $region33: #{_lambda_.20} parent=31 // pred_check
        %p460 = pneg %p110
      $region34: #{_lambda_.20} parent=31 // pred_check_branch
        %462 = sbr.rel (%p460) target = $region36
      $region35: #{_lambda_.20} parent=31 // pred_region
        _
      $region36: #{_lambda_.20} parent=31 // pred_fallthru
        _
    $region32: #{_lambda_.20} parent=5 // pred_fallthru
      _
    %p463 = scmp.le.s32.totalorder 2, %s9
    // Predicated region
    $region37: #{_lambda_.20} parent=5 // pred_check
      %p464 = pneg %p463
    $region38: #{_lambda_.20} parent=5 // pred_check_branch
      %466 = sbr.rel (%p464) target = $region40
    $region39: #{_lambda_.20} parent=5 // pred_region
      %s467 = ssub.s32 %s9, 2
      // Predicated region
      $region41: #{_lambda_.20} parent=39 // pred_check
        %p468 = pneg %p116
      $region42: #{_lambda_.20} parent=39 // pred_check_branch
        %470 = sbr.rel (%p468) target = $region44
      $region43: #{_lambda_.20} parent=39 // pred_region
        %p471 = scmp.lt.s32.totalorder %s15, 3
        %s472 = scalar_select %p471, %s15, 3
        %s473 = smul.addr %s472, 2
        %s474 = scalar_lea.vmem %s3, %s473
      $region44: #{_lambda_.20} parent=39 // pred_fallthru
        _
    $region40: #{_lambda_.20} parent=5 // pred_fallthru
      _
  $region6: #{_lambda_.20} parent=0 // loop_footer
    %s13 = sadd.s32 1, %s9
  $region7: #{_lambda_.20} parent=0 // loop_footer_branch
    %8 = sbr.rel target = $region3
  $region8: #{_lambda_.20} parent=0 // loop_exit
    _

// kernel: _lambda_.17
$region0: #{_lambda_.17}
  #allocation0 [shape = 'u32[]', space=smem, size = 0x4, offset = 0x4, fixed_abs, tag = 'smem constant byte address 0x4 - core index']
  #allocation1 [shape = 'u32[144,128]{1,0:T(1,128)}', space=vmem, size = 0x12000, scoped, tag = 'internal scratch']
  %s0 = inlined_call_operand.vmem [shape: bf16[8,2,64], index: 0, kind: input, shape index: {}]
  %s1 = inlined_call_operand.vmem [shape: bf16[8,2,64], index: 1, kind: input, shape index: {}]
  %s2 = inlined_call_operand.vmem [shape: bf16[8,2,64], index: 2, kind: input, shape index: {}]
  %s3 = inlined_call_operand.vmem [shape: bf16[8,2,64], index: 3, kind: output, shape index: {}]
  %s4 = sld [smem:[#allocation0]]
  $region45: #{_lambda_.17} parent=0
    _
  %s6 = ssub.s32 1, %s4
  %s7 = scalar_select 0, %s6, %s4
  loop: start=0, step=1, limit=6
  $region2: #{_lambda_.17} parent=0 // loop_pre_header
    _
  $region3: #{_lambda_.17} parent=0 // loop_header
    %s9 = sphi 0, %s13
    %p10 = scmp.ge.s32.totalorder %s9, 6
    %s19 = sphi 0, %s21
    %s22 = sphi 0, %s19
    %s23 = sphi 0, %s22
    %s39 = sphi 0, %s23
    %s45 = sphi 0, %s47
    %s48 = sphi 0, %s45
    %s49 = sphi 0, %s48
    %s65 = sphi 0, %s49
    %s71 = sphi 0, %s73
    %s74 = sphi 0, %s71
    %s75 = sphi 0, %s74
    %s91 = sphi 0, %s75
    %s97 = sphi 0, %s99
    %s100 = sphi 0, %s97
    %s101 = sphi 0, %s100
    %s117 = sphi 0, %s101
  $region4: #{_lambda_.17} parent=0 // loop_header_branch
    %12 = sbr.rel (%p10) target = $region8
  $region5: #{_lambda_.17} parent=0 // loop_body
    %s14 = ssub.s32 %s9, 1
    %s15 = ssub.s32 %s9, 2
    %s16 = sadd.s32 %s9, 1
    %s17 = ssub.s32 %s9, %s16
    %p18 = scmp.eq.s32.totalorder %s17, 0
    %s20 = sadd.s32 %s19, 1
    %s21 = scalar_select %p18, %s19, %s20
    %p24 = pneg %p18
    %p25 = scmp.eq.s32.totalorder %s9, 3
    %p26 = por %p24, %p25
    %p27 = scmp.ne.s32.totalorder %s19, %s22
    %p28 = scmp.eq.s32.totalorder %s9, 0
    %p29 = por %p27, %p28
    %p30 = scmp.ne.s32.totalorder %s19, %s22
    %p31 = scmp.eq.s32.totalorder %s14, 3
    %p32 = por %p30, %p31
    %p33 = scmp.ne.s32.totalorder %s22, %s23
    %p34 = scmp.eq.s32.totalorder %s14, 0
    %p35 = por %p33, %p34
    %p36 = scmp.ne.s32.totalorder %s22, %s23
    %p37 = scmp.eq.s32.totalorder %s15, 3
    %p38 = por %p36, %p37
    %p40 = scmp.ne.s32.totalorder %s23, %s39
    %p41 = scmp.eq.s32.totalorder %s15, 0
    %p42 = por %p40, %p41
    %s43 = ssub.s32 %s9, %s16
    %p44 = scmp.eq.s32.totalorder %s43, 0
    %s46 = sadd.s32 %s45, 1
    %s47 = scalar_select %p44, %s45, %s46
    %p50 = pneg %p44
    %p51 = scmp.eq.s32.totalorder %s9, 3
    %p52 = por %p50, %p51
    %p53 = scmp.ne.s32.totalorder %s45, %s48
    %p54 = scmp.eq.s32.totalorder %s9, 0
    %p55 = por %p53, %p54
    %p56 = scmp.ne.s32.totalorder %s45, %s48
    %p57 = scmp.eq.s32.totalorder %s14, 3
    %p58 = por %p56, %p57
    %p59 = scmp.ne.s32.totalorder %s48, %s49
    %p60 = scmp.eq.s32.totalorder %s14, 0
    %p61 = por %p59, %p60
    %p62 = scmp.ne.s32.totalorder %s48, %s49
    %p63 = scmp.eq.s32.totalorder %s15, 3
    %p64 = por %p62, %p63
    %p66 = scmp.ne.s32.totalorder %s49, %s65
    %p67 = scmp.eq.s32.totalorder %s15, 0
    %p68 = por %p66, %p67
    %s69 = ssub.s32 %s9, %s16
    %p70 = scmp.eq.s32.totalorder %s69, 0
    %s72 = sadd.s32 %s71, 1
    %s73 = scalar_select %p70, %s71, %s72
    %p76 = pneg %p70
    %p77 = scmp.eq.s32.totalorder %s9, 3
    %p78 = por %p76, %p77
    %p79 = scmp.ne.s32.totalorder %s71, %s74
    %p80 = scmp.eq.s32.totalorder %s9, 0
    %p81 = por %p79, %p80
    %p82 = scmp.ne.s32.totalorder %s71, %s74
    %p83 = scmp.eq.s32.totalorder %s14, 3
    %p84 = por %p82, %p83
    %p85 = scmp.ne.s32.totalorder %s74, %s75
    %p86 = scmp.eq.s32.totalorder %s14, 0
    %p87 = por %p85, %p86
    %p88 = scmp.ne.s32.totalorder %s74, %s75
    %p89 = scmp.eq.s32.totalorder %s15, 3
    %p90 = por %p88, %p89
    %p92 = scmp.ne.s32.totalorder %s75, %s91
    %p93 = scmp.eq.s32.totalorder %s15, 0
    %p94 = por %p92, %p93
    %s95 = ssub.s32 %s9, %s16
    %p96 = scmp.eq.s32.totalorder %s95, 0
    %s98 = sadd.s32 %s97, 1
    %s99 = scalar_select %p96, %s97, %s98
    %p102 = pneg %p96
    %p103 = scmp.eq.s32.totalorder %s9, 3
    %p104 = por %p102, %p103
    %p105 = scmp.ne.s32.totalorder %s97, %s100
    %p106 = scmp.eq.s32.totalorder %s9, 0
    %p107 = por %p105, %p106
    %p108 = scmp.ne.s32.totalorder %s97, %s100
    %p109 = scmp.eq.s32.totalorder %s14, 3
    %p110 = por %p108, %p109
    %p111 = scmp.ne.s32.totalorder %s100, %s101
    %p112 = scmp.eq.s32.totalorder %s14, 0
    %p113 = por %p111, %p112
    %p114 = scmp.ne.s32.totalorder %s100, %s101
    %p115 = scmp.eq.s32.totalorder %s15, 3
    %p116 = por %p114, %p115
    %p118 = scmp.ne.s32.totalorder %s101, %s117
    %p119 = scmp.eq.s32.totalorder %s15, 0
    %p120 = por %p118, %p119
    %p121 = scmp.le.s32.totalorder 1, %s9
    %p122 = scmp.lt.s32.totalorder %s9, 5
    %p123 = pnand %p121, %p122
    %p124 = pneg %p123
    // Predicated region
    $region9: #{_lambda_.17} parent=5 // pred_check
      _
    $region10: #{_lambda_.17} parent=5 // pred_check_branch
      %126 = sbr.rel (%p123) target = $region12
    $region11: #{_lambda_.17} parent=5 // pred_region
      %s127 = ssub.s32 %s9, 1
    $region12: #{_lambda_.17} parent=5 // pred_fallthru
      _
    %p128 = scmp.lt.s32.totalorder %s9, 4
    // Predicated region
    $region13: #{_lambda_.17} parent=5 // pred_check
      %p129 = pneg %p128
    $region14: #{_lambda_.17} parent=5 // pred_check_branch
      %131 = sbr.rel (%p129) target = $region16
    $region15: #{_lambda_.17} parent=5 // pred_region
      // Predicated region
      $region17: #{_lambda_.17} parent=15 // pred_check
        %p132 = pneg %p29
      $region18: #{_lambda_.17} parent=15 // pred_check_branch
        %134 = sbr.rel (%p132) target = $region20
      $region19: #{_lambda_.17} parent=15 // pred_region
        %s135 = smul.u32 2, %s9
        %p136 = scmp.lt.s32.totalorder %s135, 7
        %s137 = scalar_select %p136, %s135, 7
        %s138 = scalar_lea.vmem %s0, %s137
        %s139 = smul.u32 2, %s9
      $region20: #{_lambda_.17} parent=15 // pred_fallthru
        _
      // Predicated region
      $region21: #{_lambda_.17} parent=15 // pred_check
        %p140 = pneg %p55
      $region22: #{_lambda_.17} parent=15 // pred_check_branch
        %142 = sbr.rel (%p140) target = $region24
      $region23: #{_lambda_.17} parent=15 // pred_region
        %s143 = smul.u32 2, %s9
        %p144 = scmp.lt.s32.totalorder %s143, 7
        %s145 = scalar_select %p144, %s143, 7
        %s146 = scalar_lea.vmem %s1, %s145
        %s147 = smul.u32 2, %s9
      $region24: #{_lambda_.17} parent=15 // pred_fallthru
        _
      // Predicated region
      $region25: #{_lambda_.17} parent=15 // pred_check
        %p148 = pneg %p81
      $region26: #{_lambda_.17} parent=15 // pred_check_branch
        %150 = sbr.rel (%p148) target = $region28
      $region27: #{_lambda_.17} parent=15 // pred_region
        %s151 = smul.u32 2, %s9
        %p152 = scmp.lt.s32.totalorder %s151, 7
        %s153 = scalar_select %p152, %s151, 7
        %s154 = scalar_lea.vmem %s2, %s153
        %s155 = smul.u32 2, %s9
      $region28: #{_lambda_.17} parent=15 // pred_fallthru
        _
    $region16: #{_lambda_.17} parent=5 // pred_fallthru
      _
    %p156 = scmp.le.s32.totalorder 1, %s9
    %p157 = scmp.lt.s32.totalorder %s9, 5
    %p158 = pnand %p156, %p157
    %p159 = pneg %p158
    // Predicated region
    $region29: #{_lambda_.17} parent=5 // pred_check
      _
    $region30: #{_lambda_.17} parent=5 // pred_check_branch
      %161 = sbr.rel (%p158) target = $region32
    $region31: #{_lambda_.17} parent=5 // pred_region
      %s162 = ssub.s32 %s9, 1
      %s163 = smul.u32 2, %s14
      %p164 = scmp.lt.s32.totalorder %s163, 7
      %s165 = scalar_select %p164, %s163, 7
      %s166 = scalar_lea.vmem %s0, %s165
      %p167 = pneg %p35
      %p168 = pneg %p32
      %s169 = smul.u32 2, %s14
      %p170 = scmp.lt.s32.totalorder %s169, 7
      %s171 = scalar_select %p170, %s169, 7
      %s172 = scalar_lea.vmem %s1, %s171
      %p173 = pneg %p61
      %p174 = pneg %p58
      %s175 = smul.u32 2, %s14
      %p176 = scmp.lt.s32.totalorder %s175, 7
      %s177 = scalar_select %p176, %s175, 7
      %s178 = scalar_lea.vmem %s2, %s177
      %p179 = pneg %p87
      %p180 = pneg %p84
      %p181 = pneg %p113
      %p182 = pneg %p110
      %s183 = smul.u32 2, %s14
      %p184 = scmp.lt.s32.totalorder %s183, 7
      %s185 = scalar_select %p184, %s183, 7
      %s186 = scalar_lea.vmem %s3, %s185
      %s187 = smul.u32 2, %s14
      %p188 = scmp.lt.s32.totalorder %s187, 7
      %s189 = scalar_select %p188, %s187, 7
      %s190 = scalar_lea.vmem %s0, %s189
      %s191 = smul.u32 2, %s14
      %s192 = smul.u32 2, %s14
      %p193 = scmp.lt.s32.totalorder %s192, 7
      %s194 = scalar_select %p193, %s192, 7
      %s195 = scalar_lea.vmem %s1, %s194
      %s196 = smul.u32 2, %s14
      %s197 = smul.u32 2, %s14
      %p198 = scmp.lt.s32.totalorder %s197, 7
      %s199 = scalar_select %p198, %s197, 7
      %s200 = scalar_lea.vmem %s2, %s199
      %s201 = smul.u32 2, %s14
      %s202 = smul.u32 2, %s14
      %p203 = scmp.lt.s32.totalorder %s202, 7
      %s204 = scalar_select %p203, %s202, 7
      %s205 = scalar_lea.vmem %s3, %s204
      %s206 = smul.u32 2, %s14
      %v208 = vld [vmem:[%s190] sm:$0x1]
      %v209 = vld [vmem:[%s190 + $0x1] sm:$0x1]
      %v210 = vld [vmem:[%s195] sm:$0x1]
      %v211 = vld [vmem:[%s195 + $0x1] sm:$0x1]
      %v212 = vld [vmem:[%s200] sm:$0x1]
      %v213 = vld [vmem:[%s200 + $0x1] sm:$0x1]
      %vm214 = vcmask 261120
      %v216 = vsel %vm214, %v208, 0
      %v219 = vsel %vm214, %v210, 0
      %221 = vmatprep.subr.bf16.mxu0 0
      %222 = vmatpush1.bf16.xpose.msra.mxu0 0
      %223 = vmatprep.subr.bf16.mxu0 0
      %224 = vmatpush1.bf16.xpose.msra.mxu0 0
      %225 = vmatprep.subr.bf16.mxu0 0
      %226 = vmatpush1.bf16.xpose.msra.mxu0 0
      %227 = vmatprep.subr.bf16.mxu0 0
      %228 = vmatpush1.bf16.xpose.msra.mxu0 0
      %229 = vmatprep.subr.bf16.mxu0 0
      %230 = vmatpush1.bf16.xpose.msra.mxu0 0
      %231 = vmatprep.subr.bf16.mxu0 0
      %232 = vmatpush1.bf16.xpose.msra.mxu0 0
      %233 = vmatprep.subr.bf16.mxu0 0
      %234 = vmatpush1.bf16.xpose.msra.mxu0 0
      %235 = vmatprep.subr.bf16.mxu0 0
      %236 = vmatpush1.bf16.xpose.msra.mxu0 %v219
      %237 = vmatprep.subr.bf16.mxu0 0
      %238 = vmatpush2.bf16.xpose.msra.mxu0 0
      %239 = vmatprep.subr.bf16.mxu0 0
      %240 = vmatpush2.bf16.xpose.msra.mxu0 0
      %241 = vmatprep.subr.bf16.mxu0 0
      %242 = vmatpush2.bf16.xpose.msra.mxu0 0
      %243 = vmatprep.subr.bf16.mxu0 0
      %244 = vmatpush2.bf16.xpose.msra.mxu0 0
      %245 = vmatprep.subr.bf16.mxu0 0
      %246 = vmatpush2.bf16.xpose.msra.mxu0 0
      %247 = vmatprep.subr.bf16.mxu0 0
      %248 = vmatpush2.bf16.xpose.msra.mxu0 0
      %249 = vmatprep.subr.bf16.mxu0 0
      %250 = vmatpush2.bf16.xpose.msra.mxu0 0
      %251 = vmatprep.subr.bf16.mxu0 0
      %252 = vmatpush2.bf16.xpose.msra.mxu0 0
      %253 = vmatprep.mubr.bf16.mxu0 0
      %254 = vmatmul.mubr.bf16.gmra.mxu0 %v216
      %v255 = vpop.f32.mrf.mxu0
      %v256 = vadd.f32 0.0, %v255
      %v257 = vpop.f32.mrf.mxu0
      %v258 = vpop.f32.mrf.mxu0
      %v259 = vpop.f32.mrf.mxu0
      %260 = vdwg.mxu0
      %v262 = vsel %vm214, %v209, 0
      %v265 = vsel %vm214, %v211, 0
      %267 = vmatprep.subr.bf16.mxu0 0
      %268 = vmatpush1.bf16.xpose.msra.mxu0 0
      %269 = vmatprep.subr.bf16.mxu0 0
      %270 = vmatpush1.bf16.xpose.msra.mxu0 0
      %271 = vmatprep.subr.bf16.mxu0 0
      %272 = vmatpush1.bf16.xpose.msra.mxu0 0
      %273 = vmatprep.subr.bf16.mxu0 0
      %274 = vmatpush1.bf16.xpose.msra.mxu0 0
      %275 = vmatprep.subr.bf16.mxu0 0
      %276 = vmatpush1.bf16.xpose.msra.mxu0 0
      %277 = vmatprep.subr.bf16.mxu0 0
      %278 = vmatpush1.bf16.xpose.msra.mxu0 0
      %279 = vmatprep.subr.bf16.mxu0 0
      %280 = vmatpush1.bf16.xpose.msra.mxu0 0
      %281 = vmatprep.subr.bf16.mxu0 0
      %282 = vmatpush1.bf16.xpose.msra.mxu0 %v265
      %283 = vmatprep.subr.bf16.mxu0 0
      %284 = vmatpush2.bf16.xpose.msra.mxu0 0
      %285 = vmatprep.subr.bf16.mxu0 0
      %286 = vmatpush2.bf16.xpose.msra.mxu0 0
      %287 = vmatprep.subr.bf16.mxu0 0
      %288 = vmatpush2.bf16.xpose.msra.mxu0 0
      %289 = vmatprep.subr.bf16.mxu0 0
      %290 = vmatpush2.bf16.xpose.msra.mxu0 0
      %291 = vmatprep.subr.bf16.mxu0 0
      %292 = vmatpush2.bf16.xpose.msra.mxu0 0
      %293 = vmatprep.subr.bf16.mxu0 0
      %294 = vmatpush2.bf16.xpose.msra.mxu0 0
      %295 = vmatprep.subr.bf16.mxu0 0
      %296 = vmatpush2.bf16.xpose.msra.mxu0 0
      %297 = vmatprep.subr.bf16.mxu0 0
      %298 = vmatpush2.bf16.xpose.msra.mxu0 0
      %299 = vmatprep.mubr.bf16.mxu0 0
      %300 = vmatmul.mubr.bf16.gmra.mxu0 %v262
      %v301 = vpop.f32.mrf.mxu0
      %v302 = vadd.f32 0.0, %v301
      %v303 = vpop.f32.mrf.mxu0
      %v304 = vpop.f32.mrf.mxu0
      %v305 = vpop.f32.mrf.mxu0
      %306 = vdwg.mxu0
      %v307 = vmul.f32 %v256, 0.17677669
      %v308 = vmul.f32 %v302, 0.17677669
      %vm309 = vcmask 9216
      %v310 = vsel %vm309, %v307, -inf
      %311 = vmax.xlane.f32.xlu0 %v310
      %v312 = vpop.xlane.xlu0 %311
      %v313 = vsel %vm309, %v308, -inf
      %314 = vmax.xlane.f32.xlu0 %v313
      %v315 = vpop.xlane.xlu0 %314
      %v316 = vsub.f32 %v307, %v312
      %v317 = vsub.f32 %v308, %v315
      %v318 = vmul.f32 %v316, 1.442695
      %v319 = vpow.pop %v318
      %v320 = vmul.f32 %v317, 1.442695
      %v321 = vpow.pop %v320
      %v322 = vsel %vm309, %v319, 0.0
      %323 = vadd.xlane.f32.xlu0 %v322
      %v324 = vpop.xlane.xlu0 %323
      %v325 = vsel %vm309, %v321, 0.0
      %326 = vadd.xlane.f32.xlu0 %v325
      %v327 = vpop.xlane.xlu0 %326
      %v328 = vrcp.pop %v324
      %v329 = vrcp.pop %v327
      %v330 = vmul.f32 %v319, %v328
      %v331 = vmul.f32 %v321, %v329
      %v332 = vpack.c.bf16 %v330, %v330
      %v333 = vpack.c.bf16 %v331, %v331
      %vm334 = vcmask 15360
      %v336 = vsel %vm334, %v332, 0
      %vm338 = vcmask 1040384
      %v340 = vsel %vm338, %v212, 0
      %342 = vmatprep.subr.bf16.mxu0 0
      %343 = vmatpush1.bf16.msra.mxu0 0
      %344 = vmatprep.subr.bf16.mxu0 0
      %345 = vmatpush1.bf16.msra.mxu0 0
      %346 = vmatprep.subr.bf16.mxu0 0
      %347 = vmatpush1.bf16.msra.mxu0 0
      %348 = vmatprep.subr.bf16.mxu0 0
      %349 = vmatpush1.bf16.msra.mxu0 0
      %350 = vmatprep.subr.bf16.mxu0 0
      %351 = vmatpush1.bf16.msra.mxu0 0
      %352 = vmatprep.subr.bf16.mxu0 0
      %353 = vmatpush1.bf16.msra.mxu0 0
      %354 = vmatprep.subr.bf16.mxu0 0
      %355 = vmatpush1.bf16.msra.mxu0 0
      %356 = vmatprep.subr.bf16.mxu0 0
      %357 = vmatpush1.bf16.msra.mxu0 %v340
      %358 = vmatprep.subr.bf16.mxu0 0
      %359 = vmatpush2.bf16.msra.mxu0 0
      %360 = vmatprep.subr.bf16.mxu0 0
      %361 = vmatpush2.bf16.msra.mxu0 0
      %362 = vmatprep.subr.bf16.mxu0 0
      %363 = vmatpush2.bf16.msra.mxu0 0
      %364 = vmatprep.subr.bf16.mxu0 0
      %365 = vmatpush2.bf16.msra.mxu0 0
      %366 = vmatprep.subr.bf16.mxu0 0
      %367 = vmatpush2.bf16.msra.mxu0 0
      %368 = vmatprep.subr.bf16.mxu0 0
      %369 = vmatpush2.bf16.msra.mxu0 0
      %370 = vmatprep.subr.bf16.mxu0 0
      %371 = vmatpush2.bf16.msra.mxu0 0
      %372 = vmatprep.subr.bf16.mxu0 0
      %373 = vmatpush2.bf16.msra.mxu0 0
      %374 = vmatprep.mubr.bf16.mxu0 0
      %375 = vmatmul.mubr.bf16.gmra.mxu0 %v336
      %v376 = vpop.f32.mrf.mxu0
      %v377 = vadd.f32 0.0, %v376
      %v378 = vpop.f32.mrf.mxu0
      %v379 = vpop.f32.mrf.mxu0
      %v380 = vpop.f32.mrf.mxu0
      %381 = vdwg.mxu0
      %v383 = vsel %vm334, %v333, 0
      %v386 = vsel %vm338, %v213, 0
      %388 = vmatprep.subr.bf16.mxu0 0
      %389 = vmatpush1.bf16.msra.mxu0 0
      %390 = vmatprep.subr.bf16.mxu0 0
      %391 = vmatpush1.bf16.msra.mxu0 0
      %392 = vmatprep.subr.bf16.mxu0 0
      %393 = vmatpush1.bf16.msra.mxu0 0
      %394 = vmatprep.subr.bf16.mxu0 0
      %395 = vmatpush1.bf16.msra.mxu0 0
      %396 = vmatprep.subr.bf16.mxu0 0
      %397 = vmatpush1.bf16.msra.mxu0 0
      %398 = vmatprep.subr.bf16.mxu0 0
      %399 = vmatpush1.bf16.msra.mxu0 0
      %400 = vmatprep.subr.bf16.mxu0 0
      %401 = vmatpush1.bf16.msra.mxu0 0
      %402 = vmatprep.subr.bf16.mxu0 0
      %403 = vmatpush1.bf16.msra.mxu0 %v386
      %404 = vmatprep.subr.bf16.mxu0 0
      %405 = vmatpush2.bf16.msra.mxu0 0
      %406 = vmatprep.subr.bf16.mxu0 0
      %407 = vmatpush2.bf16.msra.mxu0 0
      %408 = vmatprep.subr.bf16.mxu0 0
      %409 = vmatpush2.bf16.msra.mxu0 0
      %410 = vmatprep.subr.bf16.mxu0 0
      %411 = vmatpush2.bf16.msra.mxu0 0
      %412 = vmatprep.subr.bf16.mxu0 0
      %413 = vmatpush2.bf16.msra.mxu0 0
      %414 = vmatprep.subr.bf16.mxu0 0
      %415 = vmatpush2.bf16.msra.mxu0 0
      %416 = vmatprep.subr.bf16.mxu0 0
      %417 = vmatpush2.bf16.msra.mxu0 0
      %418 = vmatprep.subr.bf16.mxu0 0
      %419 = vmatpush2.bf16.msra.mxu0 0
      %420 = vmatprep.mubr.bf16.mxu0 0
      %421 = vmatmul.mubr.bf16.gmra.mxu0 %v383
      %v422 = vpop.f32.mrf.mxu0
      %v423 = vadd.f32 0.0, %v422
      %v424 = vpop.f32.mrf.mxu0
      %v425 = vpop.f32.mrf.mxu0
      %v426 = vpop.f32.mrf.mxu0
      %427 = vdwg.mxu0
      %v430 = vunpack.c.l.s4 1966171168
      %v431 = vunpack.c.0.s8 %v430
      %v432 = vlaneseq
      %v433 = vshrl.u32 %v432, 7
      %v434 = vsub.s32 %v431, %v433
      %v435 = vrot.slane %v208, %v434
      %v437 = vunpack.c.l.s4 1966171168
      %v438 = vunpack.c.0.s8 %v437
      %v439 = vlaneseq
      %v440 = vshrl.u32 %v439, 7
      %v441 = vsub.s32 %v438, %v440
      %v442 = vrot.slane %v435, %v441
      %443 = vrot.lane.b32.xlu0 %v442, 96
      %v444 = vpop.permute.xlu0 %443
      %v447 = vunpack.c.l.s4 1966171168
      %v448 = vunpack.c.0.s8 %v447
      %v449 = vlaneseq
      %v450 = vshrl.u32 %v449, 7
      %v451 = vsub.s32 %v448, %v450
      %v452 = vrot.slane %v210, %v451
      %v454 = vunpack.c.l.s4 1966171168
      %v455 = vunpack.c.0.s8 %v454
      %v456 = vlaneseq
      %v457 = vshrl.u32 %v456, 7
      %v458 = vsub.s32 %v455, %v457
      %v459 = vrot.slane %v452, %v458
      %460 = vrot.lane.b32.xlu0 %v459, 96
      %v461 = vpop.permute.xlu0 %460
      %v463 = vsel %vm214, %v444, 0
      %v466 = vsel %vm214, %v461, 0
      %468 = vmatprep.subr.bf16.mxu0 0
      %469 = vmatpush1.bf16.xpose.msra.mxu0 0
      %470 = vmatprep.subr.bf16.mxu0 0
      %471 = vmatpush1.bf16.xpose.msra.mxu0 0
      %472 = vmatprep.subr.bf16.mxu0 0
      %473 = vmatpush1.bf16.xpose.msra.mxu0 0
      %474 = vmatprep.subr.bf16.mxu0 0
      %475 = vmatpush1.bf16.xpose.msra.mxu0 0
      %476 = vmatprep.subr.bf16.mxu0 0
      %477 = vmatpush1.bf16.xpose.msra.mxu0 0
      %478 = vmatprep.subr.bf16.mxu0 0
      %479 = vmatpush1.bf16.xpose.msra.mxu0 0
      %480 = vmatprep.subr.bf16.mxu0 0
      %481 = vmatpush1.bf16.xpose.msra.mxu0 0
      %482 = vmatprep.subr.bf16.mxu0 0
      %483 = vmatpush1.bf16.xpose.msra.mxu0 %v466
      %484 = vmatprep.subr.bf16.mxu0 0
      %485 = vmatpush2.bf16.xpose.msra.mxu0 0
      %486 = vmatprep.subr.bf16.mxu0 0
      %487 = vmatpush2.bf16.xpose.msra.mxu0 0
      %488 = vmatprep.subr.bf16.mxu0 0
      %489 = vmatpush2.bf16.xpose.msra.mxu0 0
      %490 = vmatprep.subr.bf16.mxu0 0
      %491 = vmatpush2.bf16.xpose.msra.mxu0 0
      %492 = vmatprep.subr.bf16.mxu0 0
      %493 = vmatpush2.bf16.xpose.msra.mxu0 0
      %494 = vmatprep.subr.bf16.mxu0 0
      %495 = vmatpush2.bf16.xpose.msra.mxu0 0
      %496 = vmatprep.subr.bf16.mxu0 0
      %497 = vmatpush2.bf16.xpose.msra.mxu0 0
      %498 = vmatprep.subr.bf16.mxu0 0
      %499 = vmatpush2.bf16.xpose.msra.mxu0 0
      %500 = vmatprep.mubr.bf16.mxu0 0
      %501 = vmatmul.mubr.bf16.gmra.mxu0 %v463
      %v502 = vpop.f32.mrf.mxu0
      %v503 = vadd.f32 0.0, %v502
      %v504 = vpop.f32.mrf.mxu0
      %v505 = vpop.f32.mrf.mxu0
      %v506 = vpop.f32.mrf.mxu0
      %507 = vdwg.mxu0
      %v510 = vunpack.c.l.s4 1966171168
      %v511 = vunpack.c.0.s8 %v510
      %v512 = vlaneseq
      %v513 = vshrl.u32 %v512, 7
      %v514 = vsub.s32 %v511, %v513
      %v515 = vrot.slane %v209, %v514
      %v517 = vunpack.c.l.s4 1966171168
      %v518 = vunpack.c.0.s8 %v517
      %v519 = vlaneseq
      %v520 = vshrl.u32 %v519, 7
      %v521 = vsub.s32 %v518, %v520
      %v522 = vrot.slane %v515, %v521
      %523 = vrot.lane.b32.xlu0 %v522, 96
      %v524 = vpop.permute.xlu0 %523
      %v527 = vunpack.c.l.s4 1966171168
      %v528 = vunpack.c.0.s8 %v527
      %v529 = vlaneseq
      %v530 = vshrl.u32 %v529, 7
      %v531 = vsub.s32 %v528, %v530
      %v532 = vrot.slane %v211, %v531
      %v534 = vunpack.c.l.s4 1966171168
      %v535 = vunpack.c.0.s8 %v534
      %v536 = vlaneseq
      %v537 = vshrl.u32 %v536, 7
      %v538 = vsub.s32 %v535, %v537
      %v539 = vrot.slane %v532, %v538
      %540 = vrot.lane.b32.xlu0 %v539, 96
      %v541 = vpop.permute.xlu0 %540
      %v543 = vsel %vm214, %v524, 0
      %v546 = vsel %vm214, %v541, 0
      %548 = vmatprep.subr.bf16.mxu0 0
      %549 = vmatpush1.bf16.xpose.msra.mxu0 0
      %550 = vmatprep.subr.bf16.mxu0 0
      %551 = vmatpush1.bf16.xpose.msra.mxu0 0
      %552 = vmatprep.subr.bf16.mxu0 0
      %553 = vmatpush1.bf16.xpose.msra.mxu0 0
      %554 = vmatprep.subr.bf16.mxu0 0
      %555 = vmatpush1.bf16.xpose.msra.mxu0 0
      %556 = vmatprep.subr.bf16.mxu0 0
      %557 = vmatpush1.bf16.xpose.msra.mxu0 0
      %558 = vmatprep.subr.bf16.mxu0 0
      %559 = vmatpush1.bf16.xpose.msra.mxu0 0
      %560 = vmatprep.subr.bf16.mxu0 0
      %561 = vmatpush1.bf16.xpose.msra.mxu0 0
      %562 = vmatprep.subr.bf16.mxu0 0
      %563 = vmatpush1.bf16.xpose.msra.mxu0 %v546
      %564 = vmatprep.subr.bf16.mxu0 0
      %565 = vmatpush2.bf16.xpose.msra.mxu0 0
      %566 = vmatprep.subr.bf16.mxu0 0
      %567 = vmatpush2.bf16.xpose.msra.mxu0 0
      %568 = vmatprep.subr.bf16.mxu0 0
      %569 = vmatpush2.bf16.xpose.msra.mxu0 0
      %570 = vmatprep.subr.bf16.mxu0 0
      %571 = vmatpush2.bf16.xpose.msra.mxu0 0
      %572 = vmatprep.subr.bf16.mxu0 0
      %573 = vmatpush2.bf16.xpose.msra.mxu0 0
      %574 = vmatprep.subr.bf16.mxu0 0
      %575 = vmatpush2.bf16.xpose.msra.mxu0 0
      %576 = vmatprep.subr.bf16.mxu0 0
      %577 = vmatpush2.bf16.xpose.msra.mxu0 0
      %578 = vmatprep.subr.bf16.mxu0 0
      %579 = vmatpush2.bf16.xpose.msra.mxu0 0
      %580 = vmatprep.mubr.bf16.mxu0 0
      %581 = vmatmul.mubr.bf16.gmra.mxu0 %v543
      %v582 = vpop.f32.mrf.mxu0
      %v583 = vadd.f32 0.0, %v582
      %v584 = vpop.f32.mrf.mxu0
      %v585 = vpop.f32.mrf.mxu0
      %v586 = vpop.f32.mrf.mxu0
      %587 = vdwg.mxu0
      %v588 = vmul.f32 %v503, 0.17677669
      %v589 = vmul.f32 %v583, 0.17677669
      %v590 = vsel %vm309, %v588, -inf
      %591 = vmax.xlane.f32.xlu0 %v590
      %v592 = vpop.xlane.xlu0 %591
      %v593 = vsel %vm309, %v589, -inf
      %594 = vmax.xlane.f32.xlu0 %v593
      %v595 = vpop.xlane.xlu0 %594
      %v596 = vsub.f32 %v588, %v592
      %v597 = vsub.f32 %v589, %v595
      %v598 = vmul.f32 %v596, 1.442695
      %v599 = vpow.pop %v598
      %v600 = vmul.f32 %v597, 1.442695
      %v601 = vpow.pop %v600
      %v602 = vsel %vm309, %v599, 0.0
      %603 = vadd.xlane.f32.xlu0 %v602
      %v604 = vpop.xlane.xlu0 %603
      %v605 = vsel %vm309, %v601, 0.0
      %606 = vadd.xlane.f32.xlu0 %v605
      %v607 = vpop.xlane.xlu0 %606
      %v608 = vrcp.pop %v604
      %v609 = vrcp.pop %v607
      %v610 = vmul.f32 %v599, %v608
      %v611 = vmul.f32 %v601, %v609
      %v612 = vpack.c.bf16 %v610, %v610
      %v613 = vpack.c.bf16 %v611, %v611
      %v616 = vunpack.c.l.s4 1966171168
      %v617 = vunpack.c.0.s8 %v616
      %v618 = vlaneseq
      %v619 = vshrl.u32 %v618, 7
      %v620 = vsub.s32 %v617, %v619
      %v621 = vrot.slane %v212, %v620
      %v623 = vunpack.c.l.s4 1966171168
      %v624 = vunpack.c.0.s8 %v623
      %v625 = vlaneseq
      %v626 = vshrl.u32 %v625, 7
      %v627 = vsub.s32 %v624, %v626
      %v628 = vrot.slane %v621, %v627
      %629 = vrot.lane.b32.xlu0 %v628, 96
      %v630 = vpop.permute.xlu0 %629
      %v632 = vsel %vm334, %v612, 0
      %v635 = vsel %vm338, %v630, 0
      %637 = vmatprep.subr.bf16.mxu0 0
      %638 = vmatpush1.bf16.msra.mxu0 0
      %639 = vmatprep.subr.bf16.mxu0 0
      %640 = vmatpush1.bf16.msra.mxu0 0
      %641 = vmatprep.subr.bf16.mxu0 0
      %642 = vmatpush1.bf16.msra.mxu0 0
      %643 = vmatprep.subr.bf16.mxu0 0
      %644 = vmatpush1.bf16.msra.mxu0 0
      %645 = vmatprep.subr.bf16.mxu0 0
      %646 = vmatpush1.bf16.msra.mxu0 0
      %647 = vmatprep.subr.bf16.mxu0 0
      %648 = vmatpush1.bf16.msra.mxu0 0
      %649 = vmatprep.subr.bf16.mxu0 0
      %650 = vmatpush1.bf16.msra.mxu0 0
      %651 = vmatprep.subr.bf16.mxu0 0
      %652 = vmatpush1.bf16.msra.mxu0 %v635
      %653 = vmatprep.subr.bf16.mxu0 0
      %654 = vmatpush2.bf16.msra.mxu0 0
      %655 = vmatprep.subr.bf16.mxu0 0
      %656 = vmatpush2.bf16.msra.mxu0 0
      %657 = vmatprep.subr.bf16.mxu0 0
      %658 = vmatpush2.bf16.msra.mxu0 0
      %659 = vmatprep.subr.bf16.mxu0 0
      %660 = vmatpush2.bf16.msra.mxu0 0
      %661 = vmatprep.subr.bf16.mxu0 0
      %662 = vmatpush2.bf16.msra.mxu0 0
      %663 = vmatprep.subr.bf16.mxu0 0
      %664 = vmatpush2.bf16.msra.mxu0 0
      %665 = vmatprep.subr.bf16.mxu0 0
      %666 = vmatpush2.bf16.msra.mxu0 0
      %667 = vmatprep.subr.bf16.mxu0 0
      %668 = vmatpush2.bf16.msra.mxu0 0
      %669 = vmatprep.mubr.bf16.mxu0 0
      %670 = vmatmul.mubr.bf16.gmra.mxu0 %v632
      %v671 = vpop.f32.mrf.mxu0
      %v672 = vadd.f32 0.0, %v671
      %v673 = vpop.f32.mrf.mxu0
      %v674 = vpop.f32.mrf.mxu0
      %v675 = vpop.f32.mrf.mxu0
      %676 = vdwg.mxu0
      %v679 = vunpack.c.l.s4 1966171168
      %v680 = vunpack.c.0.s8 %v679
      %v681 = vlaneseq
      %v682 = vshrl.u32 %v681, 7
      %v683 = vsub.s32 %v680, %v682
      %v684 = vrot.slane %v213, %v683
      %v686 = vunpack.c.l.s4 1966171168
      %v687 = vunpack.c.0.s8 %v686
      %v688 = vlaneseq
      %v689 = vshrl.u32 %v688, 7
      %v690 = vsub.s32 %v687, %v689
      %v691 = vrot.slane %v684, %v690
      %692 = vrot.lane.b32.xlu0 %v691, 96
      %v693 = vpop.permute.xlu0 %692
      %v695 = vsel %vm334, %v613, 0
      %v698 = vsel %vm338, %v693, 0
      %700 = vmatprep.subr.bf16.mxu0 0
      %701 = vmatpush1.bf16.msra.mxu0 0
      %702 = vmatprep.subr.bf16.mxu0 0
      %703 = vmatpush1.bf16.msra.mxu0 0
      %704 = vmatprep.subr.bf16.mxu0 0
      %705 = vmatpush1.bf16.msra.mxu0 0
      %706 = vmatprep.subr.bf16.mxu0 0
      %707 = vmatpush1.bf16.msra.mxu0 0
      %708 = vmatprep.subr.bf16.mxu0 0
      %709 = vmatpush1.bf16.msra.mxu0 0
      %710 = vmatprep.subr.bf16.mxu0 0
      %711 = vmatpush1.bf16.msra.mxu0 0
      %712 = vmatprep.subr.bf16.mxu0 0
      %713 = vmatpush1.bf16.msra.mxu0 0
      %714 = vmatprep.subr.bf16.mxu0 0
      %715 = vmatpush1.bf16.msra.mxu0 %v698
      %716 = vmatprep.subr.bf16.mxu0 0
      %717 = vmatpush2.bf16.msra.mxu0 0
      %718 = vmatprep.subr.bf16.mxu0 0
      %719 = vmatpush2.bf16.msra.mxu0 0
      %720 = vmatprep.subr.bf16.mxu0 0
      %721 = vmatpush2.bf16.msra.mxu0 0
      %722 = vmatprep.subr.bf16.mxu0 0
      %723 = vmatpush2.bf16.msra.mxu0 0
      %724 = vmatprep.subr.bf16.mxu0 0
      %725 = vmatpush2.bf16.msra.mxu0 0
      %726 = vmatprep.subr.bf16.mxu0 0
      %727 = vmatpush2.bf16.msra.mxu0 0
      %728 = vmatprep.subr.bf16.mxu0 0
      %729 = vmatpush2.bf16.msra.mxu0 0
      %730 = vmatprep.subr.bf16.mxu0 0
      %731 = vmatpush2.bf16.msra.mxu0 0
      %732 = vmatprep.mubr.bf16.mxu0 0
      %733 = vmatmul.mubr.bf16.gmra.mxu0 %v695
      %v734 = vpop.f32.mrf.mxu0
      %v735 = vadd.f32 0.0, %v734
      %v736 = vpop.f32.mrf.mxu0
      %v737 = vpop.f32.mrf.mxu0
      %v738 = vpop.f32.mrf.mxu0
      %739 = vdwg.mxu0
      %742 = vrot.lane.b32.xlu0 %v672, 32
      %v743 = vpop.permute.xlu0 %742
      %744 = vrot.lane.b32.xlu0 %v735, 32
      %v745 = vpop.permute.xlu0 %744
      %v748 = vsel %vm214, %v377, %v743
      %v749 = vsel %vm214, %v423, %v745
      %v750 = vpack.c.bf16 %v748, %v748
      %v751 = vpack.c.bf16 %v749, %v749
      %vm752 = vcmask 516096
      %753 = vst.msk [vmem:[%s205] sm:$0x1] %vm752, %v750
      %754 = vst.msk [vmem:[%s205 + $0x1] sm:$0x1] %vm752, %v751
      %s755 = smul.u32 2, %s14
      %p756 = scmp.lt.s32.totalorder %s755, 7
      %s757 = scalar_select %p756, %s755, 7
      %s758 = scalar_lea.vmem %s3, %s757
      // Predicated region
      $region33: #{_lambda_.17} parent=31 // pred_check
        %p759 = pneg %p110
      $region34: #{_lambda_.17} parent=31 // pred_check_branch
        %761 = sbr.rel (%p759) target = $region36
      $region35: #{_lambda_.17} parent=31 // pred_region
        %s762 = smul.u32 2, %s14
      $region36: #{_lambda_.17} parent=31 // pred_fallthru
        _
    $region32: #{_lambda_.17} parent=5 // pred_fallthru
      _
    %p763 = scmp.le.s32.totalorder 2, %s9
    // Predicated region
    $region37: #{_lambda_.17} parent=5 // pred_check
      %p764 = pneg %p763
    $region38: #{_lambda_.17} parent=5 // pred_check_branch
      %766 = sbr.rel (%p764) target = $region40
    $region39: #{_lambda_.17} parent=5 // pred_region
      %s767 = ssub.s32 %s9, 2
      // Predicated region
      $region41: #{_lambda_.17} parent=39 // pred_check
        %p768 = pneg %p116
      $region42: #{_lambda_.17} parent=39 // pred_check_branch
        %770 = sbr.rel (%p768) target = $region44
      $region43: #{_lambda_.17} parent=39 // pred_region
        %s771 = smul.u32 2, %s15
        %p772 = scmp.lt.s32.totalorder %s771, 7
        %s773 = scalar_select %p772, %s771, 7
        %s774 = scalar_lea.vmem %s3, %s773
      $region44: #{_lambda_.17} parent=39 // pred_fallthru
        _
    $region40: #{_lambda_.17} parent=5 // pred_fallthru
      _
  $region6: #{_lambda_.17} parent=0 // loop_footer
    %s13 = sadd.s32 1, %s9
  $region7: #{_lambda_.17} parent=0 // loop_footer_branch
    %8 = sbr.rel target = $region3
  $region8: #{_lambda_.17} parent=0 // loop_exit
    _

// kernel: _lambda_.22
$region0: #{_lambda_.22}
  #allocation0 [shape = 'u32[]', space=smem, size = 0x4, offset = 0x4, fixed_abs, tag = 'smem constant byte address 0x4 - core index']
  #allocation1 [shape = 'u32[144,128]{1,0:T(1,128)}', space=vmem, size = 0x12000, scoped, tag = 'internal scratch']
  #allocation2 [shape = 'bf16[16,64]{1,0:T(8,128)(2,1)}', space=vmem, size = 0x1000, scoped, tag = 'scratch operand']
  #allocation3 [shape = 'f32[16,64]{1,0:T(8,128)}', space=vmem, size = 0x2000, scoped, tag = 'scratch operand']
  %s0 = inlined_call_operand.vmem [shape: f32[16,64], index: 0, kind: input, shape index: {}]
  %s1 = inlined_call_operand.vmem [shape: f32[1,64], index: 1, kind: input, shape index: {}]
  %s2 = inlined_call_operand.vmem [shape: f32[1,64], index: 2, kind: input, shape index: {}]
  %s3 = inlined_call_operand.vmem [shape: bf16[64,256], index: 3, kind: input, shape index: {}]
  %s4 = inlined_call_operand.vmem [shape: f32[1,256], index: 4, kind: input, shape index: {}]
  %s5 = inlined_call_operand.vmem [shape: bf16[64,256], index: 5, kind: input, shape index: {}]
  %s6 = inlined_call_operand.vmem [shape: f32[1,256], index: 6, kind: input, shape index: {}]
  %s7 = inlined_call_operand.vmem [shape: bf16[256,64], index: 7, kind: input, shape index: {}]
  %s8 = inlined_call_operand.vmem [shape: f32[1,64], index: 8, kind: input, shape index: {}]
  %s9 = inlined_call_operand.vmem [shape: f32[16,64], index: 9, kind: output, shape index: {}]
  %s10 = sld [smem:[#allocation0]]
  $region54: #{_lambda_.22} parent=0
    _
  %s12 = ssub.s32 1, %s10
  %s13 = scalar_select 0, %s12, %s10
  // Predicated region
  $region2: #{_lambda_.22} parent=0 // pred_check
    _
  $region3: #{_lambda_.22} parent=0 // pred_check_branch
    %15 = sbr.rel (0) target = $region5
  $region4: #{_lambda_.22} parent=0 // pred_region
    _
  $region5: #{_lambda_.22} parent=0 // pred_fallthru
    _
  // Predicated region
  $region6: #{_lambda_.22} parent=0 // pred_check
    _
  $region7: #{_lambda_.22} parent=0 // pred_check_branch
    %17 = sbr.rel (0) target = $region9
  $region8: #{_lambda_.22} parent=0 // pred_region
    _
  $region9: #{_lambda_.22} parent=0 // pred_fallthru
    _
  // Predicated region
  $region10: #{_lambda_.22} parent=0 // pred_check
    _
  $region11: #{_lambda_.22} parent=0 // pred_check_branch
    %19 = sbr.rel (0) target = $region13
  $region12: #{_lambda_.22} parent=0 // pred_region
    _
  $region13: #{_lambda_.22} parent=0 // pred_fallthru
    _
  // Predicated region
  $region14: #{_lambda_.22} parent=0 // pred_check
    _
  $region15: #{_lambda_.22} parent=0 // pred_check_branch
    %21 = sbr.rel (0) target = $region17
  $region16: #{_lambda_.22} parent=0 // pred_region
    _
  $region17: #{_lambda_.22} parent=0 // pred_fallthru
    _
  // Predicated region
  $region18: #{_lambda_.22} parent=0 // pred_check
    _
  $region19: #{_lambda_.22} parent=0 // pred_check_branch
    %23 = sbr.rel (0) target = $region21
  $region20: #{_lambda_.22} parent=0 // pred_region
    _
  $region21: #{_lambda_.22} parent=0 // pred_fallthru
    _
  // Predicated region
  $region22: #{_lambda_.22} parent=0 // pred_check
    _
  $region23: #{_lambda_.22} parent=0 // pred_check_branch
    %25 = sbr.rel (0) target = $region25
  $region24: #{_lambda_.22} parent=0 // pred_region
    _
  $region25: #{_lambda_.22} parent=0 // pred_fallthru
    _
  // Predicated region
  $region26: #{_lambda_.22} parent=0 // pred_check
    _
  $region27: #{_lambda_.22} parent=0 // pred_check_branch
    %27 = sbr.rel (0) target = $region29
  $region28: #{_lambda_.22} parent=0 // pred_region
    _
  $region29: #{_lambda_.22} parent=0 // pred_fallthru
    _
  // Predicated region
  $region30: #{_lambda_.22} parent=0 // pred_check
    _
  $region31: #{_lambda_.22} parent=0 // pred_check_branch
    %29 = sbr.rel (0) target = $region33
  $region32: #{_lambda_.22} parent=0 // pred_region
    _
  $region33: #{_lambda_.22} parent=0 // pred_fallthru
    _
  // Predicated region
  $region34: #{_lambda_.22} parent=0 // pred_check
    _
  $region35: #{_lambda_.22} parent=0 // pred_check_branch
    %31 = sbr.rel (0) target = $region37
  $region36: #{_lambda_.22} parent=0 // pred_region
    _
  $region37: #{_lambda_.22} parent=0 // pred_fallthru
    _
  %p33 = scmp.eq.s32.totalorder 0, 0
  // Predicated region
  $region38: #{_lambda_.22} parent=0 // pred_check
    %p34 = pneg %p33
  $region39: #{_lambda_.22} parent=0 // pred_check_branch
    %36 = sbr.rel (%p34) target = $region41
  $region40: #{_lambda_.22} parent=0 // pred_region
    %v37 = vld [vmem:[%s0] sm:$0xff]
    %v38 = vld [vmem:[%s0 + $0x8] sm:$0xff]
    %v39 = vld [vmem:[%s1] sm:$0x1]
    %v40 = vld [vmem:[%s2] sm:$0x1]
    %vm41 = vcmask 523264
    %v42 = vsel %vm41, %v37, 0.0
    %43 = vadd.xlane.f32.xlu0 %v42
    %v44 = vpop.xlane.xlu0 %43
    %v45 = vsel %vm41, %v38, 0.0
    %46 = vadd.xlane.f32.xlu0 %v45
    %v47 = vpop.xlane.xlu0 %46
    %v48 = vrcp.pop 64.0
    %v49 = vmul.f32 %v44, %v48
    %v50 = vmul.f32 %v47, %v48
    %v51 = vsub.f32 %v37, %v49
    %v52 = vsub.f32 %v38, %v50
    %v53 = vmul.f32 %v51, %v51
    %v54 = vmul.f32 %v52, %v52
    %v55 = vsel %vm41, %v53, 0.0
    %56 = vadd.xlane.f32.xlu0 %v55
    %v57 = vpop.xlane.xlu0 %56
    %v58 = vsel %vm41, %v54, 0.0
    %59 = vadd.xlane.f32.xlu0 %v58
    %v60 = vpop.xlane.xlu0 %59
    %v61 = vmul.f32 %v57, %v48
    %v62 = vmul.f32 %v60, %v48
    %v63 = vadd.f32 %v61, 1e-05
    %v64 = vadd.f32 %v62, 1e-05
    %v65 = vrsqrt.pop %v63
    %v66 = vrsqrt.pop %v64
    %v67 = vmul.f32 %v51, %v65
    %v68 = vmul.f32 %v52, %v66
    %v70 = vlaneseq
    %v71 = vshrl.u32 %v70, 7
    %v72 = vsub.s32 0, %v71
    %v73 = vrot.slane %v39, %v72
    %v75 = vmul.f32 %v67, %v73
    %v76 = vmul.f32 %v68, %v73
    %v78 = vlaneseq
    %v79 = vshrl.u32 %v78, 7
    %v80 = vsub.s32 0, %v79
    %v81 = vrot.slane %v40, %v80
    %v83 = vadd.f32 %v75, %v81
    %v84 = vadd.f32 %v76, %v81
    %v85 = vpack.c.bf16 %v84, %v83
    %v87 = vunpack.c.l.b16 %v85
    %v88 = vunpack.c.h.b16 %v85
    %v89 = vpack.c.b16 %v87, %v87
    %v90 = vpack.c.b16 %v88, %v88
    %vm93 = vcmask 519168
    %94 = vst.msk [vmem:[#allocation2] sm:$0xf] %vm93, %v89
    %95 = vst.msk [vmem:[#allocation2 + $0x4] sm:$0xf] %vm93, %v90
    %96 = vst.msk [vmem:[#allocation3] sm:$0xff] %vm41, 0.0
    %97 = vst.msk [vmem:[#allocation3 + $0x8] sm:$0xff] %vm41, 0.0
  $region41: #{_lambda_.22} parent=0 // pred_fallthru
    _
  %v98 = vld [vmem:[#allocation2] sm:$0xf]
  %v99 = vld [vmem:[#allocation2 + $0x4] sm:$0xf]
  %v100 = vld [vmem:[%s3] sm:$0xff]
  %v101 = vld [vmem:[%s3 + $0x8] sm:$0xff]
  %v102 = vld [vmem:[%s3 + $0x10] sm:$0xff]
  %v103 = vld [vmem:[%s3 + $0x18] sm:$0xff]
  %v104 = vld [vmem:[%s3 + $0x20] sm:$0xff]
  %v105 = vld [vmem:[%s3 + $0x28] sm:$0xff]
  %v106 = vld [vmem:[%s3 + $0x30] sm:$0xff]
  %v107 = vld [vmem:[%s3 + $0x38] sm:$0xff]
  %v108 = vld [vmem:[%s4] sm:$0x3]
  %v110 = vlaneseq
  %v111 = vshrl.u32 %v110, 7
  %v112 = vsub.s32 0, %v111
  %v113 = vrot.slane %v108, %v112
  %v114 = vlaneseq
  %v115 = vshrl.u32 %v114, 7
  %v116 = vsub.s32 1, %v115
  %v117 = vrot.slane %v108, %v116
  %v122 = vunpack.c.l.b16 %v98
  %v123 = vunpack.c.l.b16 %v99
  %v124 = vpack.c.b16 %v123, %v122
  %v133 = vunpack.c.l.b16 %v100
  %v134 = vunpack.c.h.b16 %v100
  %v135 = vunpack.c.l.b16 %v101
  %v136 = vunpack.c.h.b16 %v101
  %v137 = vunpack.c.l.b16 %v102
  %v138 = vunpack.c.h.b16 %v102
  %v139 = vunpack.c.l.b16 %v103
  %v140 = vunpack.c.h.b16 %v103
  %v141 = vunpack.c.l.b16 %v104
  %v142 = vunpack.c.h.b16 %v104
  %v143 = vunpack.c.l.b16 %v105
  %v144 = vunpack.c.h.b16 %v105
  %v145 = vunpack.c.l.b16 %v106
  %v146 = vunpack.c.h.b16 %v106
  %v147 = vunpack.c.l.b16 %v107
  %v148 = vunpack.c.h.b16 %v107
  %v149 = vpack.c.b16 %v135, %v133
  %v150 = vpack.c.b16 %v136, %v134
  %v151 = vpack.c.b16 %v139, %v137
  %v152 = vpack.c.b16 %v140, %v138
  %v153 = vpack.c.b16 %v143, %v141
  %v154 = vpack.c.b16 %v144, %v142
  %v155 = vpack.c.b16 %v147, %v145
  %v156 = vpack.c.b16 %v148, %v146
  %vm165 = vcmask 523264
  %v167 = vsel %vm165, %v124, 0
  %169 = vmatprep.subr.bf16.mxu0 0
  %170 = vmatpush1.bf16.msra.mxu0 0
  %171 = vmatprep.subr.bf16.mxu0 0
  %172 = vmatpush1.bf16.msra.mxu0 0
  %173 = vmatprep.subr.bf16.mxu0 0
  %174 = vmatpush1.bf16.msra.mxu0 0
  %175 = vmatprep.subr.bf16.mxu0 0
  %176 = vmatpush1.bf16.msra.mxu0 0
  %177 = vmatprep.subr.bf16.mxu0 %v156
  %178 = vmatpush1.bf16.msra.mxu0 %v155
  %179 = vmatprep.subr.bf16.mxu0 %v154
  %180 = vmatpush1.bf16.msra.mxu0 %v153
  %181 = vmatprep.subr.bf16.mxu0 %v152
  %182 = vmatpush1.bf16.msra.mxu0 %v151
  %183 = vmatprep.subr.bf16.mxu0 %v150
  %184 = vmatpush1.bf16.msra.mxu0 %v149
  %185 = vmatprep.subr.bf16.mxu0 0
  %186 = vmatpush2.bf16.msra.mxu0 0
  %187 = vmatprep.subr.bf16.mxu0 0
  %188 = vmatpush2.bf16.msra.mxu0 0
  %189 = vmatprep.subr.bf16.mxu0 0
  %190 = vmatpush2.bf16.msra.mxu0 0
  %191 = vmatprep.subr.bf16.mxu0 0
  %192 = vmatpush2.bf16.msra.mxu0 0
  %193 = vmatprep.subr.bf16.mxu0 0
  %194 = vmatpush2.bf16.msra.mxu0 0
  %195 = vmatprep.subr.bf16.mxu0 0
  %196 = vmatpush2.bf16.msra.mxu0 0
  %197 = vmatprep.subr.bf16.mxu0 0
  %198 = vmatpush2.bf16.msra.mxu0 0
  %199 = vmatprep.subr.bf16.mxu0 0
  %200 = vmatpush2.bf16.msra.mxu0 0
  %201 = vmatprep.mubr.bf16.mxu0 0
  %202 = vmatmul.mubr.bf16.gmra.mxu0 %v167
  %v203 = vpop.f32.mrf.mxu0
  %v204 = vadd.f32 %v113, %v203
  %v205 = vpop.f32.mrf.mxu0
  %v206 = vadd.f32 %v117, %v205
  %v207 = vpop.f32.mrf.mxu0
  %v208 = vadd.f32 %v113, %v207
  %v209 = vpop.f32.mrf.mxu0
  %v210 = vadd.f32 %v117, %v209
  %211 = vdwg.mxu0
  %v212 = vld [vmem:[%s5] sm:$0xff]
  %v213 = vld [vmem:[%s5 + $0x8] sm:$0xff]
  %v214 = vld [vmem:[%s5 + $0x10] sm:$0xff]
  %v215 = vld [vmem:[%s5 + $0x18] sm:$0xff]
  %v216 = vld [vmem:[%s5 + $0x20] sm:$0xff]
  %v217 = vld [vmem:[%s5 + $0x28] sm:$0xff]
  %v218 = vld [vmem:[%s5 + $0x30] sm:$0xff]
  %v219 = vld [vmem:[%s5 + $0x38] sm:$0xff]
  %v220 = vld [vmem:[%s6] sm:$0x3]
  %v222 = vlaneseq
  %v223 = vshrl.u32 %v222, 7
  %v224 = vsub.s32 0, %v223
  %v225 = vrot.slane %v220, %v224
  %v226 = vlaneseq
  %v227 = vshrl.u32 %v226, 7
  %v228 = vsub.s32 1, %v227
  %v229 = vrot.slane %v220, %v228
  %v240 = vunpack.c.l.b16 %v212
  %v241 = vunpack.c.h.b16 %v212
  %v242 = vunpack.c.l.b16 %v213
  %v243 = vunpack.c.h.b16 %v213
  %v244 = vunpack.c.l.b16 %v214
  %v245 = vunpack.c.h.b16 %v214
  %v246 = vunpack.c.l.b16 %v215
  %v247 = vunpack.c.h.b16 %v215
  %v248 = vunpack.c.l.b16 %v216
  %v249 = vunpack.c.h.b16 %v216
  %v250 = vunpack.c.l.b16 %v217
  %v251 = vunpack.c.h.b16 %v217
  %v252 = vunpack.c.l.b16 %v218
  %v253 = vunpack.c.h.b16 %v218
  %v254 = vunpack.c.l.b16 %v219
  %v255 = vunpack.c.h.b16 %v219
  %v256 = vpack.c.b16 %v242, %v240
  %v257 = vpack.c.b16 %v243, %v241
  %v258 = vpack.c.b16 %v246, %v244
  %v259 = vpack.c.b16 %v247, %v245
  %v260 = vpack.c.b16 %v250, %v248
  %v261 = vpack.c.b16 %v251, %v249
  %v262 = vpack.c.b16 %v254, %v252
  %v263 = vpack.c.b16 %v255, %v253
  %272 = vmatprep.subr.bf16.mxu0 0
  %273 = vmatpush1.bf16.msra.mxu0 0
  %274 = vmatprep.subr.bf16.mxu0 0
  %275 = vmatpush1.bf16.msra.mxu0 0
  %276 = vmatprep.subr.bf16.mxu0 0
  %277 = vmatpush1.bf16.msra.mxu0 0
  %278 = vmatprep.subr.bf16.mxu0 0
  %279 = vmatpush1.bf16.msra.mxu0 0
  %280 = vmatprep.subr.bf16.mxu0 %v263
  %281 = vmatpush1.bf16.msra.mxu0 %v262
  %282 = vmatprep.subr.bf16.mxu0 %v261
  %283 = vmatpush1.bf16.msra.mxu0 %v260
  %284 = vmatprep.subr.bf16.mxu0 %v259
  %285 = vmatpush1.bf16.msra.mxu0 %v258
  %286 = vmatprep.subr.bf16.mxu0 %v257
  %287 = vmatpush1.bf16.msra.mxu0 %v256
  %288 = vmatprep.subr.bf16.mxu0 0
  %289 = vmatpush2.bf16.msra.mxu0 0
  %290 = vmatprep.subr.bf16.mxu0 0
  %291 = vmatpush2.bf16.msra.mxu0 0
  %292 = vmatprep.subr.bf16.mxu0 0
  %293 = vmatpush2.bf16.msra.mxu0 0
  %294 = vmatprep.subr.bf16.mxu0 0
  %295 = vmatpush2.bf16.msra.mxu0 0
  %296 = vmatprep.subr.bf16.mxu0 0
  %297 = vmatpush2.bf16.msra.mxu0 0
  %298 = vmatprep.subr.bf16.mxu0 0
  %299 = vmatpush2.bf16.msra.mxu0 0
  %300 = vmatprep.subr.bf16.mxu0 0
  %301 = vmatpush2.bf16.msra.mxu0 0
  %302 = vmatprep.subr.bf16.mxu0 0
  %303 = vmatpush2.bf16.msra.mxu0 0
  %304 = vmatprep.mubr.bf16.mxu0 0
  %305 = vmatmul.mubr.bf16.gmra.mxu0 %v167
  %v306 = vpop.f32.mrf.mxu0
  %v307 = vadd.f32 %v225, %v306
  %v308 = vpop.f32.mrf.mxu0
  %v309 = vadd.f32 %v229, %v308
  %v310 = vpop.f32.mrf.mxu0
  %v311 = vadd.f32 %v225, %v310
  %v312 = vpop.f32.mrf.mxu0
  %v313 = vadd.f32 %v229, %v312
  %314 = vdwg.mxu0
  %v315 = vmul.f32 %v307, 0.5
  %v316 = vmul.f32 %v309, 0.5
  %v317 = vmul.f32 %v311, 0.5
  %v318 = vmul.f32 %v313, 0.5
  %v319 = vmul.f32 %v307, 0.044715
  %v320 = vmul.f32 %v309, 0.044715
  %v321 = vmul.f32 %v311, 0.044715
  %v322 = vmul.f32 %v313, 0.044715
  %v323 = vmul.f32 %v319, %v307
  %v324 = vmul.f32 %v320, %v309
  %v325 = vmul.f32 %v321, %v311
  %v326 = vmul.f32 %v322, %v313
  %v327 = vmul.f32 %v323, %v307
  %v328 = vmul.f32 %v324, %v309
  %v329 = vmul.f32 %v325, %v311
  %v330 = vmul.f32 %v326, %v313
  %v331 = vadd.f32 %v307, %v327
  %v332 = vadd.f32 %v309, %v328
  %v333 = vadd.f32 %v311, %v329
  %v334 = vadd.f32 %v313, %v330
  %v335 = vmul.f32 %v331, 0.7978846
  %v336 = vmul.f32 %v332, 0.7978846
  %v337 = vmul.f32 %v333, 0.7978846
  %v338 = vmul.f32 %v334, 0.7978846
  %v339 = vtanh.pop %v335
  %v340 = vtanh.pop %v336
  %v341 = vtanh.pop %v337
  %v342 = vtanh.pop %v338
  %v343 = vadd.f32 %v339, 1.0
  %v344 = vadd.f32 %v340, 1.0
  %v345 = vadd.f32 %v341, 1.0
  %v346 = vadd.f32 %v342, 1.0
  %v347 = vmul.f32 %v315, %v343
  %v348 = vmul.f32 %v316, %v344
  %v349 = vmul.f32 %v317, %v345
  %v350 = vmul.f32 %v318, %v346
  %v351 = vmul.f32 %v204, %v347
  %v352 = vmul.f32 %v206, %v348
  %v353 = vmul.f32 %v208, %v349
  %v354 = vmul.f32 %v210, %v350
  %v355 = vpack.c.bf16 %v353, %v351
  %v356 = vpack.c.bf16 %v354, %v352
  %v357 = vld [vmem:[#allocation3] sm:$0xff]
  %v358 = vld [vmem:[#allocation3 + $0x8] sm:$0xff]
  %v359 = vld [vmem:[%s7] sm:$0xf]
  %v360 = vld [vmem:[%s7 + $0x4] sm:$0xf]
  %v361 = vld [vmem:[%s7 + $0x8] sm:$0xf]
  %v362 = vld [vmem:[%s7 + $0xc] sm:$0xf]
  %v363 = vld [vmem:[%s7 + $0x10] sm:$0xf]
  %v364 = vld [vmem:[%s7 + $0x14] sm:$0xf]
  %v365 = vld [vmem:[%s7 + $0x18] sm:$0xf]
  %v366 = vld [vmem:[%s7 + $0x1c] sm:$0xf]
  %v367 = vld [vmem:[%s7 + $0x20] sm:$0xf]
  %v368 = vld [vmem:[%s7 + $0x24] sm:$0xf]
  %v369 = vld [vmem:[%s7 + $0x28] sm:$0xf]
  %v370 = vld [vmem:[%s7 + $0x2c] sm:$0xf]
  %v371 = vld [vmem:[%s7 + $0x30] sm:$0xf]
  %v372 = vld [vmem:[%s7 + $0x34] sm:$0xf]
  %v373 = vld [vmem:[%s7 + $0x38] sm:$0xf]
  %v374 = vld [vmem:[%s7 + $0x3c] sm:$0xf]
  %v375 = vld [vmem:[%s7 + $0x40] sm:$0xf]
  %v376 = vld [vmem:[%s7 + $0x44] sm:$0xf]
  %v377 = vld [vmem:[%s7 + $0x48] sm:$0xf]
  %v378 = vld [vmem:[%s7 + $0x4c] sm:$0xf]
  %v379 = vld [vmem:[%s7 + $0x50] sm:$0xf]
  %v380 = vld [vmem:[%s7 + $0x54] sm:$0xf]
  %v381 = vld [vmem:[%s7 + $0x58] sm:$0xf]
  %v382 = vld [vmem:[%s7 + $0x5c] sm:$0xf]
  %v383 = vld [vmem:[%s7 + $0x60] sm:$0xf]
  %v384 = vld [vmem:[%s7 + $0x64] sm:$0xf]
  %v385 = vld [vmem:[%s7 + $0x68] sm:$0xf]
  %v386 = vld [vmem:[%s7 + $0x6c] sm:$0xf]
  %v387 = vld [vmem:[%s7 + $0x70] sm:$0xf]
  %v388 = vld [vmem:[%s7 + $0x74] sm:$0xf]
  %v389 = vld [vmem:[%s7 + $0x78] sm:$0xf]
  %v390 = vld [vmem:[%s7 + $0x7c] sm:$0xf]
  %v423 = vunpack.c.l.b16 %v359
  %v424 = vunpack.c.l.b16 %v360
  %v425 = vunpack.c.l.b16 %v361
  %v426 = vunpack.c.l.b16 %v362
  %v427 = vunpack.c.l.b16 %v363
  %v428 = vunpack.c.l.b16 %v364
  %v429 = vunpack.c.l.b16 %v365
  %v430 = vunpack.c.l.b16 %v366
  %v431 = vunpack.c.l.b16 %v367
  %v432 = vunpack.c.l.b16 %v368
  %v433 = vunpack.c.l.b16 %v369
  %v434 = vunpack.c.l.b16 %v370
  %v435 = vunpack.c.l.b16 %v371
  %v436 = vunpack.c.l.b16 %v372
  %v437 = vunpack.c.l.b16 %v373
  %v438 = vunpack.c.l.b16 %v374
  %v439 = vunpack.c.l.b16 %v375
  %v440 = vunpack.c.l.b16 %v376
  %v441 = vunpack.c.l.b16 %v377
  %v442 = vunpack.c.l.b16 %v378
  %v443 = vunpack.c.l.b16 %v379
  %v444 = vunpack.c.l.b16 %v380
  %v445 = vunpack.c.l.b16 %v381
  %v446 = vunpack.c.l.b16 %v382
  %v447 = vunpack.c.l.b16 %v383
  %v448 = vunpack.c.l.b16 %v384
  %v449 = vunpack.c.l.b16 %v385
  %v450 = vunpack.c.l.b16 %v386
  %v451 = vunpack.c.l.b16 %v387
  %v452 = vunpack.c.l.b16 %v388
  %v453 = vunpack.c.l.b16 %v389
  %v454 = vunpack.c.l.b16 %v390
  %v455 = vpack.c.b16 %v424, %v423
  %v456 = vpack.c.b16 %v426, %v425
  %v457 = vpack.c.b16 %v428, %v427
  %v458 = vpack.c.b16 %v430, %v429
  %v459 = vpack.c.b16 %v432, %v431
  %v460 = vpack.c.b16 %v434, %v433
  %v461 = vpack.c.b16 %v436, %v435
  %v462 = vpack.c.b16 %v438, %v437
  %v463 = vpack.c.b16 %v440, %v439
  %v464 = vpack.c.b16 %v442, %v441
  %v465 = vpack.c.b16 %v444, %v443
  %v466 = vpack.c.b16 %v446, %v445
  %v467 = vpack.c.b16 %v448, %v447
  %v468 = vpack.c.b16 %v450, %v449
  %v469 = vpack.c.b16 %v452, %v451
  %v470 = vpack.c.b16 %v454, %v453
  %487 = vmatprep.subr.bf16.mxu0 0
  %488 = vmatpush1.bf16.msra.mxu0 %v462
  %489 = vmatprep.subr.bf16.mxu0 0
  %490 = vmatpush1.bf16.msra.mxu0 %v461
  %491 = vmatprep.subr.bf16.mxu0 0
  %492 = vmatpush1.bf16.msra.mxu0 %v460
  %493 = vmatprep.subr.bf16.mxu0 0
  %494 = vmatpush1.bf16.msra.mxu0 %v459
  %495 = vmatprep.subr.bf16.mxu0 0
  %496 = vmatpush1.bf16.msra.mxu0 %v458
  %497 = vmatprep.subr.bf16.mxu0 0
  %498 = vmatpush1.bf16.msra.mxu0 %v457
  %499 = vmatprep.subr.bf16.mxu0 0
  %500 = vmatpush1.bf16.msra.mxu0 %v456
  %501 = vmatprep.subr.bf16.mxu0 0
  %502 = vmatpush1.bf16.msra.mxu0 %v455
  %503 = vmatprep.subr.bf16.mxu0 0
  %504 = vmatpush2.bf16.msra.mxu0 %v470
  %505 = vmatprep.subr.bf16.mxu0 0
  %506 = vmatpush2.bf16.msra.mxu0 %v469
  %507 = vmatprep.subr.bf16.mxu0 0
  %508 = vmatpush2.bf16.msra.mxu0 %v468
  %509 = vmatprep.subr.bf16.mxu0 0
  %510 = vmatpush2.bf16.msra.mxu0 %v467
  %511 = vmatprep.subr.bf16.mxu0 0
  %512 = vmatpush2.bf16.msra.mxu0 %v466
  %513 = vmatprep.subr.bf16.mxu0 0
  %514 = vmatpush2.bf16.msra.mxu0 %v465
  %515 = vmatprep.subr.bf16.mxu0 0
  %516 = vmatpush2.bf16.msra.mxu0 %v464
  %517 = vmatprep.subr.bf16.mxu0 0
  %518 = vmatpush2.bf16.msra.mxu0 %v463
  %519 = vmatprep.mubr.bf16.mxu0 %v356
  %520 = vmatmul.mubr.bf16.gmra.mxu0 %v355
  %v521 = vpop.f32.mrf.mxu0
  %v522 = vadd.f32 0.0, %v521
  %v523 = vpop.f32.mrf.mxu0
  %v524 = vpop.f32.mrf.mxu0
  %v525 = vadd.f32 0.0, %v524
  %v526 = vpop.f32.mrf.mxu0
  %527 = vdwg.mxu0
  %v528 = vadd.f32 %v357, %v522
  %v529 = vadd.f32 %v358, %v525
  %530 = vst.msk [vmem:[#allocation3] sm:$0xff] %vm165, %v528
  %531 = vst.msk [vmem:[#allocation3 + $0x8] sm:$0xff] %vm165, %v529
  // Predicated region
  $region42: #{_lambda_.22} parent=0 // pred_check
    %p532 = pneg %p33
  $region43: #{_lambda_.22} parent=0 // pred_check_branch
    %534 = sbr.rel (%p532) target = $region45
  $region44: #{_lambda_.22} parent=0 // pred_region
    %v535 = vld [vmem:[#allocation3] sm:$0xff]
    %v536 = vld [vmem:[#allocation3 + $0x8] sm:$0xff]
    %v537 = vld [vmem:[%s8] sm:$0x1]
    %v539 = vlaneseq
    %v540 = vshrl.u32 %v539, 7
    %v541 = vsub.s32 0, %v540
    %v542 = vrot.slane %v537, %v541
    %v544 = vadd.f32 %v535, %v542
    %v545 = vadd.f32 %v536, %v542
    %v546 = vld [vmem:[%s0] sm:$0xff]
    %v547 = vld [vmem:[%s0 + $0x8] sm:$0xff]
    %v548 = vadd.f32 %v544, %v546
    %v549 = vadd.f32 %v545, %v547
    %550 = vst.msk [vmem:[%s9] sm:$0xff] %vm165, %v548
    %551 = vst.msk [vmem:[%s9 + $0x8] sm:$0xff] %vm165, %v549
  $region45: #{_lambda_.22} parent=0 // pred_fallthru
    _
  // Predicated region
  $region46: #{_lambda_.22} parent=0 // pred_check
    _
  $region47: #{_lambda_.22} parent=0 // pred_check_branch
    %553 = sbr.rel (0) target = $region49
  $region48: #{_lambda_.22} parent=0 // pred_region
    _
  $region49: #{_lambda_.22} parent=0 // pred_fallthru
    _
  // Predicated region
  $region50: #{_lambda_.22} parent=0 // pred_check
    _
  $region51: #{_lambda_.22} parent=0 // pred_check_branch
    %555 = sbr.rel (0) target = $region53
  $region52: #{_lambda_.22} parent=0 // pred_region
    _
  $region53: #{_lambda_.22} parent=0 // pred_fallthru
    _

</llo_original>
